<compile_context>
chip_gen: v6e
topology: v6e:2x2x1
jax: 0.10.0
libtpu: 0.0.40
codegen_flags: <defaults>
</compile_context>

<pallas_src>
import math
import functools

import jax
import jax.numpy as jnp
from jax.experimental import pallas as pl
from jax.experimental.pallas import tpu as pltpu

# ---------------- config (small shapes consistent with the module) ----------------
N_TOKENS = 50
HIDDEN = 32
MAX_SEQ_LEN = 16
N_TOKEN_TYPES = 2
EMPTY_ID = 1
PADDING_ID = 0
N_HEADS = 4
HEAD_DIM = HIDDEN // N_HEADS
INTERMEDIATE = 64
N_LAYERS = 2
LN_EPS = 1e-12

BATCH = 2
SEQ = 8

LANE = 128  # lane width all slabs are padded to

# ---------------- packed weight-slab layout (rows x 128 lanes, fp32) ----------------
# per layer l, row base = l * LAYER_ROWS:
ROW_WQKV = 0                              # H rows, lanes [0:3H]   fused Q|K|V weight
ROW_WO = HIDDEN                           # H rows, lanes [0:H]    attn output proj
ROW_WI = 2 * HIDDEN                       # H rows, lanes [0:I]    FFN in
ROW_WF = 3 * HIDDEN                       # I rows, lanes [0:H]    FFN out
ROW_VEC = 3 * HIDDEN + INTERMEDIATE       # 8 rows: biases / LN params (see VEC_*)
LAYER_ROWS = ROW_VEC + 8                  # 168 (multiple of 8)
GBASE = N_LAYERS * LAYER_ROWS             # 336
ROW_WP = 0                                # H rows at GBASE, lanes [0:H]  pooler weight
GVEC_OFF = HIDDEN                         # 8 rows at GBASE+H: global vectors
TOTAL_ROWS = GBASE + HIDDEN + 8           # 376 (multiple of 8)

VEC_BQKV, VEC_BO, VEC_LN1G, VEC_LN1B, VEC_BI, VEC_BF, VEC_LN2G, VEC_LN2B = range(8)
GV_EMB_G, GV_EMB_B, GV_BPOOL = range(3)


# ------------------------------- fused Pallas kernel --------------------------------
def _layernorm(x, g, b, eps):
    mu = jnp.mean(x, axis=-1, keepdims=True)
    var = jnp.mean((x - mu) ** 2, axis=-1, keepdims=True)
    return (x - mu) * jax.lax.rsqrt(var + eps) * g + b


def _pad_lanes(x, width):
    r, c = x.shape
    if c == width:
        return x
    return jnp.concatenate([x, jnp.zeros((r, width - c), x.dtype)], axis=1)


def _bert_fused_kernel(x_ref, w_ref, pooled_ref, hid_ref, attn_ref, *,
                       n_layers, n_heads, seq, hidden, inter, eps):
    S, H, I, NH = seq, hidden, inter, n_heads
    D = H // NH
    scale = 1.0 / math.sqrt(D)
    inv_sqrt2 = 1.0 / math.sqrt(2.0)

    # packed per-batch activation slab: emb | keep(broadcast) | mask row | zero pad
    x = x_ref[0]                               # (S, 128)
    emb = x[:, 0:H]
    keep = x[:, H:2 * H]                       # [EMPTY]-token keep mask (broadcast to H)
    mask = x[:, 2 * H:2 * H + S]               # (S, S) additive attention mask

    gvec = w_ref[GBASE + GVEC_OFF:GBASE + GVEC_OFF + 8, :]       # (8, 128)
    emb_g = gvec[GV_EMB_G:GV_EMB_G + 1, 0:H]
    emb_b = gvec[GV_EMB_B:GV_EMB_B + 1, 0:H]
    b_pool = gvec[GV_BPOOL:GV_BPOOL + 1, 0:H]

    # embedding LayerNorm + [EMPTY]-token DO operation (dropout = identity)
    h = _layernorm(emb, emb_g, emb_b, eps) * keep

    for l in range(n_layers):                  # static unroll, n_layers = 2
        base = l * LAYER_ROWS
        wqkv = w_ref[base + ROW_WQKV:base + ROW_WQKV + H, 0:3 * H]   # (H, 3H)
        wo = w_ref[base + ROW_WO:base + ROW_WO + H, 0:H]             # (H, H)
        wi = w_ref[base + ROW_WI:base + ROW_WI + H, 0:I]             # (H, I)
        wf = w_ref[base + ROW_WF:base + ROW_WF + I, 0:H]             # (I, H)
        vec = w_ref[base + ROW_VEC:base + ROW_VEC + 8, :]            # (8, 128)
        b_qkv = vec[VEC_BQKV:VEC_BQKV + 1, 0:3 * H]
        b_o = vec[VEC_BO:VEC_BO + 1, 0:H]
        ln1_g = vec[VEC_LN1G:VEC_LN1G + 1, 0:H]
        ln1_b = vec[VEC_LN1B:VEC_LN1B + 1, 0:H]
        b_i = vec[VEC_BI:VEC_BI + 1, 0:I]
        b_f = vec[VEC_BF:VEC_BF + 1, 0:H]
        ln2_g = vec[VEC_LN2G:VEC_LN2G + 1, 0:H]
        ln2_b = vec[VEC_LN2B:VEC_LN2B + 1, 0:H]

        # fused Q|K|V projection (one matmul), head split via static lane slices
        qkv = jnp.dot(h, wqkv, preferred_element_type=jnp.float32) + b_qkv   # (S, 3H)
        q = jnp.stack([qkv[:, hd * D:(hd + 1) * D] for hd in range(NH)], axis=0)
        k = jnp.stack([qkv[:, H + hd * D:H + (hd + 1) * D] for hd in range(NH)], axis=0)
        v = jnp.stack([qkv[:, 2 * H + hd * D:2 * H + (hd + 1) * D] for hd in range(NH)], axis=0)

        # all heads at once: one scores einsum, one mask add, one softmax, one ctx einsum
        scores = jnp.einsum('hqd,hkd->hqk', q, k,
                            preferred_element_type=jnp.float32) * scale       # (NH,S,S)
        scores = scores + mask[None, :, :]
        m = jnp.max(scores, axis=-1, keepdims=True)
        e = jnp.exp(scores - m)
        p = e * pl.reciprocal(jnp.sum(e, axis=-1, keepdims=True), approx=False)

        # lane-dense, once-per-layer attention-prob store (padded to 128 lanes)
        attn_ref[l, 0] = jnp.concatenate(
            [p, jnp.zeros((NH, S, LANE - S), jnp.float32)], axis=-1)

        ctx = jnp.einsum('hqk,hkd->hqd', p, v,
                         preferred_element_type=jnp.float32)                  # (NH,S,D)
        ctx = jnp.concatenate([ctx[hd] for hd in range(NH)], axis=1)           # (S, H)
        att = jnp.dot(ctx, wo, preferred_element_type=jnp.float32) + b_o       # single Wo
        att_out = _layernorm(att + h, ln1_g, ln1_b, eps)

        itm = jnp.dot(att_out, wi, preferred_element_type=jnp.float32) + b_i
        itm = itm * 0.5 * (1.0 + jax.lax.erf(itm * inv_sqrt2))                 # exact GELU

        ffn = jnp.dot(itm, wf, preferred_element_type=jnp.float32) + b_f
        h = _layernorm(ffn + att_out, ln2_g, ln2_b, eps)

        hid_ref[l, 0] = _pad_lanes(h, LANE)        # lane-dense per-layer hidden store

    # pooler: tanh(first_token @ Wp + b) on the last layer's hidden states
    wp = w_ref[GBASE + ROW_WP:GBASE + ROW_WP + H, 0:H]
    pooled = jnp.tanh(jnp.dot(h[0:1, :], wp, preferred_element_type=jnp.float32) + b_pool)
    pooled = jnp.concatenate([pooled, jnp.zeros((7, H), jnp.float32)], axis=0)  # (8, H)
    pooled_ref[0] = _pad_lanes(pooled, LANE)


def bert_fused_call(xslab, wslab):
    B, S, _ = xslab.shape
    L, NH = N_LAYERS, N_HEADS
    kernel = functools.partial(
        _bert_fused_kernel, n_layers=L, n_heads=NH, seq=S,
        hidden=HIDDEN, inter=INTERMEDIATE, eps=LN_EPS)
    out_shapes = (
        jax.ShapeDtypeStruct((B, 8, LANE), jnp.float32),          # pooled (padded)
        jax.ShapeDtypeStruct((L, B, S, LANE), jnp.float32),       # per-layer hidden (padded)
        jax.ShapeDtypeStruct((L, B, NH, S, LANE), jnp.float32),   # attention probs (padded)
    )
    # TODO(synk): at real BERT shapes (hidden>=768, seq>=512) switch to a
    # (batch/head, q_block, kv_block) grid with the kv reduction axis last marked
    # "arbitrary", bf16 MXU operands on v6e/v7x, and explicit vmem_limit_bytes sized
    # for v7x's 64 MiB VMEM (roughly half the v6e block budget).
    return pl.pallas_call(
        kernel,
        out_shape=out_shapes,
        grid=(B,),
        in_specs=[
            pl.BlockSpec((1, S, LANE), lambda b: (b, 0, 0)),           # activations
            pl.BlockSpec((TOTAL_ROWS, LANE), lambda b: (0, 0)),        # weight slab
        ],
        out_specs=(
            pl.BlockSpec((1, 8, LANE), lambda b: (b, 0, 0)),
            pl.BlockSpec((L, 1, S, LANE), lambda b: (0, b, 0, 0)),
            pl.BlockSpec((L, 1, NH, S, LANE), lambda b: (0, b, 0, 0, 0)),
        ),
        compiler_params=pltpu.CompilerParams(
            dimension_semantics=("parallel",)),                        # 2 TCs on v7x
    )(xslab, wslab)


# ------------------------------ parameter init --------------------------------------
def init_params(seed=0):
    key = jax.random.PRNGKey(seed)
    counter = [0]

    def nk():
        counter[0] += 1
        return jax.random.fold_in(key, counter[0])

    params = {}
    tok = jax.random.normal(nk(), (N_TOKENS, HIDDEN), jnp.float32) * 0.02
    tok = tok.at[PADDING_ID].set(0.0)  # nn.Embedding padding_idx row is zero
    params["tok_emb"] = tok
    params["pos_emb"] = jax.random.normal(nk(), (MAX_SEQ_LEN, HIDDEN), jnp.float32) * 0.02
    params["typ_emb"] = jax.random.normal(nk(), (N_TOKEN_TYPES, HIDDEN), jnp.float32) * 0.02
    params["emb_ln_g"] = jnp.ones((HIDDEN,), jnp.float32)
    params["emb_ln_b"] = jnp.zeros((HIDDEN,), jnp.float32)

    layers = []
    for _ in range(N_LAYERS):
        p = {}
        for name, fi, fo in [("q", HIDDEN, HIDDEN), ("k", HIDDEN, HIDDEN),
                             ("v", HIDDEN, HIDDEN), ("o", HIDDEN, HIDDEN),
                             ("i", HIDDEN, INTERMEDIATE), ("f", INTERMEDIATE, HIDDEN)]:
            p["w" + name] = jax.random.normal(nk(), (fi, fo), jnp.float32) * 0.02
            p["b" + name] = jax.random.normal(nk(), (fo,), jnp.float32) * 0.02
        p["ln1_g"] = jnp.ones((HIDDEN,), jnp.float32)
        p["ln1_b"] = jnp.zeros((HIDDEN,), jnp.float32)
        p["ln2_g"] = jnp.ones((HIDDEN,), jnp.float32)
        p["ln2_b"] = jnp.zeros((HIDDEN,), jnp.float32)
        layers.append(p)
    params["layers"] = layers

    params["wp"] = jax.random.normal(nk(), (HIDDEN, HIDDEN), jnp.float32) * 0.02
    params["bp"] = jax.random.normal(nk(), (HIDDEN,), jnp.float32) * 0.02
    return params


# ------------------------------ parameter packing (once, at init) --------------------
def pack_params(params):
    slab = jnp.zeros((TOTAL_ROWS, LANE), jnp.float32)

    def put(slab, row, mat):
        mat = jnp.asarray(mat, jnp.float32)
        if mat.ndim == 1:
            mat = mat[None, :]
        return slab.at[row:row + mat.shape[0], 0:mat.shape[1]].set(mat)

    for l, p in enumerate(params["layers"]):
        base = l * LAYER_ROWS
        slab = put(slab, base + ROW_WQKV,
                   jnp.concatenate([p["wq"], p["wk"], p["wv"]], axis=1))
        slab = put(slab, base + ROW_WO, p["wo"])
        slab = put(slab, base + ROW_WI, p["wi"])
        slab = put(slab, base + ROW_WF, p["wf"])
        vec_rows = [jnp.concatenate([p["bq"], p["bk"], p["bv"]]),
                    p["bo"], p["ln1_g"], p["ln1_b"],
                    p["bi"], p["bf"], p["ln2_g"], p["ln2_b"]]
        for r, vrow in enumerate(vec_rows):
            slab = put(slab, base + ROW_VEC + r, vrow)

    slab = put(slab, GBASE + ROW_WP, params["wp"])
    slab = put(slab, GBASE + GVEC_OFF + GV_EMB_G, params["emb_ln_g"])
    slab = put(slab, GBASE + GVEC_OFF + GV_EMB_B, params["emb_ln_b"])
    slab = put(slab, GBASE + GVEC_OFF + GV_BPOOL, params["bp"])

    return dict(wslab=slab,
                tok_emb=params["tok_emb"],
                pos_emb=params["pos_emb"],
                typ_emb=params["typ_emb"])


# --------------------------------- forward ------------------------------------------
def bert_forward(packed, input_ids, mask=None, token_type_ids=None, position_ids=None):
    B, S = input_ids.shape
    assert 2 * HIDDEN + S <= LANE, "activation slab packing exceeds one lane tile"

    if mask is None:
        mask = jnp.ones((B, S), jnp.float32)
    mask = mask.astype(jnp.float32)
    if mask.ndim == 3:
        mask_add = (1.0 - mask) * -10000.0                               # (B, S, S)
    elif mask.ndim == 2:
        mask_add = jnp.broadcast_to((1.0 - mask)[:, None, :] * -10000.0, (B, S, S))
    else:
        raise ValueError("Wrong mask shape")

    # NOTE: the reference calls embeddings(input_ids, position_ids, token_type_ids),
    # i.e. positional args are swapped relative to the BERTEmbeddings signature.
    # We reproduce that swap; with both None (default path) it is a no-op.
    tt_ids = position_ids        # what BERTEmbeddings receives as token_type_ids
    pos_ids = token_type_ids     # what BERTEmbeddings receives as position_ids
    if pos_ids is None:
        pos_ids = jnp.broadcast_to(jnp.arange(S, dtype=jnp.int32)[None, :], (B, S))
    if tt_ids is None:
        tt_ids = jnp.zeros((B, S), jnp.int32)

    # embedding gathers are glue (dynamic row gather stays in plain JAX);
    # everything else runs inside the single fused Pallas kernel.
    emb_sum = (packed["tok_emb"][input_ids] + packed["pos_emb"][pos_ids]
               + packed["typ_emb"][tt_ids])                              # (B, S, H)
    keep = (input_ids != EMPTY_ID).astype(jnp.float32)[:, :, None]       # (B, S, 1)
    keep_b = jnp.broadcast_to(keep, (B, S, HIDDEN))
    pad = jnp.zeros((B, S, LANE - 2 * HIDDEN - S), jnp.float32)
    xslab = jnp.concatenate([emb_sum, keep_b, mask_add, pad], axis=-1)   # (B, S, 128)

    pooled_p, hid_p, attn_p = bert_fused_call(xslab, packed["wslab"])

    pooled = pooled_p[:, 0, 0:HIDDEN]                                    # (B, H)
    hid = hid_p[..., 0:HIDDEN]                                           # (L, B, S, H)
    attn = attn_p[..., 0:S]                                              # (L, B, NH, S, S)

    all_hidden = tuple(hid[l] for l in range(N_LAYERS))
    all_attn = tuple(attn[l] for l in range(N_LAYERS))
    last_hidden = all_hidden[-1]
    # matches (pooled_output, hidden_states, all_hidden_states, all_attentions)
    return (pooled, last_hidden, all_hidden, all_attn)


# ----------------------------------- main --------------------------------------------
if __name__ == "__main__":
    params = init_params(0)
    packed = pack_params(params)                 # packed ONCE, outside the forward

    key = jax.random.PRNGKey(0)
    input_ids = jax.random.randint(key, (BATCH, SEQ), 0, N_TOKENS, dtype=jnp.int32)
    # exercise the [EMPTY]-token DO operation path
    input_ids = input_ids.at[0, 3].set(EMPTY_ID)

    fwd = jax.jit(bert_forward)
    outs = fwd(packed, input_ids)
    pooled, last_hidden, all_hidden, all_attn = outs
    jax.block_until_ready(pooled)
    jax.block_until_ready(last_hidden)
    for t in all_hidden + all_attn:
        jax.block_until_ready(t)
    print("KERNEL_OK")
</pallas_src>

<mosaic_0001>
module attributes {stable_mosaic.version = 11 : i64} {
  func.func @_bert_fused_kernel(%arg0: i32, %arg1: memref<1x8x128xf32, #tpu.memory_space<vmem>>, %arg2: memref<376x128xf32, #tpu.memory_space<vmem>>, %arg3: memref<1x8x128xf32, #tpu.memory_space<vmem>>, %arg4: memref<2x1x8x128xf32, #tpu.memory_space<vmem>>, %arg5: memref<2x1x4x8x128xf32, #tpu.memory_space<vmem>>) attributes {dimension_semantics = [#tpu.dimension_semantics<parallel>], iteration_bounds = array<i64: 2>, scalar_prefetch = 0 : i64, scratch_operands = 0 : i64, tpu.core_type = #tpu.core_type<tc>, window_params = [{transform_indices = @transform_0, window_bounds = array<i64: 1, 8, 128>}, {pipeline_mode = #tpu.pipeline_mode<synchronous>, transform_indices = @transform_1, window_bounds = array<i64: 376, 128>}, {transform_indices = @transform_2, window_bounds = array<i64: 1, 8, 128>}, {transform_indices = @transform_3, window_bounds = array<i64: 2, 1, 8, 128>}, {transform_indices = @transform_4, window_bounds = array<i64: 2, 1, 4, 8, 128>}]} {
    %c0 = arith.constant 0 : index
    %c0_0 = arith.constant 0 : index
    %c0_1 = arith.constant 0 : index
    %0 = vector.load %arg1[%c0, %c0_0, %c0_1] : memref<1x8x128xf32, #tpu.memory_space<vmem>>, vector<1x8x128xf32>
    %1 = vector.shape_cast %0 : vector<1x8x128xf32> to vector<8x128xf32>
    %2 = vector.extract_strided_slice %1 {offsets = [0, 0], sizes = [8, 32], strides = [1, 1]} : vector<8x128xf32> to vector<8x32xf32>
    %3 = vector.extract_strided_slice %1 {offsets = [0, 32], sizes = [8, 32], strides = [1, 1]} : vector<8x128xf32> to vector<8x32xf32>
    %4 = vector.extract_strided_slice %1 {offsets = [0, 64], sizes = [8, 8], strides = [1, 1]} : vector<8x128xf32> to vector<8x8xf32>
    %c368 = arith.constant 368 : index
    %c0_2 = arith.constant 0 : index
    %5 = vector.load %arg2[%c368, %c0_2] : memref<376x128xf32, #tpu.memory_space<vmem>>, vector<8x128xf32>
    %6 = vector.extract_strided_slice %5 {offsets = [0, 0], sizes = [1, 32], strides = [1, 1]} : vector<8x128xf32> to vector<1x32xf32>
    %7 = vector.extract_strided_slice %5 {offsets = [1, 0], sizes = [1, 32], strides = [1, 1]} : vector<8x128xf32> to vector<1x32xf32>
    %8 = vector.extract_strided_slice %5 {offsets = [2, 0], sizes = [1, 32], strides = [1, 1]} : vector<8x128xf32> to vector<1x32xf32>
    %cst = arith.constant dense<0.000000e+00> : vector<8xf32>
    %9 = vector.multi_reduction <add>, %2, %cst [1] : vector<8x32xf32> to vector<8xf32>
    %10 = vector.shape_cast %9 : vector<8xf32> to vector<8x1xf32>
    %cst_3 = arith.constant 3.200000e+01 : f32
    %11 = vector.broadcast %cst_3 : f32 to vector<8x1xf32>
    %12 = arith.divf %10, %11 : vector<8x1xf32>
    %13 = vector.broadcast %12 : vector<8x1xf32> to vector<8x32xf32>
    %14 = arith.subf %2, %13 : vector<8x32xf32>
    %15 = arith.mulf %14, %14 : vector<8x32xf32>
    %cst_4 = arith.constant dense<0.000000e+00> : vector<8xf32>
    %16 = vector.multi_reduction <add>, %15, %cst_4 [1] : vector<8x32xf32> to vector<8xf32>
    %17 = vector.shape_cast %16 : vector<8xf32> to vector<8x1xf32>
    %cst_5 = arith.constant 3.200000e+01 : f32
    %18 = vector.broadcast %cst_5 : f32 to vector<8x1xf32>
    %19 = arith.divf %17, %18 : vector<8x1xf32>
    %20 = vector.broadcast %12 : vector<8x1xf32> to vector<8x32xf32>
    %21 = arith.subf %2, %20 : vector<8x32xf32>
    %cst_6 = arith.constant 9.99999996E-13 : f32
    %22 = vector.broadcast %cst_6 : f32 to vector<8x1xf32>
    %23 = arith.addf %19, %22 : vector<8x1xf32>
    %24 = math.rsqrt %23 : vector<8x1xf32>
    %25 = vector.broadcast %24 : vector<8x1xf32> to vector<8x32xf32>
    %26 = arith.mulf %21, %25 : vector<8x32xf32>
    %27 = vector.broadcast %6 : vector<1x32xf32> to vector<8x32xf32>
    %28 = arith.mulf %26, %27 : vector<8x32xf32>
    %29 = vector.broadcast %7 : vector<1x32xf32> to vector<8x32xf32>
    %30 = arith.addf %28, %29 : vector<8x32xf32>
    %31 = arith.mulf %30, %3 : vector<8x32xf32>
    %c0_7 = arith.constant 0 : index
    %c0_8 = arith.constant 0 : index
    %32 = vector.load %arg2[%c0_7, %c0_8] : memref<376x128xf32, #tpu.memory_space<vmem>>, vector<32x96xf32>
    %c32 = arith.constant 32 : index
    %c0_9 = arith.constant 0 : index
    %33 = vector.load %arg2[%c32, %c0_9] : memref<376x128xf32, #tpu.memory_space<vmem>>, vector<32x32xf32>
    %c64 = arith.constant 64 : index
    %c0_10 = arith.constant 0 : index
    %34 = vector.load %arg2[%c64, %c0_10] : memref<376x128xf32, #tpu.memory_space<vmem>>, vector<32x64xf32>
    %c96 = arith.constant 96 : index
    %c0_11 = arith.constant 0 : index
    %35 = vector.load %arg2[%c96, %c0_11] : memref<376x128xf32, #tpu.memory_space<vmem>>, vector<64x32xf32>
    %c160 = arith.constant 160 : index
    %c0_12 = arith.constant 0 : index
    %36 = vector.load %arg2[%c160, %c0_12] : memref<376x128xf32, #tpu.memory_space<vmem>>, vector<8x128xf32>
    %37 = vector.extract_strided_slice %36 {offsets = [0, 0], sizes = [1, 96], strides = [1, 1]} : vector<8x128xf32> to vector<1x96xf32>
    %38 = vector.extract_strided_slice %36 {offsets = [1, 0], sizes = [1, 32], strides = [1, 1]} : vector<8x128xf32> to vector<1x32xf32>
    %39 = vector.extract_strided_slice %36 {offsets = [2, 0], sizes = [1, 32], strides = [1, 1]} : vector<8x128xf32> to vector<1x32xf32>
    %40 = vector.extract_strided_slice %36 {offsets = [3, 0], sizes = [1, 32], strides = [1, 1]} : vector<8x128xf32> to vector<1x32xf32>
    %41 = vector.extract_strided_slice %36 {offsets = [4, 0], sizes = [1, 64], strides = [1, 1]} : vector<8x128xf32> to vector<1x64xf32>
    %42 = vector.extract_strided_slice %36 {offsets = [5, 0], sizes = [1, 32], strides = [1, 1]} : vector<8x128xf32> to vector<1x32xf32>
    %43 = vector.extract_strided_slice %36 {offsets = [6, 0], sizes = [1, 32], strides = [1, 1]} : vector<8x128xf32> to vector<1x32xf32>
    %44 = vector.extract_strided_slice %36 {offsets = [7, 0], sizes = [1, 32], strides = [1, 1]} : vector<8x128xf32> to vector<1x32xf32>
    %cst_13 = arith.constant dense<0.000000e+00> : vector<8x96xf32>
    %45 = tpu.matmul %31, %32, %cst_13 {dimension_numbers = #tpu.dot_dimension_numbers<[1], [0], [0], [1], [0, 0, 1, 1], [], []>} : vector<8x32xf32>, vector<32x96xf32>, vector<8x96xf32> -> vector<8x96xf32>
    %46 = vector.broadcast %37 : vector<1x96xf32> to vector<8x96xf32>
    %47 = arith.addf %45, %46 : vector<8x96xf32>
    %48 = vector.extract_strided_slice %47 {offsets = [0, 0], sizes = [8, 8], strides = [1, 1]} : vector<8x96xf32> to vector<8x8xf32>
    %49 = vector.extract_strided_slice %47 {offsets = [0, 8], sizes = [8, 8], strides = [1, 1]} : vector<8x96xf32> to vector<8x8xf32>
    %50 = vector.extract_strided_slice %47 {offsets = [0, 16], sizes = [8, 8], strides = [1, 1]} : vector<8x96xf32> to vector<8x8xf32>
    %51 = vector.extract_strided_slice %47 {offsets = [0, 24], sizes = [8, 8], strides = [1, 1]} : vector<8x96xf32> to vector<8x8xf32>
    %52 = vector.shape_cast %48 : vector<8x8xf32> to vector<1x8x8xf32>
    %53 = vector.shape_cast %49 : vector<8x8xf32> to vector<1x8x8xf32>
    %54 = vector.shape_cast %50 : vector<8x8xf32> to vector<1x8x8xf32>
    %55 = vector.shape_cast %51 : vector<8x8xf32> to vector<1x8x8xf32>
    %56 = tpu.concatenate %52, %53, %54, %55 in 0 : vector<1x8x8xf32>, vector<1x8x8xf32>, vector<1x8x8xf32>, vector<1x8x8xf32> -> vector<4x8x8xf32>
    %57 = vector.extract_strided_slice %47 {offsets = [0, 32], sizes = [8, 8], strides = [1, 1]} : vector<8x96xf32> to vector<8x8xf32>
    %58 = vector.extract_strided_slice %47 {offsets = [0, 40], sizes = [8, 8], strides = [1, 1]} : vector<8x96xf32> to vector<8x8xf32>
    %59 = vector.extract_strided_slice %47 {offsets = [0, 48], sizes = [8, 8], strides = [1, 1]} : vector<8x96xf32> to vector<8x8xf32>
    %60 = vector.extract_strided_slice %47 {offsets = [0, 56], sizes = [8, 8], strides = [1, 1]} : vector<8x96xf32> to vector<8x8xf32>
    %61 = vector.shape_cast %57 : vector<8x8xf32> to vector<1x8x8xf32>
    %62 = vector.shape_cast %58 : vector<8x8xf32> to vector<1x8x8xf32>
    %63 = vector.shape_cast %59 : vector<8x8xf32> to vector<1x8x8xf32>
    %64 = vector.shape_cast %60 : vector<8x8xf32> to vector<1x8x8xf32>
    %65 = tpu.concatenate %61, %62, %63, %64 in 0 : vector<1x8x8xf32>, vector<1x8x8xf32>, vector<1x8x8xf32>, vector<1x8x8xf32> -> vector<4x8x8xf32>
    %66 = vector.extract_strided_slice %47 {offsets = [0, 64], sizes = [8, 8], strides = [1, 1]} : vector<8x96xf32> to vector<8x8xf32>
    %67 = vector.extract_strided_slice %47 {offsets = [0, 72], sizes = [8, 8], strides = [1, 1]} : vector<8x96xf32> to vector<8x8xf32>
    %68 = vector.extract_strided_slice %47 {offsets = [0, 80], sizes = [8, 8], strides = [1, 1]} : vector<8x96xf32> to vector<8x8xf32>
    %69 = vector.extract_strided_slice %47 {offsets = [0, 88], sizes = [8, 8], strides = [1, 1]} : vector<8x96xf32> to vector<8x8xf32>
    %70 = vector.shape_cast %66 : vector<8x8xf32> to vector<1x8x8xf32>
    %71 = vector.shape_cast %67 : vector<8x8xf32> to vector<1x8x8xf32>
    %72 = vector.shape_cast %68 : vector<8x8xf32> to vector<1x8x8xf32>
    %73 = vector.shape_cast %69 : vector<8x8xf32> to vector<1x8x8xf32>
    %74 = tpu.concatenate %70, %71, %72, %73 in 0 : vector<1x8x8xf32>, vector<1x8x8xf32>, vector<1x8x8xf32>, vector<1x8x8xf32> -> vector<4x8x8xf32>
    "tpu.trace_start"() <{level = 10 : i32, message = "hqd,hkd->hqk"}> : () -> ()
    %cst_14 = arith.constant dense<0.000000e+00> : vector<4x8x8xf32>
    %75 = tpu.matmul %56, %65, %cst_14 {dimension_numbers = #tpu.dot_dimension_numbers<[2], [2], [1], [1], [0, 0, 0, 1, 1, 1], [0], [0]>} : vector<4x8x8xf32>, vector<4x8x8xf32>, vector<4x8x8xf32> -> vector<4x8x8xf32>
    "tpu.trace_stop"() : () -> ()
    %cst_15 = arith.constant 0.353553385 : f32
    %76 = vector.broadcast %cst_15 : f32 to vector<4x8x8xf32>
    %77 = arith.mulf %75, %76 : vector<4x8x8xf32>
    %78 = vector.shape_cast %4 : vector<8x8xf32> to vector<1x8x8xf32>
    %79 = vector.broadcast %78 : vector<1x8x8xf32> to vector<4x8x8xf32>
    %80 = arith.addf %77, %79 : vector<4x8x8xf32>
    %cst_16 = arith.constant dense<0xFF800000> : vector<4x8xf32>
    %81 = vector.multi_reduction <maximumf>, %80, %cst_16 [2] : vector<4x8x8xf32> to vector<4x8xf32>
    %82 = vector.shape_cast %81 : vector<4x8xf32> to vector<4x8x1xf32>
    %83 = vector.broadcast %82 : vector<4x8x1xf32> to vector<4x8x8xf32>
    %84 = arith.subf %80, %83 : vector<4x8x8xf32>
    %85 = math.exp %84 : vector<4x8x8xf32>
    %cst_17 = arith.constant dense<0.000000e+00> : vector<4x8xf32>
    %86 = vector.multi_reduction <add>, %85, %cst_17 [2] : vector<4x8x8xf32> to vector<4x8xf32>
    %87 = vector.shape_cast %86 : vector<4x8xf32> to vector<4x8x1xf32>
    %88 = tpu.reciprocal %87 : vector<4x8x1xf32> -> vector<4x8x1xf32>
    %89 = vector.broadcast %88 : vector<4x8x1xf32> to vector<4x8x8xf32>
    %90 = arith.mulf %85, %89 : vector<4x8x8xf32>
    %cst_18 = arith.constant 0.000000e+00 : f32
    %91 = vector.broadcast %cst_18 : f32 to vector<4x8x120xf32>
    %92 = tpu.concatenate %90, %91 in 2 : vector<4x8x8xf32>, vector<4x8x120xf32> -> vector<4x8x128xf32>
    %c0_19 = arith.constant 0 : index
    %c0_20 = arith.constant 0 : index
    %c0_21 = arith.constant 0 : index
    %c0_22 = arith.constant 0 : index
    %c0_23 = arith.constant 0 : index
    %93 = vector.load %arg5[%c0_19, %c0_20, %c0_21, %c0_22, %c0_23] : memref<2x1x4x8x128xf32, #tpu.memory_space<vmem>>, vector<1x1x4x8x128xf32>
    %94 = vector.shape_cast %93 : vector<1x1x4x8x128xf32> to vector<4x8x128xf32>
    %95 = vector.shape_cast %92 : vector<4x8x128xf32> to vector<1x1x4x8x128xf32>
    tpu.vector_store %arg5[%c0_19, %c0_20, %c0_21, %c0_22, %c0_23], %95 {strides = array<i32>} : memref<2x1x4x8x128xf32, #tpu.memory_space<vmem>>, vector<1x1x4x8x128xf32>,
    "tpu.trace_start"() <{level = 10 : i32, message = "hqk,hkd->hqd"}> : () -> ()
    %cst_24 = arith.constant dense<0.000000e+00> : vector<4x8x8xf32>
    %96 = tpu.matmul %90, %74, %cst_24 {dimension_numbers = #tpu.dot_dimension_numbers<[2], [1], [1], [2], [0, 0, 0, 1, 1, 2], [0], [0]>} : vector<4x8x8xf32>, vector<4x8x8xf32>, vector<4x8x8xf32> -> vector<4x8x8xf32>
    "tpu.trace_stop"() : () -> ()
    %97 = vector.extract_strided_slice %96 {offsets = [0, 0, 0], sizes = [1, 8, 8], strides = [1, 1, 1]} : vector<4x8x8xf32> to vector<1x8x8xf32>
    %98 = vector.shape_cast %97 : vector<1x8x8xf32> to vector<8x8xf32>
    %99 = vector.extract_strided_slice %96 {offsets = [1, 0, 0], sizes = [1, 8, 8], strides = [1, 1, 1]} : vector<4x8x8xf32> to vector<1x8x8xf32>
    %100 = vector.shape_cast %99 : vector<1x8x8xf32> to vector<8x8xf32>
    %101 = vector.extract_strided_slice %96 {offsets = [2, 0, 0], sizes = [1, 8, 8], strides = [1, 1, 1]} : vector<4x8x8xf32> to vector<1x8x8xf32>
    %102 = vector.shape_cast %101 : vector<1x8x8xf32> to vector<8x8xf32>
    %103 = vector.extract_strided_slice %96 {offsets = [3, 0, 0], sizes = [1, 8, 8], strides = [1, 1, 1]} : vector<4x8x8xf32> to vector<1x8x8xf32>
    %104 = vector.shape_cast %103 : vector<1x8x8xf32> to vector<8x8xf32>
    %105 = tpu.concatenate %98, %100, %102, %104 in 1 : vector<8x8xf32>, vector<8x8xf32>, vector<8x8xf32>, vector<8x8xf32> -> vector<8x32xf32>
    %cst_25 = arith.constant dense<0.000000e+00> : vector<8x32xf32>
    %106 = tpu.matmul %105, %33, %cst_25 {dimension_numbers = #tpu.dot_dimension_numbers<[1], [0], [0], [1], [0, 0, 1, 1], [], []>} : vector<8x32xf32>, vector<32x32xf32>, vector<8x32xf32> -> vector<8x32xf32>
    %107 = vector.broadcast %38 : vector<1x32xf32> to vector<8x32xf32>
    %108 = arith.addf %106, %107 : vector<8x32xf32>
    %109 = arith.addf %108, %31 : vector<8x32xf32>
    %cst_26 = arith.constant dense<0.000000e+00> : vector<8xf32>
    %110 = vector.multi_reduction <add>, %109, %cst_26 [1] : vector<8x32xf32> to vector<8xf32>
    %111 = vector.shape_cast %110 : vector<8xf32> to vector<8x1xf32>
    %cst_27 = arith.constant 3.200000e+01 : f32
    %112 = vector.broadcast %cst_27 : f32 to vector<8x1xf32>
    %113 = arith.divf %111, %112 : vector<8x1xf32>
    %114 = vector.broadcast %113 : vector<8x1xf32> to vector<8x32xf32>
    %115 = arith.subf %109, %114 : vector<8x32xf32>
    %116 = arith.mulf %115, %115 : vector<8x32xf32>
    %cst_28 = arith.constant dense<0.000000e+00> : vector<8xf32>
    %117 = vector.multi_reduction <add>, %116, %cst_28 [1] : vector<8x32xf32> to vector<8xf32>
    %118 = vector.shape_cast %117 : vector<8xf32> to vector<8x1xf32>
    %cst_29 = arith.constant 3.200000e+01 : f32
    %119 = vector.broadcast %cst_29 : f32 to vector<8x1xf32>
    %120 = arith.divf %118, %119 : vector<8x1xf32>
    %121 = vector.broadcast %113 : vector<8x1xf32> to vector<8x32xf32>
    %122 = arith.subf %109, %121 : vector<8x32xf32>
    %cst_30 = arith.constant 9.99999996E-13 : f32
    %123 = vector.broadcast %cst_30 : f32 to vector<8x1xf32>
    %124 = arith.addf %120, %123 : vector<8x1xf32>
    %125 = math.rsqrt %124 : vector<8x1xf32>
    %126 = vector.broadcast %125 : vector<8x1xf32> to vector<8x32xf32>
    %127 = arith.mulf %122, %126 : vector<8x32xf32>
    %128 = vector.broadcast %39 : vector<1x32xf32> to vector<8x32xf32>
    %129 = arith.mulf %127, %128 : vector<8x32xf32>
    %130 = vector.broadcast %40 : vector<1x32xf32> to vector<8x32xf32>
    %131 = arith.addf %129, %130 : vector<8x32xf32>
    %cst_31 = arith.constant dense<0.000000e+00> : vector<8x64xf32>
    %132 = tpu.matmul %131, %34, %cst_31 {dimension_numbers = #tpu.dot_dimension_numbers<[1], [0], [0], [1], [0, 0, 1, 1], [], []>} : vector<8x32xf32>, vector<32x64xf32>, vector<8x64xf32> -> vector<8x64xf32>
    %133 = vector.broadcast %41 : vector<1x64xf32> to vector<8x64xf32>
    %134 = arith.addf %132, %133 : vector<8x64xf32>
    %cst_32 = arith.constant 5.000000e-01 : f32
    %135 = vector.broadcast %cst_32 : f32 to vector<8x64xf32>
    %136 = arith.mulf %134, %135 : vector<8x64xf32>
    %cst_33 = arith.constant 0.707106769 : f32
    %137 = vector.broadcast %cst_33 : f32 to vector<8x64xf32>
    %138 = arith.mulf %134, %137 : vector<8x64xf32>
    %139 = math.erf %138 : vector<8x64xf32>
    %cst_34 = arith.constant 1.000000e+00 : f32
    %140 = vector.broadcast %cst_34 : f32 to vector<8x64xf32>
    %141 = arith.addf %140, %139 : vector<8x64xf32>
    %142 = arith.mulf %136, %141 : vector<8x64xf32>
    %cst_35 = arith.constant dense<0.000000e+00> : vector<8x32xf32>
    %143 = tpu.matmul %142, %35, %cst_35 {dimension_numbers = #tpu.dot_dimension_numbers<[1], [0], [0], [1], [0, 0, 1, 1], [], []>} : vector<8x64xf32>, vector<64x32xf32>, vector<8x32xf32> -> vector<8x32xf32>
    %144 = vector.broadcast %42 : vector<1x32xf32> to vector<8x32xf32>
    %145 = arith.addf %143, %144 : vector<8x32xf32>
    %146 = arith.addf %145, %131 : vector<8x32xf32>
    %cst_36 = arith.constant dense<0.000000e+00> : vector<8xf32>
    %147 = vector.multi_reduction <add>, %146, %cst_36 [1] : vector<8x32xf32> to vector<8xf32>
    %148 = vector.shape_cast %147 : vector<8xf32> to vector<8x1xf32>
    %cst_37 = arith.constant 3.200000e+01 : f32
    %149 = vector.broadcast %cst_37 : f32 to vector<8x1xf32>
    %150 = arith.divf %148, %149 : vector<8x1xf32>
    %151 = vector.broadcast %150 : vector<8x1xf32> to vector<8x32xf32>
    %152 = arith.subf %146, %151 : vector<8x32xf32>
    %153 = arith.mulf %152, %152 : vector<8x32xf32>
    %cst_38 = arith.constant dense<0.000000e+00> : vector<8xf32>
    %154 = vector.multi_reduction <add>, %153, %cst_38 [1] : vector<8x32xf32> to vector<8xf32>
    %155 = vector.shape_cast %154 : vector<8xf32> to vector<8x1xf32>
    %cst_39 = arith.constant 3.200000e+01 : f32
    %156 = vector.broadcast %cst_39 : f32 to vector<8x1xf32>
    %157 = arith.divf %155, %156 : vector<8x1xf32>
    %158 = vector.broadcast %150 : vector<8x1xf32> to vector<8x32xf32>
    %159 = arith.subf %146, %158 : vector<8x32xf32>
    %cst_40 = arith.constant 9.99999996E-13 : f32
    %160 = vector.broadcast %cst_40 : f32 to vector<8x1xf32>
    %161 = arith.addf %157, %160 : vector<8x1xf32>
    %162 = math.rsqrt %161 : vector<8x1xf32>
    %163 = vector.broadcast %162 : vector<8x1xf32> to vector<8x32xf32>
    %164 = arith.mulf %159, %163 : vector<8x32xf32>
    %165 = vector.broadcast %43 : vector<1x32xf32> to vector<8x32xf32>
    %166 = arith.mulf %164, %165 : vector<8x32xf32>
    %167 = vector.broadcast %44 : vector<1x32xf32> to vector<8x32xf32>
    %168 = arith.addf %166, %167 : vector<8x32xf32>
    %cst_41 = arith.constant 0.000000e+00 : f32
    %169 = vector.broadcast %cst_41 : f32 to vector<8x96xf32>
    %170 = tpu.concatenate %168, %169 in 1 : vector<8x32xf32>, vector<8x96xf32> -> vector<8x128xf32>
    %c0_42 = arith.constant 0 : index
    %c0_43 = arith.constant 0 : index
    %c0_44 = arith.constant 0 : index
    %c0_45 = arith.constant 0 : index
    %171 = vector.load %arg4[%c0_42, %c0_43, %c0_44, %c0_45] : memref<2x1x8x128xf32, #tpu.memory_space<vmem>>, vector<1x1x8x128xf32>
    %172 = vector.shape_cast %171 : vector<1x1x8x128xf32> to vector<8x128xf32>
    %173 = vector.shape_cast %170 : vector<8x128xf32> to vector<1x1x8x128xf32>
    tpu.vector_store %arg4[%c0_42, %c0_43, %c0_44, %c0_45], %173 {strides = array<i32>} : memref<2x1x8x128xf32, #tpu.memory_space<vmem>>, vector<1x1x8x128xf32>,
    %c168 = arith.constant 168 : index
    %c0_46 = arith.constant 0 : index
    %174 = vector.load %arg2[%c168, %c0_46] : memref<376x128xf32, #tpu.memory_space<vmem>>, vector<32x96xf32>
    %c200 = arith.constant 200 : index
    %c0_47 = arith.constant 0 : index
    %175 = vector.load %arg2[%c200, %c0_47] : memref<376x128xf32, #tpu.memory_space<vmem>>, vector<32x32xf32>
    %c232 = arith.constant 232 : index
    %c0_48 = arith.constant 0 : index
    %176 = vector.load %arg2[%c232, %c0_48] : memref<376x128xf32, #tpu.memory_space<vmem>>, vector<32x64xf32>
    %c264 = arith.constant 264 : index
    %c0_49 = arith.constant 0 : index
    %177 = vector.load %arg2[%c264, %c0_49] : memref<376x128xf32, #tpu.memory_space<vmem>>, vector<64x32xf32>
    %c328 = arith.constant 328 : index
    %c0_50 = arith.constant 0 : index
    %178 = vector.load %arg2[%c328, %c0_50] : memref<376x128xf32, #tpu.memory_space<vmem>>, vector<8x128xf32>
    %179 = vector.extract_strided_slice %178 {offsets = [0, 0], sizes = [1, 96], strides = [1, 1]} : vector<8x128xf32> to vector<1x96xf32>
    %180 = vector.extract_strided_slice %178 {offsets = [1, 0], sizes = [1, 32], strides = [1, 1]} : vector<8x128xf32> to vector<1x32xf32>
    %181 = vector.extract_strided_slice %178 {offsets = [2, 0], sizes = [1, 32], strides = [1, 1]} : vector<8x128xf32> to vector<1x32xf32>
    %182 = vector.extract_strided_slice %178 {offsets = [3, 0], sizes = [1, 32], strides = [1, 1]} : vector<8x128xf32> to vector<1x32xf32>
    %183 = vector.extract_strided_slice %178 {offsets = [4, 0], sizes = [1, 64], strides = [1, 1]} : vector<8x128xf32> to vector<1x64xf32>
    %184 = vector.extract_strided_slice %178 {offsets = [5, 0], sizes = [1, 32], strides = [1, 1]} : vector<8x128xf32> to vector<1x32xf32>
    %185 = vector.extract_strided_slice %178 {offsets = [6, 0], sizes = [1, 32], strides = [1, 1]} : vector<8x128xf32> to vector<1x32xf32>
    %186 = vector.extract_strided_slice %178 {offsets = [7, 0], sizes = [1, 32], strides = [1, 1]} : vector<8x128xf32> to vector<1x32xf32>
    %cst_51 = arith.constant dense<0.000000e+00> : vector<8x96xf32>
    %187 = tpu.matmul %168, %174, %cst_51 {dimension_numbers = #tpu.dot_dimension_numbers<[1], [0], [0], [1], [0, 0, 1, 1], [], []>} : vector<8x32xf32>, vector<32x96xf32>, vector<8x96xf32> -> vector<8x96xf32>
    %188 = vector.broadcast %179 : vector<1x96xf32> to vector<8x96xf32>
    %189 = arith.addf %187, %188 : vector<8x96xf32>
    %190 = vector.extract_strided_slice %189 {offsets = [0, 0], sizes = [8, 8], strides = [1, 1]} : vector<8x96xf32> to vector<8x8xf32>
    %191 = vector.extract_strided_slice %189 {offsets = [0, 8], sizes = [8, 8], strides = [1, 1]} : vector<8x96xf32> to vector<8x8xf32>
    %192 = vector.extract_strided_slice %189 {offsets = [0, 16], sizes = [8, 8], strides = [1, 1]} : vector<8x96xf32> to vector<8x8xf32>
    %193 = vector.extract_strided_slice %189 {offsets = [0, 24], sizes = [8, 8], strides = [1, 1]} : vector<8x96xf32> to vector<8x8xf32>
    %194 = vector.shape_cast %190 : vector<8x8xf32> to vector<1x8x8xf32>
    %195 = vector.shape_cast %191 : vector<8x8xf32> to vector<1x8x8xf32>
    %196 = vector.shape_cast %192 : vector<8x8xf32> to vector<1x8x8xf32>
    %197 = vector.shape_cast %193 : vector<8x8xf32> to vector<1x8x8xf32>
    %198 = tpu.concatenate %194, %195, %196, %197 in 0 : vector<1x8x8xf32>, vector<1x8x8xf32>, vector<1x8x8xf32>, vector<1x8x8xf32> -> vector<4x8x8xf32>
    %199 = vector.extract_strided_slice %189 {offsets = [0, 32], sizes = [8, 8], strides = [1, 1]} : vector<8x96xf32> to vector<8x8xf32>
    %200 = vector.extract_strided_slice %189 {offsets = [0, 40], sizes = [8, 8], strides = [1, 1]} : vector<8x96xf32> to vector<8x8xf32>
    %201 = vector.extract_strided_slice %189 {offsets = [0, 48], sizes = [8, 8], strides = [1, 1]} : vector<8x96xf32> to vector<8x8xf32>
    %202 = vector.extract_strided_slice %189 {offsets = [0, 56], sizes = [8, 8], strides = [1, 1]} : vector<8x96xf32> to vector<8x8xf32>
    %203 = vector.shape_cast %199 : vector<8x8xf32> to vector<1x8x8xf32>
    %204 = vector.shape_cast %200 : vector<8x8xf32> to vector<1x8x8xf32>
    %205 = vector.shape_cast %201 : vector<8x8xf32> to vector<1x8x8xf32>
    %206 = vector.shape_cast %202 : vector<8x8xf32> to vector<1x8x8xf32>
    %207 = tpu.concatenate %203, %204, %205, %206 in 0 : vector<1x8x8xf32>, vector<1x8x8xf32>, vector<1x8x8xf32>, vector<1x8x8xf32> -> vector<4x8x8xf32>
    %208 = vector.extract_strided_slice %189 {offsets = [0, 64], sizes = [8, 8], strides = [1, 1]} : vector<8x96xf32> to vector<8x8xf32>
    %209 = vector.extract_strided_slice %189 {offsets = [0, 72], sizes = [8, 8], strides = [1, 1]} : vector<8x96xf32> to vector<8x8xf32>
    %210 = vector.extract_strided_slice %189 {offsets = [0, 80], sizes = [8, 8], strides = [1, 1]} : vector<8x96xf32> to vector<8x8xf32>
    %211 = vector.extract_strided_slice %189 {offsets = [0, 88], sizes = [8, 8], strides = [1, 1]} : vector<8x96xf32> to vector<8x8xf32>
    %212 = vector.shape_cast %208 : vector<8x8xf32> to vector<1x8x8xf32>
    %213 = vector.shape_cast %209 : vector<8x8xf32> to vector<1x8x8xf32>
    %214 = vector.shape_cast %210 : vector<8x8xf32> to vector<1x8x8xf32>
    %215 = vector.shape_cast %211 : vector<8x8xf32> to vector<1x8x8xf32>
    %216 = tpu.concatenate %212, %213, %214, %215 in 0 : vector<1x8x8xf32>, vector<1x8x8xf32>, vector<1x8x8xf32>, vector<1x8x8xf32> -> vector<4x8x8xf32>
    "tpu.trace_start"() <{level = 10 : i32, message = "hqd,hkd->hqk"}> : () -> ()
    %cst_52 = arith.constant dense<0.000000e+00> : vector<4x8x8xf32>
    %217 = tpu.matmul %198, %207, %cst_52 {dimension_numbers = #tpu.dot_dimension_numbers<[2], [2], [1], [1], [0, 0, 0, 1, 1, 1], [0], [0]>} : vector<4x8x8xf32>, vector<4x8x8xf32>, vector<4x8x8xf32> -> vector<4x8x8xf32>
    "tpu.trace_stop"() : () -> ()
    %cst_53 = arith.constant 0.353553385 : f32
    %218 = vector.broadcast %cst_53 : f32 to vector<4x8x8xf32>
    %219 = arith.mulf %217, %218 : vector<4x8x8xf32>
    %220 = vector.shape_cast %4 : vector<8x8xf32> to vector<1x8x8xf32>
    %221 = vector.broadcast %220 : vector<1x8x8xf32> to vector<4x8x8xf32>
    %222 = arith.addf %219, %221 : vector<4x8x8xf32>
    %cst_54 = arith.constant dense<0xFF800000> : vector<4x8xf32>
    %223 = vector.multi_reduction <maximumf>, %222, %cst_54 [2] : vector<4x8x8xf32> to vector<4x8xf32>
    %224 = vector.shape_cast %223 : vector<4x8xf32> to vector<4x8x1xf32>
    %225 = vector.broadcast %224 : vector<4x8x1xf32> to vector<4x8x8xf32>
    %226 = arith.subf %222, %225 : vector<4x8x8xf32>
    %227 = math.exp %226 : vector<4x8x8xf32>
    %cst_55 = arith.constant dense<0.000000e+00> : vector<4x8xf32>
    %228 = vector.multi_reduction <add>, %227, %cst_55 [2] : vector<4x8x8xf32> to vector<4x8xf32>
    %229 = vector.shape_cast %228 : vector<4x8xf32> to vector<4x8x1xf32>
    %230 = tpu.reciprocal %229 : vector<4x8x1xf32> -> vector<4x8x1xf32>
    %231 = vector.broadcast %230 : vector<4x8x1xf32> to vector<4x8x8xf32>
    %232 = arith.mulf %227, %231 : vector<4x8x8xf32>
    %cst_56 = arith.constant 0.000000e+00 : f32
    %233 = vector.broadcast %cst_56 : f32 to vector<4x8x120xf32>
    %234 = tpu.concatenate %232, %233 in 2 : vector<4x8x8xf32>, vector<4x8x120xf32> -> vector<4x8x128xf32>
    %c1 = arith.constant 1 : index
    %c0_57 = arith.constant 0 : index
    %c0_58 = arith.constant 0 : index
    %c0_59 = arith.constant 0 : index
    %c0_60 = arith.constant 0 : index
    %235 = vector.load %arg5[%c1, %c0_57, %c0_58, %c0_59, %c0_60] : memref<2x1x4x8x128xf32, #tpu.memory_space<vmem>>, vector<1x1x4x8x128xf32>
    %236 = vector.shape_cast %235 : vector<1x1x4x8x128xf32> to vector<4x8x128xf32>
    %237 = vector.shape_cast %234 : vector<4x8x128xf32> to vector<1x1x4x8x128xf32>
    tpu.vector_store %arg5[%c1, %c0_57, %c0_58, %c0_59, %c0_60], %237 {strides = array<i32>} : memref<2x1x4x8x128xf32, #tpu.memory_space<vmem>>, vector<1x1x4x8x128xf32>,
    "tpu.trace_start"() <{level = 10 : i32, message = "hqk,hkd->hqd"}> : () -> ()
    %cst_61 = arith.constant dense<0.000000e+00> : vector<4x8x8xf32>
    %238 = tpu.matmul %232, %216, %cst_61 {dimension_numbers = #tpu.dot_dimension_numbers<[2], [1], [1], [2], [0, 0, 0, 1, 1, 2], [0], [0]>} : vector<4x8x8xf32>, vector<4x8x8xf32>, vector<4x8x8xf32> -> vector<4x8x8xf32>
    "tpu.trace_stop"() : () -> ()
    %239 = vector.extract_strided_slice %238 {offsets = [0, 0, 0], sizes = [1, 8, 8], strides = [1, 1, 1]} : vector<4x8x8xf32> to vector<1x8x8xf32>
    %240 = vector.shape_cast %239 : vector<1x8x8xf32> to vector<8x8xf32>
    %241 = vector.extract_strided_slice %238 {offsets = [1, 0, 0], sizes = [1, 8, 8], strides = [1, 1, 1]} : vector<4x8x8xf32> to vector<1x8x8xf32>
    %242 = vector.shape_cast %241 : vector<1x8x8xf32> to vector<8x8xf32>
    %243 = vector.extract_strided_slice %238 {offsets = [2, 0, 0], sizes = [1, 8, 8], strides = [1, 1, 1]} : vector<4x8x8xf32> to vector<1x8x8xf32>
    %244 = vector.shape_cast %243 : vector<1x8x8xf32> to vector<8x8xf32>
    %245 = vector.extract_strided_slice %238 {offsets = [3, 0, 0], sizes = [1, 8, 8], strides = [1, 1, 1]} : vector<4x8x8xf32> to vector<1x8x8xf32>
    %246 = vector.shape_cast %245 : vector<1x8x8xf32> to vector<8x8xf32>
    %247 = tpu.concatenate %240, %242, %244, %246 in 1 : vector<8x8xf32>, vector<8x8xf32>, vector<8x8xf32>, vector<8x8xf32> -> vector<8x32xf32>
    %cst_62 = arith.constant dense<0.000000e+00> : vector<8x32xf32>
    %248 = tpu.matmul %247, %175, %cst_62 {dimension_numbers = #tpu.dot_dimension_numbers<[1], [0], [0], [1], [0, 0, 1, 1], [], []>} : vector<8x32xf32>, vector<32x32xf32>, vector<8x32xf32> -> vector<8x32xf32>
    %249 = vector.broadcast %180 : vector<1x32xf32> to vector<8x32xf32>
    %250 = arith.addf %248, %249 : vector<8x32xf32>
    %251 = arith.addf %250, %168 : vector<8x32xf32>
    %cst_63 = arith.constant dense<0.000000e+00> : vector<8xf32>
    %252 = vector.multi_reduction <add>, %251, %cst_63 [1] : vector<8x32xf32> to vector<8xf32>
    %253 = vector.shape_cast %252 : vector<8xf32> to vector<8x1xf32>
    %cst_64 = arith.constant 3.200000e+01 : f32
    %254 = vector.broadcast %cst_64 : f32 to vector<8x1xf32>
    %255 = arith.divf %253, %254 : vector<8x1xf32>
    %256 = vector.broadcast %255 : vector<8x1xf32> to vector<8x32xf32>
    %257 = arith.subf %251, %256 : vector<8x32xf32>
    %258 = arith.mulf %257, %257 : vector<8x32xf32>
    %cst_65 = arith.constant dense<0.000000e+00> : vector<8xf32>
    %259 = vector.multi_reduction <add>, %258, %cst_65 [1] : vector<8x32xf32> to vector<8xf32>
    %260 = vector.shape_cast %259 : vector<8xf32> to vector<8x1xf32>
    %cst_66 = arith.constant 3.200000e+01 : f32
    %261 = vector.broadcast %cst_66 : f32 to vector<8x1xf32>
    %262 = arith.divf %260, %261 : vector<8x1xf32>
    %263 = vector.broadcast %255 : vector<8x1xf32> to vector<8x32xf32>
    %264 = arith.subf %251, %263 : vector<8x32xf32>
    %cst_67 = arith.constant 9.99999996E-13 : f32
    %265 = vector.broadcast %cst_67 : f32 to vector<8x1xf32>
    %266 = arith.addf %262, %265 : vector<8x1xf32>
    %267 = math.rsqrt %266 : vector<8x1xf32>
    %268 = vector.broadcast %267 : vector<8x1xf32> to vector<8x32xf32>
    %269 = arith.mulf %264, %268 : vector<8x32xf32>
    %270 = vector.broadcast %181 : vector<1x32xf32> to vector<8x32xf32>
    %271 = arith.mulf %269, %270 : vector<8x32xf32>
    %272 = vector.broadcast %182 : vector<1x32xf32> to vector<8x32xf32>
    %273 = arith.addf %271, %272 : vector<8x32xf32>
    %cst_68 = arith.constant dense<0.000000e+00> : vector<8x64xf32>
    %274 = tpu.matmul %273, %176, %cst_68 {dimension_numbers = #tpu.dot_dimension_numbers<[1], [0], [0], [1], [0, 0, 1, 1], [], []>} : vector<8x32xf32>, vector<32x64xf32>, vector<8x64xf32> -> vector<8x64xf32>
    %275 = vector.broadcast %183 : vector<1x64xf32> to vector<8x64xf32>
    %276 = arith.addf %274, %275 : vector<8x64xf32>
    %cst_69 = arith.constant 5.000000e-01 : f32
    %277 = vector.broadcast %cst_69 : f32 to vector<8x64xf32>
    %278 = arith.mulf %276, %277 : vector<8x64xf32>
    %cst_70 = arith.constant 0.707106769 : f32
    %279 = vector.broadcast %cst_70 : f32 to vector<8x64xf32>
    %280 = arith.mulf %276, %279 : vector<8x64xf32>
    %281 = math.erf %280 : vector<8x64xf32>
    %cst_71 = arith.constant 1.000000e+00 : f32
    %282 = vector.broadcast %cst_71 : f32 to vector<8x64xf32>
    %283 = arith.addf %282, %281 : vector<8x64xf32>
    %284 = arith.mulf %278, %283 : vector<8x64xf32>
    %cst_72 = arith.constant dense<0.000000e+00> : vector<8x32xf32>
    %285 = tpu.matmul %284, %177, %cst_72 {dimension_numbers = #tpu.dot_dimension_numbers<[1], [0], [0], [1], [0, 0, 1, 1], [], []>} : vector<8x64xf32>, vector<64x32xf32>, vector<8x32xf32> -> vector<8x32xf32>
    %286 = vector.broadcast %184 : vector<1x32xf32> to vector<8x32xf32>
    %287 = arith.addf %285, %286 : vector<8x32xf32>
    %288 = arith.addf %287, %273 : vector<8x32xf32>
    %cst_73 = arith.constant dense<0.000000e+00> : vector<8xf32>
    %289 = vector.multi_reduction <add>, %288, %cst_73 [1] : vector<8x32xf32> to vector<8xf32>
    %290 = vector.shape_cast %289 : vector<8xf32> to vector<8x1xf32>
    %cst_74 = arith.constant 3.200000e+01 : f32
    %291 = vector.broadcast %cst_74 : f32 to vector<8x1xf32>
    %292 = arith.divf %290, %291 : vector<8x1xf32>
    %293 = vector.broadcast %292 : vector<8x1xf32> to vector<8x32xf32>
    %294 = arith.subf %288, %293 : vector<8x32xf32>
    %295 = arith.mulf %294, %294 : vector<8x32xf32>
    %cst_75 = arith.constant dense<0.000000e+00> : vector<8xf32>
    %296 = vector.multi_reduction <add>, %295, %cst_75 [1] : vector<8x32xf32> to vector<8xf32>
    %297 = vector.shape_cast %296 : vector<8xf32> to vector<8x1xf32>
    %cst_76 = arith.constant 3.200000e+01 : f32
    %298 = vector.broadcast %cst_76 : f32 to vector<8x1xf32>
    %299 = arith.divf %297, %298 : vector<8x1xf32>
    %300 = vector.broadcast %292 : vector<8x1xf32> to vector<8x32xf32>
    %301 = arith.subf %288, %300 : vector<8x32xf32>
    %cst_77 = arith.constant 9.99999996E-13 : f32
    %302 = vector.broadcast %cst_77 : f32 to vector<8x1xf32>
    %303 = arith.addf %299, %302 : vector<8x1xf32>
    %304 = math.rsqrt %303 : vector<8x1xf32>
    %305 = vector.broadcast %304 : vector<8x1xf32> to vector<8x32xf32>
    %306 = arith.mulf %301, %305 : vector<8x32xf32>
    %307 = vector.broadcast %185 : vector<1x32xf32> to vector<8x32xf32>
    %308 = arith.mulf %306, %307 : vector<8x32xf32>
    %309 = vector.broadcast %186 : vector<1x32xf32> to vector<8x32xf32>
    %310 = arith.addf %308, %309 : vector<8x32xf32>
    %cst_78 = arith.constant 0.000000e+00 : f32
    %311 = vector.broadcast %cst_78 : f32 to vector<8x96xf32>
    %312 = tpu.concatenate %310, %311 in 1 : vector<8x32xf32>, vector<8x96xf32> -> vector<8x128xf32>
    %c1_79 = arith.constant 1 : index
    %c0_80 = arith.constant 0 : index
    %c0_81 = arith.constant 0 : index
    %c0_82 = arith.constant 0 : index
    %313 = vector.load %arg4[%c1_79, %c0_80, %c0_81, %c0_82] : memref<2x1x8x128xf32, #tpu.memory_space<vmem>>, vector<1x1x8x128xf32>
    %314 = vector.shape_cast %313 : vector<1x1x8x128xf32> to vector<8x128xf32>
    %315 = vector.shape_cast %312 : vector<8x128xf32> to vector<1x1x8x128xf32>
    tpu.vector_store %arg4[%c1_79, %c0_80, %c0_81, %c0_82], %315 {strides = array<i32>} : memref<2x1x8x128xf32, #tpu.memory_space<vmem>>, vector<1x1x8x128xf32>,
    %c336 = arith.constant 336 : index
    %c0_83 = arith.constant 0 : index
    %316 = vector.load %arg2[%c336, %c0_83] : memref<376x128xf32, #tpu.memory_space<vmem>>, vector<32x32xf32>
    %317 = vector.extract_strided_slice %310 {offsets = [0, 0], sizes = [1, 32], strides = [1, 1]} : vector<8x32xf32> to vector<1x32xf32>
    %cst_84 = arith.constant dense<0.000000e+00> : vector<1x32xf32>
    %318 = tpu.matmul %317, %316, %cst_84 {dimension_numbers = #tpu.dot_dimension_numbers<[1], [0], [0], [1], [0, 0, 1, 1], [], []>} : vector<1x32xf32>, vector<32x32xf32>, vector<1x32xf32> -> vector<1x32xf32>
    %319 = arith.addf %318, %8 : vector<1x32xf32>
    %320 = math.tanh %319 : vector<1x32xf32>
    %cst_85 = arith.constant 0.000000e+00 : f32
    %321 = vector.broadcast %cst_85 : f32 to vector<7x32xf32>
    %322 = tpu.concatenate %320, %321 in 0 : vector<1x32xf32>, vector<7x32xf32> -> vector<8x32xf32>
    %cst_86 = arith.constant 0.000000e+00 : f32
    %323 = vector.broadcast %cst_86 : f32 to vector<8x96xf32>
    %324 = tpu.concatenate %322, %323 in 1 : vector<8x32xf32>, vector<8x96xf32> -> vector<8x128xf32>
    %c0_87 = arith.constant 0 : index
    %c0_88 = arith.constant 0 : index
    %c0_89 = arith.constant 0 : index
    %325 = vector.load %arg3[%c0_87, %c0_88, %c0_89] : memref<1x8x128xf32, #tpu.memory_space<vmem>>, vector<1x8x128xf32>
    %326 = vector.shape_cast %325 : vector<1x8x128xf32> to vector<8x128xf32>
    %327 = vector.shape_cast %324 : vector<8x128xf32> to vector<1x8x128xf32>
    tpu.vector_store %arg3[%c0_87, %c0_88, %c0_89], %327 {strides = array<i32>} : memref<1x8x128xf32, #tpu.memory_space<vmem>>, vector<1x8x128xf32>,
    return
  }
  func.func @transform_0(%arg0: i32) -> (i32, i32, i32) {
    %c0_i32 = arith.constant 0 : i32
    %c0_i32_0 = arith.constant 0 : i32
    %c0_i32_1 = arith.constant 0 : i32
    return %arg0, %c0_i32, %c0_i32_0 : i32, i32, i32
  }
  func.func @transform_1(%arg0: i32) -> (i32, i32) {
    %c0_i32 = arith.constant 0 : i32
    %c0_i32_0 = arith.constant 0 : i32
    %c0_i32_1 = arith.constant 0 : i32
    return %c0_i32, %c0_i32_0 : i32, i32
  }
  func.func @transform_2(%arg0: i32) -> (i32, i32, i32) {
    %c0_i32 = arith.constant 0 : i32
    %c0_i32_0 = arith.constant 0 : i32
    %c0_i32_1 = arith.constant 0 : i32
    return %arg0, %c0_i32, %c0_i32_0 : i32, i32, i32
  }
  func.func @transform_3(%arg0: i32) -> (i32, i32, i32, i32) {
    %c0_i32 = arith.constant 0 : i32
    %c0_i32_0 = arith.constant 0 : i32
    %c0_i32_1 = arith.constant 0 : i32
    %c0_i32_2 = arith.constant 0 : i32
    return %c0_i32, %arg0, %c0_i32_0, %c0_i32_1 : i32, i32, i32, i32
  }
  func.func @transform_4(%arg0: i32) -> (i32, i32, i32, i32, i32) {
    %c0_i32 = arith.constant 0 : i32
    %c0_i32_0 = arith.constant 0 : i32
    %c0_i32_1 = arith.constant 0 : i32
    %c0_i32_2 = arith.constant 0 : i32
    %c0_i32_3 = arith.constant 0 : i32
    return %c0_i32, %arg0, %c0_i32_0, %c0_i32_1, %c0_i32_2 : i32, i32, i32, i32, i32
  }
}

</mosaic_0001>

<llo_original>
// kernel: bert_forward.1
$region0: #{bert_forward.1}
  #allocation0 [shape = 'u32[]', space=smem, size = 0x4, offset = 0x4, fixed_abs, tag = 'smem constant byte address 0x4 - core index']
  #allocation1 [shape = 'u32[144,128]{1,0:T(1,128)}', space=vmem, size = 0x12000, scoped, tag = 'internal scratch']
  %s0 = inlined_call_operand.vmem [shape: f32[2,8,128], index: 0, kind: input, shape index: {}]
  %s1 = inlined_call_operand.vmem [shape: f32[376,128], index: 1, kind: input, shape index: {}]
  %s2 = inlined_call_operand.vmem [shape: f32[2,8,128], index: 2, kind: output, shape index: {0}]
  %s3 = inlined_call_operand.vmem [shape: f32[2,2,8,128], index: 3, kind: output, shape index: {1}]
  %s4 = inlined_call_operand.vmem [shape: f32[2,2,4,8,128], index: 4, kind: output, shape index: {2}]
  %5 = xla_tuple %s2, %s3, %s4
  %s6 = sld [smem:[#allocation0]]
  $region125: #{bert_forward.1} parent=0
    _
  %s8 = ssub.s32 1, %s6
  %s9 = scalar_select 0, %s8, %s6
  $region1: #{bert_forward.1} parent=0
    #allocation2 [shape = 'u8[16384]{0}', space=vmem, size = 0x4000, scoped, tag = 'output window, operand 1']
    #allocation3 [shape = 'u8[65536]{0}', space=vmem, size = 0x10000, scoped, tag = 'output window, operand 2']
    loop: start=0, step=1, limit=4
    $region2: #{bert_forward.1} parent=1 // loop_pre_header
      _
    $region3: #{bert_forward.1} parent=1 // loop_header
      %s11 = sphi 0, %s15
      %p12 = scmp.ge.s32.totalorder %s11, 4
      %s21 = sphi 0, %s23
      %s24 = sphi 0, %s21
      %s25 = sphi 0, %s24
      %s41 = sphi 0, %s25
      %s45 = sphi 0, %s45
      %s47 = sphi 0, %s45
      %s48 = sphi 0, %s47
      %s62 = sphi 0, %s48
      %s68 = sphi 0, %s70
      %s71 = sphi 0, %s68
      %s72 = sphi 0, %s71
      %s88 = sphi 0, %s72
      %s94 = sphi 0, %s96
      %s97 = sphi 0, %s94
      %s98 = sphi 0, %s97
      %s114 = sphi 0, %s98
      %s120 = sphi 0, %s122
      %s123 = sphi 0, %s120
      %s124 = sphi 0, %s123
      %s140 = sphi 0, %s124
    $region4: #{bert_forward.1} parent=1 // loop_header_branch
      %14 = sbr.rel (%p12) target = $region8
    $region5: #{bert_forward.1} parent=1 // loop_body
      %s16 = ssub.s32 %s11, 1
      %s17 = ssub.s32 %s11, 2
      %s18 = sadd.s32 %s11, 1
      %s19 = ssub.s32 %s11, %s18
      %p20 = scmp.eq.s32.totalorder %s19, 0
      %s22 = sadd.s32 %s21, 1
      %s23 = scalar_select %p20, %s21, %s22
      %p26 = pneg %p20
      %p27 = scmp.eq.s32.totalorder %s11, 1
      %p28 = por %p26, %p27
      %p29 = scmp.ne.s32.totalorder %s21, %s24
      %p30 = scmp.eq.s32.totalorder %s11, 0
      %p31 = por %p29, %p30
      %p32 = scmp.ne.s32.totalorder %s21, %s24
      %p33 = scmp.eq.s32.totalorder %s16, 1
      %p34 = por %p32, %p33
      %p35 = scmp.ne.s32.totalorder %s24, %s25
      %p36 = scmp.eq.s32.totalorder %s16, 0
      %p37 = por %p35, %p36
      %p38 = scmp.ne.s32.totalorder %s24, %s25
      %p39 = scmp.eq.s32.totalorder %s17, 1
      %p40 = por %p38, %p39
      %p42 = scmp.ne.s32.totalorder %s25, %s41
      %p43 = scmp.eq.s32.totalorder %s17, 0
      %p44 = por %p42, %p43
      %s46 = sadd.s32 %s45, 1
      %p49 = scmp.eq.s32.totalorder %s11, 1
      %p50 = scmp.ne.s32.totalorder %s45, %s47
      %p51 = scmp.eq.s32.totalorder %s11, 0
      %p52 = por %p50, %p51
      %p53 = scmp.ne.s32.totalorder %s45, %s47
      %p54 = scmp.eq.s32.totalorder %s16, 1
      %p55 = por %p53, %p54
      %p56 = scmp.ne.s32.totalorder %s47, %s48
      %p57 = scmp.eq.s32.totalorder %s16, 0
      %p58 = por %p56, %p57
      %p59 = scmp.ne.s32.totalorder %s47, %s48
      %p60 = scmp.eq.s32.totalorder %s17, 1
      %p61 = por %p59, %p60
      %p63 = scmp.ne.s32.totalorder %s48, %s62
      %p64 = scmp.eq.s32.totalorder %s17, 0
      %p65 = por %p63, %p64
      %s66 = ssub.s32 %s11, %s18
      %p67 = scmp.eq.s32.totalorder %s66, 0
      %s69 = sadd.s32 %s68, 1
      %s70 = scalar_select %p67, %s68, %s69
      %p73 = pneg %p67
      %p74 = scmp.eq.s32.totalorder %s11, 1
      %p75 = por %p73, %p74
      %p76 = scmp.ne.s32.totalorder %s68, %s71
      %p77 = scmp.eq.s32.totalorder %s11, 0
      %p78 = por %p76, %p77
      %p79 = scmp.ne.s32.totalorder %s68, %s71
      %p80 = scmp.eq.s32.totalorder %s16, 1
      %p81 = por %p79, %p80
      %p82 = scmp.ne.s32.totalorder %s71, %s72
      %p83 = scmp.eq.s32.totalorder %s16, 0
      %p84 = por %p82, %p83
      %p85 = scmp.ne.s32.totalorder %s71, %s72
      %p86 = scmp.eq.s32.totalorder %s17, 1
      %p87 = por %p85, %p86
      %p89 = scmp.ne.s32.totalorder %s72, %s88
      %p90 = scmp.eq.s32.totalorder %s17, 0
      %p91 = por %p89, %p90
      %s92 = ssub.s32 %s11, %s18
      %p93 = scmp.eq.s32.totalorder %s92, 0
      %s95 = sadd.s32 %s94, 1
      %s96 = scalar_select %p93, %s94, %s95
      %p99 = pneg %p93
      %p100 = scmp.eq.s32.totalorder %s11, 1
      %p101 = por %p99, %p100
      %p102 = scmp.ne.s32.totalorder %s94, %s97
      %p103 = scmp.eq.s32.totalorder %s11, 0
      %p104 = por %p102, %p103
      %p105 = scmp.ne.s32.totalorder %s94, %s97
      %p106 = scmp.eq.s32.totalorder %s16, 1
      %p107 = por %p105, %p106
      %p108 = scmp.ne.s32.totalorder %s97, %s98
      %p109 = scmp.eq.s32.totalorder %s16, 0
      %p110 = por %p108, %p109
      %p111 = scmp.ne.s32.totalorder %s97, %s98
      %p112 = scmp.eq.s32.totalorder %s17, 1
      %p113 = por %p111, %p112
      %p115 = scmp.ne.s32.totalorder %s98, %s114
      %p116 = scmp.eq.s32.totalorder %s17, 0
      %p117 = por %p115, %p116
      %s118 = ssub.s32 %s11, %s18
      %p119 = scmp.eq.s32.totalorder %s118, 0
      %s121 = sadd.s32 %s120, 1
      %s122 = scalar_select %p119, %s120, %s121
      %p125 = pneg %p119
      %p126 = scmp.eq.s32.totalorder %s11, 1
      %p127 = por %p125, %p126
      %p128 = scmp.ne.s32.totalorder %s120, %s123
      %p129 = scmp.eq.s32.totalorder %s11, 0
      %p130 = por %p128, %p129
      %p131 = scmp.ne.s32.totalorder %s120, %s123
      %p132 = scmp.eq.s32.totalorder %s16, 1
      %p133 = por %p131, %p132
      %p134 = scmp.ne.s32.totalorder %s123, %s124
      %p135 = scmp.eq.s32.totalorder %s16, 0
      %p136 = por %p134, %p135
      %p137 = scmp.ne.s32.totalorder %s123, %s124
      %p138 = scmp.eq.s32.totalorder %s17, 1
      %p139 = por %p137, %p138
      %p141 = scmp.ne.s32.totalorder %s124, %s140
      %p142 = scmp.eq.s32.totalorder %s17, 0
      %p143 = por %p141, %p142
      %p144 = scmp.le.s32.totalorder 1, %s11
      %p145 = scmp.lt.s32.totalorder %s11, 3
      %p146 = pnand %p144, %p145
      %p147 = pneg %p146
      // Predicated region
      $region9: #{bert_forward.1} parent=5 // pred_check
        _
      $region10: #{bert_forward.1} parent=5 // pred_check_branch
        %149 = sbr.rel (%p146) target = $region12
      $region11: #{bert_forward.1} parent=5 // pred_region
        %s150 = ssub.s32 %s11, 1
        // Predicated region
        $region13: #{bert_forward.1} parent=11 // pred_check
          %p151 = pneg %p58
        $region14: #{bert_forward.1} parent=11 // pred_check_branch
          %153 = sbr.rel (%p151) target = $region16
        $region15: #{bert_forward.1} parent=11 // pred_region
          _
        $region16: #{bert_forward.1} parent=11 // pred_fallthru
          _
      $region12: #{bert_forward.1} parent=5 // pred_fallthru
        _
      %p154 = scmp.lt.s32.totalorder %s11, 2
      // Predicated region
      $region17: #{bert_forward.1} parent=5 // pred_check
        %p155 = pneg %p154
      $region18: #{bert_forward.1} parent=5 // pred_check_branch
        %157 = sbr.rel (%p155) target = $region20
      $region19: #{bert_forward.1} parent=5 // pred_region
        // Predicated region
        $region21: #{bert_forward.1} parent=19 // pred_check
          %p158 = pneg %p31
        $region22: #{bert_forward.1} parent=19 // pred_check_branch
          %160 = sbr.rel (%p158) target = $region24
        $region23: #{bert_forward.1} parent=19 // pred_region
          %p161 = scmp.lt.s32.totalorder %s11, 1
          %s162 = scalar_select %p161, %s11, 1
          %s163 = smul.addr %s162, 8
          %s164 = scalar_lea.vmem %s0, %s163
        $region24: #{bert_forward.1} parent=19 // pred_fallthru
          _
      $region20: #{bert_forward.1} parent=5 // pred_fallthru
        _
      %p165 = scmp.le.s32.totalorder 1, %s11
      %p166 = scmp.lt.s32.totalorder %s11, 3
      %p167 = pnand %p165, %p166
      %p168 = pneg %p167
      // Predicated region
      $region25: #{bert_forward.1} parent=5 // pred_check
        _
      $region26: #{bert_forward.1} parent=5 // pred_check_branch
        %170 = sbr.rel (%p167) target = $region28
      $region27: #{bert_forward.1} parent=5 // pred_region
        %s171 = ssub.s32 %s11, 1
        %p172 = scmp.lt.s32.totalorder %s16, 1
        %s173 = scalar_select %p172, %s16, 1
        %s174 = smul.addr %s173, 8
        %s175 = scalar_lea.vmem %s0, %s174
        %p176 = pneg %p37
        %p177 = pneg %p34
        %p178 = pneg %p58
        %p179 = pneg %p55
        %p180 = pneg %p84
        %p181 = pneg %p81
        %p182 = scmp.lt.s32.totalorder %s16, 1
        %s183 = scalar_select %p182, %s16, 1
        %s184 = smul.addr %s183, 8
        %s185 = scalar_lea.vmem %s2, %s184
        %p186 = pneg %p110
        %p187 = pneg %p107
        %s188 = sand.u32 %s97, 1
        %s189 = sand.u32 %s97, 1
        %s190 = smul.addr %s189, 16
        %s191 = scalar_lea.vmem [#allocation2], %s190
        %p192 = pneg %p136
        %p193 = pneg %p133
        %s194 = sand.u32 %s123, 1
        %s195 = sand.u32 %s123, 1
        %s196 = smul.addr %s195, 64
        %s197 = scalar_lea.vmem [#allocation3], %s196
        %p198 = scmp.lt.s32.totalorder %s16, 1
        %s199 = scalar_select %p198, %s16, 1
        %s200 = smul.addr %s199, 8
        %s201 = scalar_lea.vmem %s0, %s200
        %p202 = scmp.lt.s32.totalorder %s16, 1
        %s203 = scalar_select %p202, %s16, 1
        %s204 = smul.addr %s203, 8
        %s205 = scalar_lea.vmem %s2, %s204
        %v206 = vld [vmem:[%s201] sm:$0xff]
        %v207 = vld [vmem:[%s1 + $0x170] sm:$0xff]
        %vm208 = vcmask 261120
        %v209 = vsel %vm208, %v206, 0.0
        %210 = vadd.xlane.f32.xlu0 %v209
        %v211 = vpop.xlane.xlu0 %210
        %v212 = vrcp.pop 32.0
        %v213 = vmul.f32 %v211, %v212
        %v214 = vsub.f32 %v206, %v213
        %v215 = vmul.f32 %v214, %v214
        %v216 = vsel %vm208, %v215, 0.0
        %217 = vadd.xlane.f32.xlu0 %v216
        %v218 = vpop.xlane.xlu0 %217
        %v219 = vmul.f32 %v218, %v212
        %v220 = vadd.f32 %v219, 1e-12
        %v221 = vrsqrt.pop %v220
        %v222 = vmul.f32 %v214, %v221
        %v223 = vlaneseq
        %v224 = vshrl.u32 %v223, 7
        %v225 = vsub.s32 0, %v224
        %v226 = vrot.slane %v207, %v225
        %v227 = vmul.f32 %v222, %v226
        %v228 = vlaneseq
        %v229 = vshrl.u32 %v228, 7
        %v230 = vsub.s32 1, %v229
        %v231 = vrot.slane %v207, %v230
        %v232 = vadd.f32 %v227, %v231
        %234 = vrot.lane.b32.xlu0 %v206, 96
        %v235 = vpop.permute.xlu0 %234
        %v237 = vmul.f32 %v232, %v235
        %v238 = vld [vmem:[%s1] sm:$0xff]
        %v239 = vld [vmem:[%s1 + $0x8] sm:$0xff]
        %v240 = vld [vmem:[%s1 + $0x10] sm:$0xff]
        %v241 = vld [vmem:[%s1 + $0x18] sm:$0xff]
        %v242 = vld [vmem:[%s1 + $0x20] sm:$0xff]
        %v243 = vld [vmem:[%s1 + $0x28] sm:$0xff]
        %v244 = vld [vmem:[%s1 + $0x30] sm:$0xff]
        %v245 = vld [vmem:[%s1 + $0x38] sm:$0xff]
        %v246 = vld [vmem:[%s1 + $0x40] sm:$0xff]
        %v247 = vld [vmem:[%s1 + $0x48] sm:$0xff]
        %v248 = vld [vmem:[%s1 + $0x50] sm:$0xff]
        %v249 = vld [vmem:[%s1 + $0x58] sm:$0xff]
        %v250 = vld [vmem:[%s1 + $0x60] sm:$0xff]
        %v251 = vld [vmem:[%s1 + $0x68] sm:$0xff]
        %v252 = vld [vmem:[%s1 + $0x70] sm:$0xff]
        %v253 = vld [vmem:[%s1 + $0x78] sm:$0xff]
        %v254 = vld [vmem:[%s1 + $0x80] sm:$0xff]
        %v255 = vld [vmem:[%s1 + $0x88] sm:$0xff]
        %v256 = vld [vmem:[%s1 + $0x90] sm:$0xff]
        %v257 = vld [vmem:[%s1 + $0x98] sm:$0xff]
        %v258 = vld [vmem:[%s1 + $0xa0] sm:$0xff]
        %v259 = vlaneseq
        %v260 = vshrl.u32 %v259, 7
        %v261 = vsub.s32 0, %v260
        %v262 = vrot.slane %v258, %v261
        %v264 = vsel %vm208, %v237, 0
        %266 = vmatprep.subr.mxu0 0.0
        %267 = vmatpush1.msra.mxu0 0.0
        %268 = vmatprep.subr.mxu0 0.0
        %269 = vmatpush1.msra.mxu0 0.0
        %270 = vmatprep.subr.mxu0 0.0
        %271 = vmatpush1.msra.mxu0 0.0
        %272 = vmatprep.subr.mxu0 0.0
        %273 = vmatpush1.msra.mxu0 0.0
        %274 = vmatprep.subr.mxu0 0.0
        %275 = vmatpush1.msra.mxu0 0.0
        %276 = vmatprep.subr.mxu0 0.0
        %277 = vmatpush1.msra.mxu0 0.0
        %278 = vmatprep.subr.mxu0 0.0
        %279 = vmatpush1.msra.mxu0 0.0
        %280 = vmatprep.subr.mxu0 0.0
        %281 = vmatpush1.msra.mxu0 0.0
        %282 = vmatprep.subr.mxu0 0.0
        %283 = vmatpush1.msra.mxu0 0.0
        %284 = vmatprep.subr.mxu0 0.0
        %285 = vmatpush1.msra.mxu0 0.0
        %286 = vmatprep.subr.mxu0 0.0
        %287 = vmatpush1.msra.mxu0 0.0
        %288 = vmatprep.subr.mxu0 0.0
        %289 = vmatpush1.msra.mxu0 0.0
        %290 = vmatprep.subr.mxu0 0.0
        %291 = vmatpush1.msra.mxu0 %v241
        %292 = vmatprep.subr.mxu0 0.0
        %293 = vmatpush1.msra.mxu0 %v240
        %294 = vmatprep.subr.mxu0 0.0
        %295 = vmatpush1.msra.mxu0 %v239
        %296 = vmatprep.subr.mxu0 0.0
        %297 = vmatpush1.msra.mxu0 %v238
        %298 = vmatprep.subr.mxu0 0.0
        %299 = vmatpush2.msra.mxu0 0.0
        %300 = vmatprep.subr.mxu0 0.0
        %301 = vmatpush2.msra.mxu0 0.0
        %302 = vmatprep.subr.mxu0 0.0
        %303 = vmatpush2.msra.mxu0 0.0
        %304 = vmatprep.subr.mxu0 0.0
        %305 = vmatpush2.msra.mxu0 0.0
        %306 = vmatprep.subr.mxu0 0.0
        %307 = vmatpush2.msra.mxu0 0.0
        %308 = vmatprep.subr.mxu0 0.0
        %309 = vmatpush2.msra.mxu0 0.0
        %310 = vmatprep.subr.mxu0 0.0
        %311 = vmatpush2.msra.mxu0 0.0
        %312 = vmatprep.subr.mxu0 0.0
        %313 = vmatpush2.msra.mxu0 0.0
        %314 = vmatprep.subr.mxu0 0.0
        %315 = vmatpush2.msra.mxu0 0.0
        %316 = vmatprep.subr.mxu0 0.0
        %317 = vmatpush2.msra.mxu0 0.0
        %318 = vmatprep.subr.mxu0 0.0
        %319 = vmatpush2.msra.mxu0 0.0
        %320 = vmatprep.subr.mxu0 0.0
        %321 = vmatpush2.msra.mxu0 0.0
        %322 = vmatprep.subr.mxu0 0.0
        %323 = vmatpush2.msra.mxu0 0.0
        %324 = vmatprep.subr.mxu0 0.0
        %325 = vmatpush2.msra.mxu0 0.0
        %326 = vmatprep.subr.mxu0 0.0
        %327 = vmatpush2.msra.mxu0 0.0
        %328 = vmatprep.subr.mxu0 0.0
        %329 = vmatpush2.msra.mxu0 0.0
        %330 = vmatprep.mubr.f32.mxu0 0.0
        %331 = vmatmul.mubr.f32.gmra.mxu0 %v264
        %v332 = vpop.f32.mrf.mxu0
        %v333 = vadd.f32 %v262, %v332
        %v334 = vpop.f32.mrf.mxu0
        %335 = vdwg.mxu0
        %337 = vrot.lane.b32.xlu0 %v333, 120
        %v338 = vpop.permute.xlu0 %337
        %339 = vrot.lane.b32.xlu0 %v333, 112
        %v340 = vpop.permute.xlu0 %339
        %341 = vrot.lane.b32.xlu0 %v333, 104
        %v342 = vpop.permute.xlu0 %341
        %343 = vrot.lane.b32.xlu0 %v333, 96
        %v344 = vpop.permute.xlu0 %343
        %vm345 = vcmask 64512
        %v346 = vsel %vm345, %v333, 0
        %v348 = vsel %vm345, %v344, 0
        %350 = vmatprep.subr.mxu0 0.0
        %351 = vmatpush1.xpose.msra.mxu0 0.0
        %352 = vmatprep.subr.mxu0 0.0
        %353 = vmatpush1.xpose.msra.mxu0 0.0
        %354 = vmatprep.subr.mxu0 0.0
        %355 = vmatpush1.xpose.msra.mxu0 0.0
        %356 = vmatprep.subr.mxu0 0.0
        %357 = vmatpush1.xpose.msra.mxu0 0.0
        %358 = vmatprep.subr.mxu0 0.0
        %359 = vmatpush1.xpose.msra.mxu0 0.0
        %360 = vmatprep.subr.mxu0 0.0
        %361 = vmatpush1.xpose.msra.mxu0 0.0
        %362 = vmatprep.subr.mxu0 0.0
        %363 = vmatpush1.xpose.msra.mxu0 0.0
        %364 = vmatprep.subr.mxu0 0.0
        %365 = vmatpush1.xpose.msra.mxu0 0.0
        %366 = vmatprep.subr.mxu0 0.0
        %367 = vmatpush1.xpose.msra.mxu0 0.0
        %368 = vmatprep.subr.mxu0 0.0
        %369 = vmatpush1.xpose.msra.mxu0 0.0
        %370 = vmatprep.subr.mxu0 0.0
        %371 = vmatpush1.xpose.msra.mxu0 0.0
        %372 = vmatprep.subr.mxu0 0.0
        %373 = vmatpush1.xpose.msra.mxu0 0.0
        %374 = vmatprep.subr.mxu0 0.0
        %375 = vmatpush1.xpose.msra.mxu0 0.0
        %376 = vmatprep.subr.mxu0 0.0
        %377 = vmatpush1.xpose.msra.mxu0 0.0
        %378 = vmatprep.subr.mxu0 0.0
        %379 = vmatpush1.xpose.msra.mxu0 0.0
        %380 = vmatprep.subr.mxu0 0.0
        %381 = vmatpush1.xpose.msra.mxu0 %v348
        %382 = vmatprep.subr.mxu0 0.0
        %383 = vmatpush2.xpose.msra.mxu0 0.0
        %384 = vmatprep.subr.mxu0 0.0
        %385 = vmatpush2.xpose.msra.mxu0 0.0
        %386 = vmatprep.subr.mxu0 0.0
        %387 = vmatpush2.xpose.msra.mxu0 0.0
        %388 = vmatprep.subr.mxu0 0.0
        %389 = vmatpush2.xpose.msra.mxu0 0.0
        %390 = vmatprep.subr.mxu0 0.0
        %391 = vmatpush2.xpose.msra.mxu0 0.0
        %392 = vmatprep.subr.mxu0 0.0
        %393 = vmatpush2.xpose.msra.mxu0 0.0
        %394 = vmatprep.subr.mxu0 0.0
        %395 = vmatpush2.xpose.msra.mxu0 0.0
        %396 = vmatprep.subr.mxu0 0.0
        %397 = vmatpush2.xpose.msra.mxu0 0.0
        %398 = vmatprep.subr.mxu0 0.0
        %399 = vmatpush2.xpose.msra.mxu0 0.0
        %400 = vmatprep.subr.mxu0 0.0
        %401 = vmatpush2.xpose.msra.mxu0 0.0
        %402 = vmatprep.subr.mxu0 0.0
        %403 = vmatpush2.xpose.msra.mxu0 0.0
        %404 = vmatprep.subr.mxu0 0.0
        %405 = vmatpush2.xpose.msra.mxu0 0.0
        %406 = vmatprep.subr.mxu0 0.0
        %407 = vmatpush2.xpose.msra.mxu0 0.0
        %408 = vmatprep.subr.mxu0 0.0
        %409 = vmatpush2.xpose.msra.mxu0 0.0
        %410 = vmatprep.subr.mxu0 0.0
        %411 = vmatpush2.xpose.msra.mxu0 0.0
        %412 = vmatprep.subr.mxu0 0.0
        %413 = vmatpush2.xpose.msra.mxu0 0.0
        %414 = vmatprep.mubr.f32.mxu0 0.0
        %415 = vmatmul.mubr.f32.gmra.mxu0 %v346
        %v416 = vpop.f32.mrf.mxu0
        %v417 = vadd.f32 0.0, %v416
        %v418 = vpop.f32.mrf.mxu0
        %419 = vdwg.mxu0
        %420 = vrot.lane.b32.xlu0 %v338, 96
        %v421 = vpop.permute.xlu0 %420
        %v422 = vsel %vm345, %v338, 0
        %v424 = vsel %vm345, %v421, 0
        %426 = vmatprep.subr.mxu0 0.0
        %427 = vmatpush1.xpose.msra.mxu0 0.0
        %428 = vmatprep.subr.mxu0 0.0
        %429 = vmatpush1.xpose.msra.mxu0 0.0
        %430 = vmatprep.subr.mxu0 0.0
        %431 = vmatpush1.xpose.msra.mxu0 0.0
        %432 = vmatprep.subr.mxu0 0.0
        %433 = vmatpush1.xpose.msra.mxu0 0.0
        %434 = vmatprep.subr.mxu0 0.0
        %435 = vmatpush1.xpose.msra.mxu0 0.0
        %436 = vmatprep.subr.mxu0 0.0
        %437 = vmatpush1.xpose.msra.mxu0 0.0
        %438 = vmatprep.subr.mxu0 0.0
        %439 = vmatpush1.xpose.msra.mxu0 0.0
        %440 = vmatprep.subr.mxu0 0.0
        %441 = vmatpush1.xpose.msra.mxu0 0.0
        %442 = vmatprep.subr.mxu0 0.0
        %443 = vmatpush1.xpose.msra.mxu0 0.0
        %444 = vmatprep.subr.mxu0 0.0
        %445 = vmatpush1.xpose.msra.mxu0 0.0
        %446 = vmatprep.subr.mxu0 0.0
        %447 = vmatpush1.xpose.msra.mxu0 0.0
        %448 = vmatprep.subr.mxu0 0.0
        %449 = vmatpush1.xpose.msra.mxu0 0.0
        %450 = vmatprep.subr.mxu0 0.0
        %451 = vmatpush1.xpose.msra.mxu0 0.0
        %452 = vmatprep.subr.mxu0 0.0
        %453 = vmatpush1.xpose.msra.mxu0 0.0
        %454 = vmatprep.subr.mxu0 0.0
        %455 = vmatpush1.xpose.msra.mxu0 0.0
        %456 = vmatprep.subr.mxu0 0.0
        %457 = vmatpush1.xpose.msra.mxu0 %v424
        %458 = vmatprep.subr.mxu0 0.0
        %459 = vmatpush2.xpose.msra.mxu0 0.0
        %460 = vmatprep.subr.mxu0 0.0
        %461 = vmatpush2.xpose.msra.mxu0 0.0
        %462 = vmatprep.subr.mxu0 0.0
        %463 = vmatpush2.xpose.msra.mxu0 0.0
        %464 = vmatprep.subr.mxu0 0.0
        %465 = vmatpush2.xpose.msra.mxu0 0.0
        %466 = vmatprep.subr.mxu0 0.0
        %467 = vmatpush2.xpose.msra.mxu0 0.0
        %468 = vmatprep.subr.mxu0 0.0
        %469 = vmatpush2.xpose.msra.mxu0 0.0
        %470 = vmatprep.subr.mxu0 0.0
        %471 = vmatpush2.xpose.msra.mxu0 0.0
        %472 = vmatprep.subr.mxu0 0.0
        %473 = vmatpush2.xpose.msra.mxu0 0.0
        %474 = vmatprep.subr.mxu0 0.0
        %475 = vmatpush2.xpose.msra.mxu0 0.0
        %476 = vmatprep.subr.mxu0 0.0
        %477 = vmatpush2.xpose.msra.mxu0 0.0
        %478 = vmatprep.subr.mxu0 0.0
        %479 = vmatpush2.xpose.msra.mxu0 0.0
        %480 = vmatprep.subr.mxu0 0.0
        %481 = vmatpush2.xpose.msra.mxu0 0.0
        %482 = vmatprep.subr.mxu0 0.0
        %483 = vmatpush2.xpose.msra.mxu0 0.0
        %484 = vmatprep.subr.mxu0 0.0
        %485 = vmatpush2.xpose.msra.mxu0 0.0
        %486 = vmatprep.subr.mxu0 0.0
        %487 = vmatpush2.xpose.msra.mxu0 0.0
        %488 = vmatprep.subr.mxu0 0.0
        %489 = vmatpush2.xpose.msra.mxu0 0.0
        %490 = vmatprep.mubr.f32.mxu0 0.0
        %491 = vmatmul.mubr.f32.gmra.mxu0 %v422
        %v492 = vpop.f32.mrf.mxu0
        %v493 = vadd.f32 0.0, %v492
        %v494 = vpop.f32.mrf.mxu0
        %495 = vdwg.mxu0
        %496 = vrot.lane.b32.xlu0 %v340, 96
        %v497 = vpop.permute.xlu0 %496
        %v498 = vsel %vm345, %v340, 0
        %v500 = vsel %vm345, %v497, 0
        %502 = vmatprep.subr.mxu0 0.0
        %503 = vmatpush1.xpose.msra.mxu0 0.0
        %504 = vmatprep.subr.mxu0 0.0
        %505 = vmatpush1.xpose.msra.mxu0 0.0
        %506 = vmatprep.subr.mxu0 0.0
        %507 = vmatpush1.xpose.msra.mxu0 0.0
        %508 = vmatprep.subr.mxu0 0.0
        %509 = vmatpush1.xpose.msra.mxu0 0.0
        %510 = vmatprep.subr.mxu0 0.0
        %511 = vmatpush1.xpose.msra.mxu0 0.0
        %512 = vmatprep.subr.mxu0 0.0
        %513 = vmatpush1.xpose.msra.mxu0 0.0
        %514 = vmatprep.subr.mxu0 0.0
        %515 = vmatpush1.xpose.msra.mxu0 0.0
        %516 = vmatprep.subr.mxu0 0.0
        %517 = vmatpush1.xpose.msra.mxu0 0.0
        %518 = vmatprep.subr.mxu0 0.0
        %519 = vmatpush1.xpose.msra.mxu0 0.0
        %520 = vmatprep.subr.mxu0 0.0
        %521 = vmatpush1.xpose.msra.mxu0 0.0
        %522 = vmatprep.subr.mxu0 0.0
        %523 = vmatpush1.xpose.msra.mxu0 0.0
        %524 = vmatprep.subr.mxu0 0.0
        %525 = vmatpush1.xpose.msra.mxu0 0.0
        %526 = vmatprep.subr.mxu0 0.0
        %527 = vmatpush1.xpose.msra.mxu0 0.0
        %528 = vmatprep.subr.mxu0 0.0
        %529 = vmatpush1.xpose.msra.mxu0 0.0
        %530 = vmatprep.subr.mxu0 0.0
        %531 = vmatpush1.xpose.msra.mxu0 0.0
        %532 = vmatprep.subr.mxu0 0.0
        %533 = vmatpush1.xpose.msra.mxu0 %v500
        %534 = vmatprep.subr.mxu0 0.0
        %535 = vmatpush2.xpose.msra.mxu0 0.0
        %536 = vmatprep.subr.mxu0 0.0
        %537 = vmatpush2.xpose.msra.mxu0 0.0
        %538 = vmatprep.subr.mxu0 0.0
        %539 = vmatpush2.xpose.msra.mxu0 0.0
        %540 = vmatprep.subr.mxu0 0.0
        %541 = vmatpush2.xpose.msra.mxu0 0.0
        %542 = vmatprep.subr.mxu0 0.0
        %543 = vmatpush2.xpose.msra.mxu0 0.0
        %544 = vmatprep.subr.mxu0 0.0
        %545 = vmatpush2.xpose.msra.mxu0 0.0
        %546 = vmatprep.subr.mxu0 0.0
        %547 = vmatpush2.xpose.msra.mxu0 0.0
        %548 = vmatprep.subr.mxu0 0.0
        %549 = vmatpush2.xpose.msra.mxu0 0.0
        %550 = vmatprep.subr.mxu0 0.0
        %551 = vmatpush2.xpose.msra.mxu0 0.0
        %552 = vmatprep.subr.mxu0 0.0
        %553 = vmatpush2.xpose.msra.mxu0 0.0
        %554 = vmatprep.subr.mxu0 0.0
        %555 = vmatpush2.xpose.msra.mxu0 0.0
        %556 = vmatprep.subr.mxu0 0.0
        %557 = vmatpush2.xpose.msra.mxu0 0.0
        %558 = vmatprep.subr.mxu0 0.0
        %559 = vmatpush2.xpose.msra.mxu0 0.0
        %560 = vmatprep.subr.mxu0 0.0
        %561 = vmatpush2.xpose.msra.mxu0 0.0
        %562 = vmatprep.subr.mxu0 0.0
        %563 = vmatpush2.xpose.msra.mxu0 0.0
        %564 = vmatprep.subr.mxu0 0.0
        %565 = vmatpush2.xpose.msra.mxu0 0.0
        %566 = vmatprep.mubr.f32.mxu0 0.0
        %567 = vmatmul.mubr.f32.gmra.mxu0 %v498
        %v568 = vpop.f32.mrf.mxu0
        %v569 = vadd.f32 0.0, %v568
        %v570 = vpop.f32.mrf.mxu0
        %571 = vdwg.mxu0
        %572 = vrot.lane.b32.xlu0 %v342, 96
        %v573 = vpop.permute.xlu0 %572
        %v574 = vsel %vm345, %v342, 0
        %v576 = vsel %vm345, %v573, 0
        %578 = vmatprep.subr.mxu0 0.0
        %579 = vmatpush1.xpose.msra.mxu0 0.0
        %580 = vmatprep.subr.mxu0 0.0
        %581 = vmatpush1.xpose.msra.mxu0 0.0
        %582 = vmatprep.subr.mxu0 0.0
        %583 = vmatpush1.xpose.msra.mxu0 0.0
        %584 = vmatprep.subr.mxu0 0.0
        %585 = vmatpush1.xpose.msra.mxu0 0.0
        %586 = vmatprep.subr.mxu0 0.0
        %587 = vmatpush1.xpose.msra.mxu0 0.0
        %588 = vmatprep.subr.mxu0 0.0
        %589 = vmatpush1.xpose.msra.mxu0 0.0
        %590 = vmatprep.subr.mxu0 0.0
        %591 = vmatpush1.xpose.msra.mxu0 0.0
        %592 = vmatprep.subr.mxu0 0.0
        %593 = vmatpush1.xpose.msra.mxu0 0.0
        %594 = vmatprep.subr.mxu0 0.0
        %595 = vmatpush1.xpose.msra.mxu0 0.0
        %596 = vmatprep.subr.mxu0 0.0
        %597 = vmatpush1.xpose.msra.mxu0 0.0
        %598 = vmatprep.subr.mxu0 0.0
        %599 = vmatpush1.xpose.msra.mxu0 0.0
        %600 = vmatprep.subr.mxu0 0.0
        %601 = vmatpush1.xpose.msra.mxu0 0.0
        %602 = vmatprep.subr.mxu0 0.0
        %603 = vmatpush1.xpose.msra.mxu0 0.0
        %604 = vmatprep.subr.mxu0 0.0
        %605 = vmatpush1.xpose.msra.mxu0 0.0
        %606 = vmatprep.subr.mxu0 0.0
        %607 = vmatpush1.xpose.msra.mxu0 0.0
        %608 = vmatprep.subr.mxu0 0.0
        %609 = vmatpush1.xpose.msra.mxu0 %v576
        %610 = vmatprep.subr.mxu0 0.0
        %611 = vmatpush2.xpose.msra.mxu0 0.0
        %612 = vmatprep.subr.mxu0 0.0
        %613 = vmatpush2.xpose.msra.mxu0 0.0
        %614 = vmatprep.subr.mxu0 0.0
        %615 = vmatpush2.xpose.msra.mxu0 0.0
        %616 = vmatprep.subr.mxu0 0.0
        %617 = vmatpush2.xpose.msra.mxu0 0.0
        %618 = vmatprep.subr.mxu0 0.0
        %619 = vmatpush2.xpose.msra.mxu0 0.0
        %620 = vmatprep.subr.mxu0 0.0
        %621 = vmatpush2.xpose.msra.mxu0 0.0
        %622 = vmatprep.subr.mxu0 0.0
        %623 = vmatpush2.xpose.msra.mxu0 0.0
        %624 = vmatprep.subr.mxu0 0.0
        %625 = vmatpush2.xpose.msra.mxu0 0.0
        %626 = vmatprep.subr.mxu0 0.0
        %627 = vmatpush2.xpose.msra.mxu0 0.0
        %628 = vmatprep.subr.mxu0 0.0
        %629 = vmatpush2.xpose.msra.mxu0 0.0
        %630 = vmatprep.subr.mxu0 0.0
        %631 = vmatpush2.xpose.msra.mxu0 0.0
        %632 = vmatprep.subr.mxu0 0.0
        %633 = vmatpush2.xpose.msra.mxu0 0.0
        %634 = vmatprep.subr.mxu0 0.0
        %635 = vmatpush2.xpose.msra.mxu0 0.0
        %636 = vmatprep.subr.mxu0 0.0
        %637 = vmatpush2.xpose.msra.mxu0 0.0
        %638 = vmatprep.subr.mxu0 0.0
        %639 = vmatpush2.xpose.msra.mxu0 0.0
        %640 = vmatprep.subr.mxu0 0.0
        %641 = vmatpush2.xpose.msra.mxu0 0.0
        %642 = vmatprep.mubr.f32.mxu0 0.0
        %643 = vmatmul.mubr.f32.gmra.mxu0 %v574
        %v644 = vpop.f32.mrf.mxu0
        %v645 = vadd.f32 0.0, %v644
        %v646 = vpop.f32.mrf.mxu0
        %647 = vdwg.mxu0
        %v648 = vmul.f32 %v417, 0.35355338
        %v649 = vmul.f32 %v493, 0.35355338
        %v650 = vmul.f32 %v569, 0.35355338
        %v651 = vmul.f32 %v645, 0.35355338
        %652 = vrot.lane.b32.xlu0 %v206, 64
        %v653 = vpop.permute.xlu0 %652
        %v655 = vadd.f32 %v648, %v653
        %v656 = vadd.f32 %v649, %v653
        %v657 = vadd.f32 %v650, %v653
        %v658 = vadd.f32 %v651, %v653
        %v659 = vsel %vm345, %v655, -inf
        %660 = vmax.xlane.f32.xlu0 %v659
        %v661 = vpop.xlane.xlu0 %660
        %v662 = vsel %vm345, %v656, -inf
        %663 = vmax.xlane.f32.xlu0 %v662
        %v664 = vpop.xlane.xlu0 %663
        %v665 = vsel %vm345, %v657, -inf
        %666 = vmax.xlane.f32.xlu0 %v665
        %v667 = vpop.xlane.xlu0 %666
        %v668 = vsel %vm345, %v658, -inf
        %669 = vmax.xlane.f32.xlu0 %v668
        %v670 = vpop.xlane.xlu0 %669
        %v671 = vsub.f32 %v655, %v661
        %v672 = vsub.f32 %v656, %v664
        %v673 = vsub.f32 %v657, %v667
        %v674 = vsub.f32 %v658, %v670
        %v675 = vmul.f32 %v671, 1.442695
        %v676 = vpow.pop %v675
        %v677 = vmul.f32 %v672, 1.442695
        %v678 = vpow.pop %v677
        %v679 = vmul.f32 %v673, 1.442695
        %v680 = vpow.pop %v679
        %v681 = vmul.f32 %v674, 1.442695
        %v682 = vpow.pop %v681
        %v683 = vsel %vm345, %v676, 0.0
        %684 = vadd.xlane.f32.xlu0 %v683
        %v685 = vpop.xlane.xlu0 %684
        %v686 = vsel %vm345, %v678, 0.0
        %687 = vadd.xlane.f32.xlu0 %v686
        %v688 = vpop.xlane.xlu0 %687
        %v689 = vsel %vm345, %v680, 0.0
        %690 = vadd.xlane.f32.xlu0 %v689
        %v691 = vpop.xlane.xlu0 %690
        %v692 = vsel %vm345, %v682, 0.0
        %693 = vadd.xlane.f32.xlu0 %v692
        %v694 = vpop.xlane.xlu0 %693
        %v695 = vrcp.pop %v685
        %v696 = vrcp.pop %v688
        %v697 = vrcp.pop %v691
        %v698 = vrcp.pop %v694
        %v699 = vmul.f32 %v676, %v695
        %v700 = vmul.f32 %v678, %v696
        %v701 = vmul.f32 %v680, %v697
        %v702 = vmul.f32 %v682, %v698
        %v703 = vsel %vm345, %v699, 0.0
        %v704 = vsel %vm345, %v700, 0.0
        %v705 = vsel %vm345, %v701, 0.0
        %v706 = vsel %vm345, %v702, 0.0
        %707 = vst [vmem:[%s197] sm:$0xff] %v703
        %708 = vst [vmem:[%s197 + $0x8] sm:$0xff] %v704
        %709 = vst [vmem:[%s197 + $0x10] sm:$0xff] %v705
        %710 = vst [vmem:[%s197 + $0x18] sm:$0xff] %v706
        %711 = vrot.lane.b32.xlu0 %v333, 64
        %v712 = vpop.permute.xlu0 %711
        %v715 = vsel %vm345, %v699, 0
        %717 = vmatprep.subr.mxu0 0.0
        %718 = vmatpush1.msra.mxu0 0.0
        %719 = vmatprep.subr.mxu0 0.0
        %720 = vmatpush1.msra.mxu0 0.0
        %721 = vmatprep.subr.mxu0 0.0
        %722 = vmatpush1.msra.mxu0 0.0
        %723 = vmatprep.subr.mxu0 0.0
        %724 = vmatpush1.msra.mxu0 0.0
        %725 = vmatprep.subr.mxu0 0.0
        %726 = vmatpush1.msra.mxu0 0.0
        %727 = vmatprep.subr.mxu0 0.0
        %728 = vmatpush1.msra.mxu0 0.0
        %729 = vmatprep.subr.mxu0 0.0
        %730 = vmatpush1.msra.mxu0 0.0
        %731 = vmatprep.subr.mxu0 0.0
        %732 = vmatpush1.msra.mxu0 0.0
        %733 = vmatprep.subr.mxu0 0.0
        %734 = vmatpush1.msra.mxu0 0.0
        %735 = vmatprep.subr.mxu0 0.0
        %736 = vmatpush1.msra.mxu0 0.0
        %737 = vmatprep.subr.mxu0 0.0
        %738 = vmatpush1.msra.mxu0 0.0
        %739 = vmatprep.subr.mxu0 0.0
        %740 = vmatpush1.msra.mxu0 0.0
        %741 = vmatprep.subr.mxu0 0.0
        %742 = vmatpush1.msra.mxu0 0.0
        %743 = vmatprep.subr.mxu0 0.0
        %744 = vmatpush1.msra.mxu0 0.0
        %745 = vmatprep.subr.mxu0 0.0
        %746 = vmatpush1.msra.mxu0 0.0
        %747 = vmatprep.subr.mxu0 0.0
        %748 = vmatpush1.msra.mxu0 %v712
        %749 = vmatprep.subr.mxu0 0.0
        %750 = vmatpush2.msra.mxu0 0.0
        %751 = vmatprep.subr.mxu0 0.0
        %752 = vmatpush2.msra.mxu0 0.0
        %753 = vmatprep.subr.mxu0 0.0
        %754 = vmatpush2.msra.mxu0 0.0
        %755 = vmatprep.subr.mxu0 0.0
        %756 = vmatpush2.msra.mxu0 0.0
        %757 = vmatprep.subr.mxu0 0.0
        %758 = vmatpush2.msra.mxu0 0.0
        %759 = vmatprep.subr.mxu0 0.0
        %760 = vmatpush2.msra.mxu0 0.0
        %761 = vmatprep.subr.mxu0 0.0
        %762 = vmatpush2.msra.mxu0 0.0
        %763 = vmatprep.subr.mxu0 0.0
        %764 = vmatpush2.msra.mxu0 0.0
        %765 = vmatprep.subr.mxu0 0.0
        %766 = vmatpush2.msra.mxu0 0.0
        %767 = vmatprep.subr.mxu0 0.0
        %768 = vmatpush2.msra.mxu0 0.0
        %769 = vmatprep.subr.mxu0 0.0
        %770 = vmatpush2.msra.mxu0 0.0
        %771 = vmatprep.subr.mxu0 0.0
        %772 = vmatpush2.msra.mxu0 0.0
        %773 = vmatprep.subr.mxu0 0.0
        %774 = vmatpush2.msra.mxu0 0.0
        %775 = vmatprep.subr.mxu0 0.0
        %776 = vmatpush2.msra.mxu0 0.0
        %777 = vmatprep.subr.mxu0 0.0
        %778 = vmatpush2.msra.mxu0 0.0
        %779 = vmatprep.subr.mxu0 0.0
        %780 = vmatpush2.msra.mxu0 0.0
        %781 = vmatprep.mubr.f32.mxu0 0.0
        %782 = vmatmul.mubr.f32.gmra.mxu0 %v715
        %v783 = vpop.f32.mrf.mxu0
        %v784 = vadd.f32 0.0, %v783
        %v785 = vpop.f32.mrf.mxu0
        %786 = vdwg.mxu0
        %787 = vrot.lane.b32.xlu0 %v338, 64
        %v788 = vpop.permute.xlu0 %787
        %v791 = vsel %vm345, %v700, 0
        %793 = vmatprep.subr.mxu0 0.0
        %794 = vmatpush1.msra.mxu0 0.0
        %795 = vmatprep.subr.mxu0 0.0
        %796 = vmatpush1.msra.mxu0 0.0
        %797 = vmatprep.subr.mxu0 0.0
        %798 = vmatpush1.msra.mxu0 0.0
        %799 = vmatprep.subr.mxu0 0.0
        %800 = vmatpush1.msra.mxu0 0.0
        %801 = vmatprep.subr.mxu0 0.0
        %802 = vmatpush1.msra.mxu0 0.0
        %803 = vmatprep.subr.mxu0 0.0
        %804 = vmatpush1.msra.mxu0 0.0
        %805 = vmatprep.subr.mxu0 0.0
        %806 = vmatpush1.msra.mxu0 0.0
        %807 = vmatprep.subr.mxu0 0.0
        %808 = vmatpush1.msra.mxu0 0.0
        %809 = vmatprep.subr.mxu0 0.0
        %810 = vmatpush1.msra.mxu0 0.0
        %811 = vmatprep.subr.mxu0 0.0
        %812 = vmatpush1.msra.mxu0 0.0
        %813 = vmatprep.subr.mxu0 0.0
        %814 = vmatpush1.msra.mxu0 0.0
        %815 = vmatprep.subr.mxu0 0.0
        %816 = vmatpush1.msra.mxu0 0.0
        %817 = vmatprep.subr.mxu0 0.0
        %818 = vmatpush1.msra.mxu0 0.0
        %819 = vmatprep.subr.mxu0 0.0
        %820 = vmatpush1.msra.mxu0 0.0
        %821 = vmatprep.subr.mxu0 0.0
        %822 = vmatpush1.msra.mxu0 0.0
        %823 = vmatprep.subr.mxu0 0.0
        %824 = vmatpush1.msra.mxu0 %v788
        %825 = vmatprep.subr.mxu0 0.0
        %826 = vmatpush2.msra.mxu0 0.0
        %827 = vmatprep.subr.mxu0 0.0
        %828 = vmatpush2.msra.mxu0 0.0
        %829 = vmatprep.subr.mxu0 0.0
        %830 = vmatpush2.msra.mxu0 0.0
        %831 = vmatprep.subr.mxu0 0.0
        %832 = vmatpush2.msra.mxu0 0.0
        %833 = vmatprep.subr.mxu0 0.0
        %834 = vmatpush2.msra.mxu0 0.0
        %835 = vmatprep.subr.mxu0 0.0
        %836 = vmatpush2.msra.mxu0 0.0
        %837 = vmatprep.subr.mxu0 0.0
        %838 = vmatpush2.msra.mxu0 0.0
        %839 = vmatprep.subr.mxu0 0.0
        %840 = vmatpush2.msra.mxu0 0.0
        %841 = vmatprep.subr.mxu0 0.0
        %842 = vmatpush2.msra.mxu0 0.0
        %843 = vmatprep.subr.mxu0 0.0
        %844 = vmatpush2.msra.mxu0 0.0
        %845 = vmatprep.subr.mxu0 0.0
        %846 = vmatpush2.msra.mxu0 0.0
        %847 = vmatprep.subr.mxu0 0.0
        %848 = vmatpush2.msra.mxu0 0.0
        %849 = vmatprep.subr.mxu0 0.0
        %850 = vmatpush2.msra.mxu0 0.0
        %851 = vmatprep.subr.mxu0 0.0
        %852 = vmatpush2.msra.mxu0 0.0
        %853 = vmatprep.subr.mxu0 0.0
        %854 = vmatpush2.msra.mxu0 0.0
        %855 = vmatprep.subr.mxu0 0.0
        %856 = vmatpush2.msra.mxu0 0.0
        %857 = vmatprep.mubr.f32.mxu0 0.0
        %858 = vmatmul.mubr.f32.gmra.mxu0 %v791
        %v859 = vpop.f32.mrf.mxu0
        %v860 = vadd.f32 0.0, %v859
        %v861 = vpop.f32.mrf.mxu0
        %862 = vdwg.mxu0
        %863 = vrot.lane.b32.xlu0 %v340, 64
        %v864 = vpop.permute.xlu0 %863
        %v867 = vsel %vm345, %v701, 0
        %869 = vmatprep.subr.mxu0 0.0
        %870 = vmatpush1.msra.mxu0 0.0
        %871 = vmatprep.subr.mxu0 0.0
        %872 = vmatpush1.msra.mxu0 0.0
        %873 = vmatprep.subr.mxu0 0.0
        %874 = vmatpush1.msra.mxu0 0.0
        %875 = vmatprep.subr.mxu0 0.0
        %876 = vmatpush1.msra.mxu0 0.0
        %877 = vmatprep.subr.mxu0 0.0
        %878 = vmatpush1.msra.mxu0 0.0
        %879 = vmatprep.subr.mxu0 0.0
        %880 = vmatpush1.msra.mxu0 0.0
        %881 = vmatprep.subr.mxu0 0.0
        %882 = vmatpush1.msra.mxu0 0.0
        %883 = vmatprep.subr.mxu0 0.0
        %884 = vmatpush1.msra.mxu0 0.0
        %885 = vmatprep.subr.mxu0 0.0
        %886 = vmatpush1.msra.mxu0 0.0
        %887 = vmatprep.subr.mxu0 0.0
        %888 = vmatpush1.msra.mxu0 0.0
        %889 = vmatprep.subr.mxu0 0.0
        %890 = vmatpush1.msra.mxu0 0.0
        %891 = vmatprep.subr.mxu0 0.0
        %892 = vmatpush1.msra.mxu0 0.0
        %893 = vmatprep.subr.mxu0 0.0
        %894 = vmatpush1.msra.mxu0 0.0
        %895 = vmatprep.subr.mxu0 0.0
        %896 = vmatpush1.msra.mxu0 0.0
        %897 = vmatprep.subr.mxu0 0.0
        %898 = vmatpush1.msra.mxu0 0.0
        %899 = vmatprep.subr.mxu0 0.0
        %900 = vmatpush1.msra.mxu0 %v864
        %901 = vmatprep.subr.mxu0 0.0
        %902 = vmatpush2.msra.mxu0 0.0
        %903 = vmatprep.subr.mxu0 0.0
        %904 = vmatpush2.msra.mxu0 0.0
        %905 = vmatprep.subr.mxu0 0.0
        %906 = vmatpush2.msra.mxu0 0.0
        %907 = vmatprep.subr.mxu0 0.0
        %908 = vmatpush2.msra.mxu0 0.0
        %909 = vmatprep.subr.mxu0 0.0
        %910 = vmatpush2.msra.mxu0 0.0
        %911 = vmatprep.subr.mxu0 0.0
        %912 = vmatpush2.msra.mxu0 0.0
        %913 = vmatprep.subr.mxu0 0.0
        %914 = vmatpush2.msra.mxu0 0.0
        %915 = vmatprep.subr.mxu0 0.0
        %916 = vmatpush2.msra.mxu0 0.0
        %917 = vmatprep.subr.mxu0 0.0
        %918 = vmatpush2.msra.mxu0 0.0
        %919 = vmatprep.subr.mxu0 0.0
        %920 = vmatpush2.msra.mxu0 0.0
        %921 = vmatprep.subr.mxu0 0.0
        %922 = vmatpush2.msra.mxu0 0.0
        %923 = vmatprep.subr.mxu0 0.0
        %924 = vmatpush2.msra.mxu0 0.0
        %925 = vmatprep.subr.mxu0 0.0
        %926 = vmatpush2.msra.mxu0 0.0
        %927 = vmatprep.subr.mxu0 0.0
        %928 = vmatpush2.msra.mxu0 0.0
        %929 = vmatprep.subr.mxu0 0.0
        %930 = vmatpush2.msra.mxu0 0.0
        %931 = vmatprep.subr.mxu0 0.0
        %932 = vmatpush2.msra.mxu0 0.0
        %933 = vmatprep.mubr.f32.mxu0 0.0
        %934 = vmatmul.mubr.f32.gmra.mxu0 %v867
        %v935 = vpop.f32.mrf.mxu0
        %v936 = vadd.f32 0.0, %v935
        %v937 = vpop.f32.mrf.mxu0
        %938 = vdwg.mxu0
        %939 = vrot.lane.b32.xlu0 %v342, 64
        %v940 = vpop.permute.xlu0 %939
        %v943 = vsel %vm345, %v702, 0
        %945 = vmatprep.subr.mxu0 0.0
        %946 = vmatpush1.msra.mxu0 0.0
        %947 = vmatprep.subr.mxu0 0.0
        %948 = vmatpush1.msra.mxu0 0.0
        %949 = vmatprep.subr.mxu0 0.0
        %950 = vmatpush1.msra.mxu0 0.0
        %951 = vmatprep.subr.mxu0 0.0
        %952 = vmatpush1.msra.mxu0 0.0
        %953 = vmatprep.subr.mxu0 0.0
        %954 = vmatpush1.msra.mxu0 0.0
        %955 = vmatprep.subr.mxu0 0.0
        %956 = vmatpush1.msra.mxu0 0.0
        %957 = vmatprep.subr.mxu0 0.0
        %958 = vmatpush1.msra.mxu0 0.0
        %959 = vmatprep.subr.mxu0 0.0
        %960 = vmatpush1.msra.mxu0 0.0
        %961 = vmatprep.subr.mxu0 0.0
        %962 = vmatpush1.msra.mxu0 0.0
        %963 = vmatprep.subr.mxu0 0.0
        %964 = vmatpush1.msra.mxu0 0.0
        %965 = vmatprep.subr.mxu0 0.0
        %966 = vmatpush1.msra.mxu0 0.0
        %967 = vmatprep.subr.mxu0 0.0
        %968 = vmatpush1.msra.mxu0 0.0
        %969 = vmatprep.subr.mxu0 0.0
        %970 = vmatpush1.msra.mxu0 0.0
        %971 = vmatprep.subr.mxu0 0.0
        %972 = vmatpush1.msra.mxu0 0.0
        %973 = vmatprep.subr.mxu0 0.0
        %974 = vmatpush1.msra.mxu0 0.0
        %975 = vmatprep.subr.mxu0 0.0
        %976 = vmatpush1.msra.mxu0 %v940
        %977 = vmatprep.subr.mxu0 0.0
        %978 = vmatpush2.msra.mxu0 0.0
        %979 = vmatprep.subr.mxu0 0.0
        %980 = vmatpush2.msra.mxu0 0.0
        %981 = vmatprep.subr.mxu0 0.0
        %982 = vmatpush2.msra.mxu0 0.0
        %983 = vmatprep.subr.mxu0 0.0
        %984 = vmatpush2.msra.mxu0 0.0
        %985 = vmatprep.subr.mxu0 0.0
        %986 = vmatpush2.msra.mxu0 0.0
        %987 = vmatprep.subr.mxu0 0.0
        %988 = vmatpush2.msra.mxu0 0.0
        %989 = vmatprep.subr.mxu0 0.0
        %990 = vmatpush2.msra.mxu0 0.0
        %991 = vmatprep.subr.mxu0 0.0
        %992 = vmatpush2.msra.mxu0 0.0
        %993 = vmatprep.subr.mxu0 0.0
        %994 = vmatpush2.msra.mxu0 0.0
        %995 = vmatprep.subr.mxu0 0.0
        %996 = vmatpush2.msra.mxu0 0.0
        %997 = vmatprep.subr.mxu0 0.0
        %998 = vmatpush2.msra.mxu0 0.0
        %999 = vmatprep.subr.mxu0 0.0
        %1000 = vmatpush2.msra.mxu0 0.0
        %1001 = vmatprep.subr.mxu0 0.0
        %1002 = vmatpush2.msra.mxu0 0.0
        %1003 = vmatprep.subr.mxu0 0.0
        %1004 = vmatpush2.msra.mxu0 0.0
        %1005 = vmatprep.subr.mxu0 0.0
        %1006 = vmatpush2.msra.mxu0 0.0
        %1007 = vmatprep.subr.mxu0 0.0
        %1008 = vmatpush2.msra.mxu0 0.0
        %1009 = vmatprep.mubr.f32.mxu0 0.0
        %1010 = vmatmul.mubr.f32.gmra.mxu0 %v943
        %v1011 = vpop.f32.mrf.mxu0
        %v1012 = vadd.f32 0.0, %v1011
        %v1013 = vpop.f32.mrf.mxu0
        %1014 = vdwg.mxu0
        %1016 = vrot.lane.b32.xlu0 %v860, 8
        %v1017 = vpop.permute.xlu0 %1016
        %1020 = vrot.lane.b32.xlu0 %v936, 16
        %v1021 = vpop.permute.xlu0 %1020
        %1024 = vrot.lane.b32.xlu0 %v1012, 24
        %v1025 = vpop.permute.xlu0 %1024
        %v1027 = vsel %vm345, %v784, %v1017
        %vm1028 = vcmask 130048
        %v1029 = vsel %vm1028, %v1027, %v1021
        %vm1030 = vcmask 195584
        %v1031 = vsel %vm1030, %v1029, %v1025
        %v1032 = vlaneseq
        %v1033 = vshrl.u32 %v1032, 7
        %v1034 = vsub.s32 1, %v1033
        %v1035 = vrot.slane %v258, %v1034
        %v1037 = vsel %vm208, %v1031, 0
        %1039 = vmatprep.subr.mxu0 0.0
        %1040 = vmatpush1.msra.mxu0 0.0
        %1041 = vmatprep.subr.mxu0 0.0
        %1042 = vmatpush1.msra.mxu0 0.0
        %1043 = vmatprep.subr.mxu0 0.0
        %1044 = vmatpush1.msra.mxu0 0.0
        %1045 = vmatprep.subr.mxu0 0.0
        %1046 = vmatpush1.msra.mxu0 0.0
        %1047 = vmatprep.subr.mxu0 0.0
        %1048 = vmatpush1.msra.mxu0 0.0
        %1049 = vmatprep.subr.mxu0 0.0
        %1050 = vmatpush1.msra.mxu0 0.0
        %1051 = vmatprep.subr.mxu0 0.0
        %1052 = vmatpush1.msra.mxu0 0.0
        %1053 = vmatprep.subr.mxu0 0.0
        %1054 = vmatpush1.msra.mxu0 0.0
        %1055 = vmatprep.subr.mxu0 0.0
        %1056 = vmatpush1.msra.mxu0 0.0
        %1057 = vmatprep.subr.mxu0 0.0
        %1058 = vmatpush1.msra.mxu0 0.0
        %1059 = vmatprep.subr.mxu0 0.0
        %1060 = vmatpush1.msra.mxu0 0.0
        %1061 = vmatprep.subr.mxu0 0.0
        %1062 = vmatpush1.msra.mxu0 0.0
        %1063 = vmatprep.subr.mxu0 0.0
        %1064 = vmatpush1.msra.mxu0 %v245
        %1065 = vmatprep.subr.mxu0 0.0
        %1066 = vmatpush1.msra.mxu0 %v244
        %1067 = vmatprep.subr.mxu0 0.0
        %1068 = vmatpush1.msra.mxu0 %v243
        %1069 = vmatprep.subr.mxu0 0.0
        %1070 = vmatpush1.msra.mxu0 %v242
        %1071 = vmatprep.subr.mxu0 0.0
        %1072 = vmatpush2.msra.mxu0 0.0
        %1073 = vmatprep.subr.mxu0 0.0
        %1074 = vmatpush2.msra.mxu0 0.0
        %1075 = vmatprep.subr.mxu0 0.0
        %1076 = vmatpush2.msra.mxu0 0.0
        %1077 = vmatprep.subr.mxu0 0.0
        %1078 = vmatpush2.msra.mxu0 0.0
        %1079 = vmatprep.subr.mxu0 0.0
        %1080 = vmatpush2.msra.mxu0 0.0
        %1081 = vmatprep.subr.mxu0 0.0
        %1082 = vmatpush2.msra.mxu0 0.0
        %1083 = vmatprep.subr.mxu0 0.0
        %1084 = vmatpush2.msra.mxu0 0.0
        %1085 = vmatprep.subr.mxu0 0.0
        %1086 = vmatpush2.msra.mxu0 0.0
        %1087 = vmatprep.subr.mxu0 0.0
        %1088 = vmatpush2.msra.mxu0 0.0
        %1089 = vmatprep.subr.mxu0 0.0
        %1090 = vmatpush2.msra.mxu0 0.0
        %1091 = vmatprep.subr.mxu0 0.0
        %1092 = vmatpush2.msra.mxu0 0.0
        %1093 = vmatprep.subr.mxu0 0.0
        %1094 = vmatpush2.msra.mxu0 0.0
        %1095 = vmatprep.subr.mxu0 0.0
        %1096 = vmatpush2.msra.mxu0 0.0
        %1097 = vmatprep.subr.mxu0 0.0
        %1098 = vmatpush2.msra.mxu0 0.0
        %1099 = vmatprep.subr.mxu0 0.0
        %1100 = vmatpush2.msra.mxu0 0.0
        %1101 = vmatprep.subr.mxu0 0.0
        %1102 = vmatpush2.msra.mxu0 0.0
        %1103 = vmatprep.mubr.f32.mxu0 0.0
        %1104 = vmatmul.mubr.f32.gmra.mxu0 %v1037
        %v1105 = vpop.f32.mrf.mxu0
        %v1106 = vadd.f32 %v1035, %v1105
        %v1107 = vpop.f32.mrf.mxu0
        %1108 = vdwg.mxu0
        %v1109 = vadd.f32 %v1106, %v237
        %v1110 = vsel %vm208, %v1109, 0.0
        %1111 = vadd.xlane.f32.xlu0 %v1110
        %v1112 = vpop.xlane.xlu0 %1111
        %v1113 = vmul.f32 %v1112, %v212
        %v1114 = vsub.f32 %v1109, %v1113
        %v1115 = vmul.f32 %v1114, %v1114
        %v1116 = vsel %vm208, %v1115, 0.0
        %1117 = vadd.xlane.f32.xlu0 %v1116
        %v1118 = vpop.xlane.xlu0 %1117
        %v1119 = vmul.f32 %v1118, %v212
        %v1120 = vadd.f32 %v1119, 1e-12
        %v1121 = vrsqrt.pop %v1120
        %v1122 = vmul.f32 %v1114, %v1121
        %v1123 = vlaneseq
        %v1124 = vshrl.u32 %v1123, 7
        %v1125 = vsub.s32 2, %v1124
        %v1126 = vrot.slane %v258, %v1125
        %v1127 = vmul.f32 %v1122, %v1126
        %v1128 = vlaneseq
        %v1129 = vshrl.u32 %v1128, 7
        %v1130 = vsub.s32 3, %v1129
        %v1131 = vrot.slane %v258, %v1130
        %v1132 = vadd.f32 %v1127, %v1131
        %v1133 = vlaneseq
        %v1134 = vshrl.u32 %v1133, 7
        %v1135 = vsub.s32 4, %v1134
        %v1136 = vrot.slane %v258, %v1135
        %v1138 = vsel %vm208, %v1132, 0
        %1140 = vmatprep.subr.mxu0 0.0
        %1141 = vmatpush1.msra.mxu0 0.0
        %1142 = vmatprep.subr.mxu0 0.0
        %1143 = vmatpush1.msra.mxu0 0.0
        %1144 = vmatprep.subr.mxu0 0.0
        %1145 = vmatpush1.msra.mxu0 0.0
        %1146 = vmatprep.subr.mxu0 0.0
        %1147 = vmatpush1.msra.mxu0 0.0
        %1148 = vmatprep.subr.mxu0 0.0
        %1149 = vmatpush1.msra.mxu0 0.0
        %1150 = vmatprep.subr.mxu0 0.0
        %1151 = vmatpush1.msra.mxu0 0.0
        %1152 = vmatprep.subr.mxu0 0.0
        %1153 = vmatpush1.msra.mxu0 0.0
        %1154 = vmatprep.subr.mxu0 0.0
        %1155 = vmatpush1.msra.mxu0 0.0
        %1156 = vmatprep.subr.mxu0 0.0
        %1157 = vmatpush1.msra.mxu0 0.0
        %1158 = vmatprep.subr.mxu0 0.0
        %1159 = vmatpush1.msra.mxu0 0.0
        %1160 = vmatprep.subr.mxu0 0.0
        %1161 = vmatpush1.msra.mxu0 0.0
        %1162 = vmatprep.subr.mxu0 0.0
        %1163 = vmatpush1.msra.mxu0 0.0
        %1164 = vmatprep.subr.mxu0 0.0
        %1165 = vmatpush1.msra.mxu0 %v249
        %1166 = vmatprep.subr.mxu0 0.0
        %1167 = vmatpush1.msra.mxu0 %v248
        %1168 = vmatprep.subr.mxu0 0.0
        %1169 = vmatpush1.msra.mxu0 %v247
        %1170 = vmatprep.subr.mxu0 0.0
        %1171 = vmatpush1.msra.mxu0 %v246
        %1172 = vmatprep.subr.mxu0 0.0
        %1173 = vmatpush2.msra.mxu0 0.0
        %1174 = vmatprep.subr.mxu0 0.0
        %1175 = vmatpush2.msra.mxu0 0.0
        %1176 = vmatprep.subr.mxu0 0.0
        %1177 = vmatpush2.msra.mxu0 0.0
        %1178 = vmatprep.subr.mxu0 0.0
        %1179 = vmatpush2.msra.mxu0 0.0
        %1180 = vmatprep.subr.mxu0 0.0
        %1181 = vmatpush2.msra.mxu0 0.0
        %1182 = vmatprep.subr.mxu0 0.0
        %1183 = vmatpush2.msra.mxu0 0.0
        %1184 = vmatprep.subr.mxu0 0.0
        %1185 = vmatpush2.msra.mxu0 0.0
        %1186 = vmatprep.subr.mxu0 0.0
        %1187 = vmatpush2.msra.mxu0 0.0
        %1188 = vmatprep.subr.mxu0 0.0
        %1189 = vmatpush2.msra.mxu0 0.0
        %1190 = vmatprep.subr.mxu0 0.0
        %1191 = vmatpush2.msra.mxu0 0.0
        %1192 = vmatprep.subr.mxu0 0.0
        %1193 = vmatpush2.msra.mxu0 0.0
        %1194 = vmatprep.subr.mxu0 0.0
        %1195 = vmatpush2.msra.mxu0 0.0
        %1196 = vmatprep.subr.mxu0 0.0
        %1197 = vmatpush2.msra.mxu0 0.0
        %1198 = vmatprep.subr.mxu0 0.0
        %1199 = vmatpush2.msra.mxu0 0.0
        %1200 = vmatprep.subr.mxu0 0.0
        %1201 = vmatpush2.msra.mxu0 0.0
        %1202 = vmatprep.subr.mxu0 0.0
        %1203 = vmatpush2.msra.mxu0 0.0
        %1204 = vmatprep.mubr.f32.mxu0 0.0
        %1205 = vmatmul.mubr.f32.gmra.mxu0 %v1138
        %v1206 = vpop.f32.mrf.mxu0
        %v1207 = vadd.f32 %v1136, %v1206
        %v1208 = vpop.f32.mrf.mxu0
        %1209 = vdwg.mxu0
        %v1210 = vmul.f32 %v1207, 0.5
        %v1211 = vmul.f32 %v1207, 0.70710677
        %v1212 = verf.f32.pop %v1211
        %v1213 = vadd.f32 %v1212, 1.0
        %v1214 = vmul.f32 %v1210, %v1213
        %v1215 = vlaneseq
        %v1216 = vshrl.u32 %v1215, 7
        %v1217 = vsub.s32 5, %v1216
        %v1218 = vrot.slane %v258, %v1217
        %vm1219 = vcmask 523264
        %v1221 = vsel %vm1219, %v1214, 0
        %1223 = vmatprep.subr.mxu0 0.0
        %1224 = vmatpush1.msra.mxu0 0.0
        %1225 = vmatprep.subr.mxu0 0.0
        %1226 = vmatpush1.msra.mxu0 0.0
        %1227 = vmatprep.subr.mxu0 0.0
        %1228 = vmatpush1.msra.mxu0 0.0
        %1229 = vmatprep.subr.mxu0 0.0
        %1230 = vmatpush1.msra.mxu0 0.0
        %1231 = vmatprep.subr.mxu0 0.0
        %1232 = vmatpush1.msra.mxu0 0.0
        %1233 = vmatprep.subr.mxu0 0.0
        %1234 = vmatpush1.msra.mxu0 0.0
        %1235 = vmatprep.subr.mxu0 0.0
        %1236 = vmatpush1.msra.mxu0 0.0
        %1237 = vmatprep.subr.mxu0 0.0
        %1238 = vmatpush1.msra.mxu0 0.0
        %1239 = vmatprep.subr.mxu0 0.0
        %1240 = vmatpush1.msra.mxu0 %v257
        %1241 = vmatprep.subr.mxu0 0.0
        %1242 = vmatpush1.msra.mxu0 %v256
        %1243 = vmatprep.subr.mxu0 0.0
        %1244 = vmatpush1.msra.mxu0 %v255
        %1245 = vmatprep.subr.mxu0 0.0
        %1246 = vmatpush1.msra.mxu0 %v254
        %1247 = vmatprep.subr.mxu0 0.0
        %1248 = vmatpush1.msra.mxu0 %v253
        %1249 = vmatprep.subr.mxu0 0.0
        %1250 = vmatpush1.msra.mxu0 %v252
        %1251 = vmatprep.subr.mxu0 0.0
        %1252 = vmatpush1.msra.mxu0 %v251
        %1253 = vmatprep.subr.mxu0 0.0
        %1254 = vmatpush1.msra.mxu0 %v250
        %1255 = vmatprep.subr.mxu0 0.0
        %1256 = vmatpush2.msra.mxu0 0.0
        %1257 = vmatprep.subr.mxu0 0.0
        %1258 = vmatpush2.msra.mxu0 0.0
        %1259 = vmatprep.subr.mxu0 0.0
        %1260 = vmatpush2.msra.mxu0 0.0
        %1261 = vmatprep.subr.mxu0 0.0
        %1262 = vmatpush2.msra.mxu0 0.0
        %1263 = vmatprep.subr.mxu0 0.0
        %1264 = vmatpush2.msra.mxu0 0.0
        %1265 = vmatprep.subr.mxu0 0.0
        %1266 = vmatpush2.msra.mxu0 0.0
        %1267 = vmatprep.subr.mxu0 0.0
        %1268 = vmatpush2.msra.mxu0 0.0
        %1269 = vmatprep.subr.mxu0 0.0
        %1270 = vmatpush2.msra.mxu0 0.0
        %1271 = vmatprep.subr.mxu0 0.0
        %1272 = vmatpush2.msra.mxu0 0.0
        %1273 = vmatprep.subr.mxu0 0.0
        %1274 = vmatpush2.msra.mxu0 0.0
        %1275 = vmatprep.subr.mxu0 0.0
        %1276 = vmatpush2.msra.mxu0 0.0
        %1277 = vmatprep.subr.mxu0 0.0
        %1278 = vmatpush2.msra.mxu0 0.0
        %1279 = vmatprep.subr.mxu0 0.0
        %1280 = vmatpush2.msra.mxu0 0.0
        %1281 = vmatprep.subr.mxu0 0.0
        %1282 = vmatpush2.msra.mxu0 0.0
        %1283 = vmatprep.subr.mxu0 0.0
        %1284 = vmatpush2.msra.mxu0 0.0
        %1285 = vmatprep.subr.mxu0 0.0
        %1286 = vmatpush2.msra.mxu0 0.0
        %1287 = vmatprep.mubr.f32.mxu0 0.0
        %1288 = vmatmul.mubr.f32.gmra.mxu0 %v1221
        %v1289 = vpop.f32.mrf.mxu0
        %v1290 = vadd.f32 %v1218, %v1289
        %v1291 = vpop.f32.mrf.mxu0
        %1292 = vdwg.mxu0
        %v1293 = vadd.f32 %v1290, %v1132
        %v1294 = vsel %vm208, %v1293, 0.0
        %1295 = vadd.xlane.f32.xlu0 %v1294
        %v1296 = vpop.xlane.xlu0 %1295
        %v1297 = vmul.f32 %v1296, %v212
        %v1298 = vsub.f32 %v1293, %v1297
        %v1299 = vmul.f32 %v1298, %v1298
        %v1300 = vsel %vm208, %v1299, 0.0
        %1301 = vadd.xlane.f32.xlu0 %v1300
        %v1302 = vpop.xlane.xlu0 %1301
        %v1303 = vmul.f32 %v1302, %v212
        %v1304 = vadd.f32 %v1303, 1e-12
        %v1305 = vrsqrt.pop %v1304
        %v1306 = vmul.f32 %v1298, %v1305
        %v1307 = vlaneseq
        %v1308 = vshrl.u32 %v1307, 7
        %v1309 = vsub.s32 6, %v1308
        %v1310 = vrot.slane %v258, %v1309
        %v1311 = vmul.f32 %v1306, %v1310
        %v1312 = vlaneseq
        %v1313 = vshrl.u32 %v1312, 7
        %v1314 = vsub.s32 7, %v1313
        %v1315 = vrot.slane %v258, %v1314
        %v1316 = vadd.f32 %v1311, %v1315
        %v1317 = vsel %vm208, %v1316, 0.0
        %1318 = vst [vmem:[%s191] sm:$0xff] %v1317
        %v1319 = vld [vmem:[%s1 + $0xa8] sm:$0xff]
        %v1320 = vld [vmem:[%s1 + $0xb0] sm:$0xff]
        %v1321 = vld [vmem:[%s1 + $0xb8] sm:$0xff]
        %v1322 = vld [vmem:[%s1 + $0xc0] sm:$0xff]
        %v1323 = vld [vmem:[%s1 + $0xc8] sm:$0xff]
        %v1324 = vld [vmem:[%s1 + $0xd0] sm:$0xff]
        %v1325 = vld [vmem:[%s1 + $0xd8] sm:$0xff]
        %v1326 = vld [vmem:[%s1 + $0xe0] sm:$0xff]
        %v1327 = vld [vmem:[%s1 + $0xe8] sm:$0xff]
        %v1328 = vld [vmem:[%s1 + $0xf0] sm:$0xff]
        %v1329 = vld [vmem:[%s1 + $0xf8] sm:$0xff]
        %v1330 = vld [vmem:[%s1 + $0x100] sm:$0xff]
        %v1331 = vld [vmem:[%s1 + $0x108] sm:$0xff]
        %v1332 = vld [vmem:[%s1 + $0x110] sm:$0xff]
        %v1333 = vld [vmem:[%s1 + $0x118] sm:$0xff]
        %v1334 = vld [vmem:[%s1 + $0x120] sm:$0xff]
        %v1335 = vld [vmem:[%s1 + $0x128] sm:$0xff]
        %v1336 = vld [vmem:[%s1 + $0x130] sm:$0xff]
        %v1337 = vld [vmem:[%s1 + $0x138] sm:$0xff]
        %v1338 = vld [vmem:[%s1 + $0x140] sm:$0xff]
        %v1339 = vld [vmem:[%s1 + $0x148] sm:$0xff]
        %v1340 = vlaneseq
        %v1341 = vshrl.u32 %v1340, 7
        %v1342 = vsub.s32 0, %v1341
        %v1343 = vrot.slane %v1339, %v1342
        %v1345 = vsel %vm208, %v1316, 0
        %1347 = vmatprep.subr.mxu0 0.0
        %1348 = vmatpush1.msra.mxu0 0.0
        %1349 = vmatprep.subr.mxu0 0.0
        %1350 = vmatpush1.msra.mxu0 0.0
        %1351 = vmatprep.subr.mxu0 0.0
        %1352 = vmatpush1.msra.mxu0 0.0
        %1353 = vmatprep.subr.mxu0 0.0
        %1354 = vmatpush1.msra.mxu0 0.0
        %1355 = vmatprep.subr.mxu0 0.0
        %1356 = vmatpush1.msra.mxu0 0.0
        %1357 = vmatprep.subr.mxu0 0.0
        %1358 = vmatpush1.msra.mxu0 0.0
        %1359 = vmatprep.subr.mxu0 0.0
        %1360 = vmatpush1.msra.mxu0 0.0
        %1361 = vmatprep.subr.mxu0 0.0
        %1362 = vmatpush1.msra.mxu0 0.0
        %1363 = vmatprep.subr.mxu0 0.0
        %1364 = vmatpush1.msra.mxu0 0.0
        %1365 = vmatprep.subr.mxu0 0.0
        %1366 = vmatpush1.msra.mxu0 0.0
        %1367 = vmatprep.subr.mxu0 0.0
        %1368 = vmatpush1.msra.mxu0 0.0
        %1369 = vmatprep.subr.mxu0 0.0
        %1370 = vmatpush1.msra.mxu0 0.0
        %1371 = vmatprep.subr.mxu0 0.0
        %1372 = vmatpush1.msra.mxu0 %v1322
        %1373 = vmatprep.subr.mxu0 0.0
        %1374 = vmatpush1.msra.mxu0 %v1321
        %1375 = vmatprep.subr.mxu0 0.0
        %1376 = vmatpush1.msra.mxu0 %v1320
        %1377 = vmatprep.subr.mxu0 0.0
        %1378 = vmatpush1.msra.mxu0 %v1319
        %1379 = vmatprep.subr.mxu0 0.0
        %1380 = vmatpush2.msra.mxu0 0.0
        %1381 = vmatprep.subr.mxu0 0.0
        %1382 = vmatpush2.msra.mxu0 0.0
        %1383 = vmatprep.subr.mxu0 0.0
        %1384 = vmatpush2.msra.mxu0 0.0
        %1385 = vmatprep.subr.mxu0 0.0
        %1386 = vmatpush2.msra.mxu0 0.0
        %1387 = vmatprep.subr.mxu0 0.0
        %1388 = vmatpush2.msra.mxu0 0.0
        %1389 = vmatprep.subr.mxu0 0.0
        %1390 = vmatpush2.msra.mxu0 0.0
        %1391 = vmatprep.subr.mxu0 0.0
        %1392 = vmatpush2.msra.mxu0 0.0
        %1393 = vmatprep.subr.mxu0 0.0
        %1394 = vmatpush2.msra.mxu0 0.0
        %1395 = vmatprep.subr.mxu0 0.0
        %1396 = vmatpush2.msra.mxu0 0.0
        %1397 = vmatprep.subr.mxu0 0.0
        %1398 = vmatpush2.msra.mxu0 0.0
        %1399 = vmatprep.subr.mxu0 0.0
        %1400 = vmatpush2.msra.mxu0 0.0
        %1401 = vmatprep.subr.mxu0 0.0
        %1402 = vmatpush2.msra.mxu0 0.0
        %1403 = vmatprep.subr.mxu0 0.0
        %1404 = vmatpush2.msra.mxu0 0.0
        %1405 = vmatprep.subr.mxu0 0.0
        %1406 = vmatpush2.msra.mxu0 0.0
        %1407 = vmatprep.subr.mxu0 0.0
        %1408 = vmatpush2.msra.mxu0 0.0
        %1409 = vmatprep.subr.mxu0 0.0
        %1410 = vmatpush2.msra.mxu0 0.0
        %1411 = vmatprep.mubr.f32.mxu0 0.0
        %1412 = vmatmul.mubr.f32.gmra.mxu0 %v1345
        %v1413 = vpop.f32.mrf.mxu0
        %v1414 = vadd.f32 %v1343, %v1413
        %v1415 = vpop.f32.mrf.mxu0
        %1416 = vdwg.mxu0
        %1418 = vrot.lane.b32.xlu0 %v1414, 120
        %v1419 = vpop.permute.xlu0 %1418
        %1420 = vrot.lane.b32.xlu0 %v1414, 112
        %v1421 = vpop.permute.xlu0 %1420
        %1422 = vrot.lane.b32.xlu0 %v1414, 104
        %v1423 = vpop.permute.xlu0 %1422
        %1424 = vrot.lane.b32.xlu0 %v1414, 96
        %v1425 = vpop.permute.xlu0 %1424
        %v1426 = vsel %vm345, %v1414, 0
        %v1428 = vsel %vm345, %v1425, 0
        %1430 = vmatprep.subr.mxu0 0.0
        %1431 = vmatpush1.xpose.msra.mxu0 0.0
        %1432 = vmatprep.subr.mxu0 0.0
        %1433 = vmatpush1.xpose.msra.mxu0 0.0
        %1434 = vmatprep.subr.mxu0 0.0
        %1435 = vmatpush1.xpose.msra.mxu0 0.0
        %1436 = vmatprep.subr.mxu0 0.0
        %1437 = vmatpush1.xpose.msra.mxu0 0.0
        %1438 = vmatprep.subr.mxu0 0.0
        %1439 = vmatpush1.xpose.msra.mxu0 0.0
        %1440 = vmatprep.subr.mxu0 0.0
        %1441 = vmatpush1.xpose.msra.mxu0 0.0
        %1442 = vmatprep.subr.mxu0 0.0
        %1443 = vmatpush1.xpose.msra.mxu0 0.0
        %1444 = vmatprep.subr.mxu0 0.0
        %1445 = vmatpush1.xpose.msra.mxu0 0.0
        %1446 = vmatprep.subr.mxu0 0.0
        %1447 = vmatpush1.xpose.msra.mxu0 0.0
        %1448 = vmatprep.subr.mxu0 0.0
        %1449 = vmatpush1.xpose.msra.mxu0 0.0
        %1450 = vmatprep.subr.mxu0 0.0
        %1451 = vmatpush1.xpose.msra.mxu0 0.0
        %1452 = vmatprep.subr.mxu0 0.0
        %1453 = vmatpush1.xpose.msra.mxu0 0.0
        %1454 = vmatprep.subr.mxu0 0.0
        %1455 = vmatpush1.xpose.msra.mxu0 0.0
        %1456 = vmatprep.subr.mxu0 0.0
        %1457 = vmatpush1.xpose.msra.mxu0 0.0
        %1458 = vmatprep.subr.mxu0 0.0
        %1459 = vmatpush1.xpose.msra.mxu0 0.0
        %1460 = vmatprep.subr.mxu0 0.0
        %1461 = vmatpush1.xpose.msra.mxu0 %v1428
        %1462 = vmatprep.subr.mxu0 0.0
        %1463 = vmatpush2.xpose.msra.mxu0 0.0
        %1464 = vmatprep.subr.mxu0 0.0
        %1465 = vmatpush2.xpose.msra.mxu0 0.0
        %1466 = vmatprep.subr.mxu0 0.0
        %1467 = vmatpush2.xpose.msra.mxu0 0.0
        %1468 = vmatprep.subr.mxu0 0.0
        %1469 = vmatpush2.xpose.msra.mxu0 0.0
        %1470 = vmatprep.subr.mxu0 0.0
        %1471 = vmatpush2.xpose.msra.mxu0 0.0
        %1472 = vmatprep.subr.mxu0 0.0
        %1473 = vmatpush2.xpose.msra.mxu0 0.0
        %1474 = vmatprep.subr.mxu0 0.0
        %1475 = vmatpush2.xpose.msra.mxu0 0.0
        %1476 = vmatprep.subr.mxu0 0.0
        %1477 = vmatpush2.xpose.msra.mxu0 0.0
        %1478 = vmatprep.subr.mxu0 0.0
        %1479 = vmatpush2.xpose.msra.mxu0 0.0
        %1480 = vmatprep.subr.mxu0 0.0
        %1481 = vmatpush2.xpose.msra.mxu0 0.0
        %1482 = vmatprep.subr.mxu0 0.0
        %1483 = vmatpush2.xpose.msra.mxu0 0.0
        %1484 = vmatprep.subr.mxu0 0.0
        %1485 = vmatpush2.xpose.msra.mxu0 0.0
        %1486 = vmatprep.subr.mxu0 0.0
        %1487 = vmatpush2.xpose.msra.mxu0 0.0
        %1488 = vmatprep.subr.mxu0 0.0
        %1489 = vmatpush2.xpose.msra.mxu0 0.0
        %1490 = vmatprep.subr.mxu0 0.0
        %1491 = vmatpush2.xpose.msra.mxu0 0.0
        %1492 = vmatprep.subr.mxu0 0.0
        %1493 = vmatpush2.xpose.msra.mxu0 0.0
        %1494 = vmatprep.mubr.f32.mxu0 0.0
        %1495 = vmatmul.mubr.f32.gmra.mxu0 %v1426
        %v1496 = vpop.f32.mrf.mxu0
        %v1497 = vadd.f32 0.0, %v1496
        %v1498 = vpop.f32.mrf.mxu0
        %1499 = vdwg.mxu0
        %1500 = vrot.lane.b32.xlu0 %v1419, 96
        %v1501 = vpop.permute.xlu0 %1500
        %v1502 = vsel %vm345, %v1419, 0
        %v1504 = vsel %vm345, %v1501, 0
        %1506 = vmatprep.subr.mxu0 0.0
        %1507 = vmatpush1.xpose.msra.mxu0 0.0
        %1508 = vmatprep.subr.mxu0 0.0
        %1509 = vmatpush1.xpose.msra.mxu0 0.0
        %1510 = vmatprep.subr.mxu0 0.0
        %1511 = vmatpush1.xpose.msra.mxu0 0.0
        %1512 = vmatprep.subr.mxu0 0.0
        %1513 = vmatpush1.xpose.msra.mxu0 0.0
        %1514 = vmatprep.subr.mxu0 0.0
        %1515 = vmatpush1.xpose.msra.mxu0 0.0
        %1516 = vmatprep.subr.mxu0 0.0
        %1517 = vmatpush1.xpose.msra.mxu0 0.0
        %1518 = vmatprep.subr.mxu0 0.0
        %1519 = vmatpush1.xpose.msra.mxu0 0.0
        %1520 = vmatprep.subr.mxu0 0.0
        %1521 = vmatpush1.xpose.msra.mxu0 0.0
        %1522 = vmatprep.subr.mxu0 0.0
        %1523 = vmatpush1.xpose.msra.mxu0 0.0
        %1524 = vmatprep.subr.mxu0 0.0
        %1525 = vmatpush1.xpose.msra.mxu0 0.0
        %1526 = vmatprep.subr.mxu0 0.0
        %1527 = vmatpush1.xpose.msra.mxu0 0.0
        %1528 = vmatprep.subr.mxu0 0.0
        %1529 = vmatpush1.xpose.msra.mxu0 0.0
        %1530 = vmatprep.subr.mxu0 0.0
        %1531 = vmatpush1.xpose.msra.mxu0 0.0
        %1532 = vmatprep.subr.mxu0 0.0
        %1533 = vmatpush1.xpose.msra.mxu0 0.0
        %1534 = vmatprep.subr.mxu0 0.0
        %1535 = vmatpush1.xpose.msra.mxu0 0.0
        %1536 = vmatprep.subr.mxu0 0.0
        %1537 = vmatpush1.xpose.msra.mxu0 %v1504
        %1538 = vmatprep.subr.mxu0 0.0
        %1539 = vmatpush2.xpose.msra.mxu0 0.0
        %1540 = vmatprep.subr.mxu0 0.0
        %1541 = vmatpush2.xpose.msra.mxu0 0.0
        %1542 = vmatprep.subr.mxu0 0.0
        %1543 = vmatpush2.xpose.msra.mxu0 0.0
        %1544 = vmatprep.subr.mxu0 0.0
        %1545 = vmatpush2.xpose.msra.mxu0 0.0
        %1546 = vmatprep.subr.mxu0 0.0
        %1547 = vmatpush2.xpose.msra.mxu0 0.0
        %1548 = vmatprep.subr.mxu0 0.0
        %1549 = vmatpush2.xpose.msra.mxu0 0.0
        %1550 = vmatprep.subr.mxu0 0.0
        %1551 = vmatpush2.xpose.msra.mxu0 0.0
        %1552 = vmatprep.subr.mxu0 0.0
        %1553 = vmatpush2.xpose.msra.mxu0 0.0
        %1554 = vmatprep.subr.mxu0 0.0
        %1555 = vmatpush2.xpose.msra.mxu0 0.0
        %1556 = vmatprep.subr.mxu0 0.0
        %1557 = vmatpush2.xpose.msra.mxu0 0.0
        %1558 = vmatprep.subr.mxu0 0.0
        %1559 = vmatpush2.xpose.msra.mxu0 0.0
        %1560 = vmatprep.subr.mxu0 0.0
        %1561 = vmatpush2.xpose.msra.mxu0 0.0
        %1562 = vmatprep.subr.mxu0 0.0
        %1563 = vmatpush2.xpose.msra.mxu0 0.0
        %1564 = vmatprep.subr.mxu0 0.0
        %1565 = vmatpush2.xpose.msra.mxu0 0.0
        %1566 = vmatprep.subr.mxu0 0.0
        %1567 = vmatpush2.xpose.msra.mxu0 0.0
        %1568 = vmatprep.subr.mxu0 0.0
        %1569 = vmatpush2.xpose.msra.mxu0 0.0
        %1570 = vmatprep.mubr.f32.mxu0 0.0
        %1571 = vmatmul.mubr.f32.gmra.mxu0 %v1502
        %v1572 = vpop.f32.mrf.mxu0
        %v1573 = vadd.f32 0.0, %v1572
        %v1574 = vpop.f32.mrf.mxu0
        %1575 = vdwg.mxu0
        %1576 = vrot.lane.b32.xlu0 %v1421, 96
        %v1577 = vpop.permute.xlu0 %1576
        %v1578 = vsel %vm345, %v1421, 0
        %v1580 = vsel %vm345, %v1577, 0
        %1582 = vmatprep.subr.mxu0 0.0
        %1583 = vmatpush1.xpose.msra.mxu0 0.0
        %1584 = vmatprep.subr.mxu0 0.0
        %1585 = vmatpush1.xpose.msra.mxu0 0.0
        %1586 = vmatprep.subr.mxu0 0.0
        %1587 = vmatpush1.xpose.msra.mxu0 0.0
        %1588 = vmatprep.subr.mxu0 0.0
        %1589 = vmatpush1.xpose.msra.mxu0 0.0
        %1590 = vmatprep.subr.mxu0 0.0
        %1591 = vmatpush1.xpose.msra.mxu0 0.0
        %1592 = vmatprep.subr.mxu0 0.0
        %1593 = vmatpush1.xpose.msra.mxu0 0.0
        %1594 = vmatprep.subr.mxu0 0.0
        %1595 = vmatpush1.xpose.msra.mxu0 0.0
        %1596 = vmatprep.subr.mxu0 0.0
        %1597 = vmatpush1.xpose.msra.mxu0 0.0
        %1598 = vmatprep.subr.mxu0 0.0
        %1599 = vmatpush1.xpose.msra.mxu0 0.0
        %1600 = vmatprep.subr.mxu0 0.0
        %1601 = vmatpush1.xpose.msra.mxu0 0.0
        %1602 = vmatprep.subr.mxu0 0.0
        %1603 = vmatpush1.xpose.msra.mxu0 0.0
        %1604 = vmatprep.subr.mxu0 0.0
        %1605 = vmatpush1.xpose.msra.mxu0 0.0
        %1606 = vmatprep.subr.mxu0 0.0
        %1607 = vmatpush1.xpose.msra.mxu0 0.0
        %1608 = vmatprep.subr.mxu0 0.0
        %1609 = vmatpush1.xpose.msra.mxu0 0.0
        %1610 = vmatprep.subr.mxu0 0.0
        %1611 = vmatpush1.xpose.msra.mxu0 0.0
        %1612 = vmatprep.subr.mxu0 0.0
        %1613 = vmatpush1.xpose.msra.mxu0 %v1580
        %1614 = vmatprep.subr.mxu0 0.0
        %1615 = vmatpush2.xpose.msra.mxu0 0.0
        %1616 = vmatprep.subr.mxu0 0.0
        %1617 = vmatpush2.xpose.msra.mxu0 0.0
        %1618 = vmatprep.subr.mxu0 0.0
        %1619 = vmatpush2.xpose.msra.mxu0 0.0
        %1620 = vmatprep.subr.mxu0 0.0
        %1621 = vmatpush2.xpose.msra.mxu0 0.0
        %1622 = vmatprep.subr.mxu0 0.0
        %1623 = vmatpush2.xpose.msra.mxu0 0.0
        %1624 = vmatprep.subr.mxu0 0.0
        %1625 = vmatpush2.xpose.msra.mxu0 0.0
        %1626 = vmatprep.subr.mxu0 0.0
        %1627 = vmatpush2.xpose.msra.mxu0 0.0
        %1628 = vmatprep.subr.mxu0 0.0
        %1629 = vmatpush2.xpose.msra.mxu0 0.0
        %1630 = vmatprep.subr.mxu0 0.0
        %1631 = vmatpush2.xpose.msra.mxu0 0.0
        %1632 = vmatprep.subr.mxu0 0.0
        %1633 = vmatpush2.xpose.msra.mxu0 0.0
        %1634 = vmatprep.subr.mxu0 0.0
        %1635 = vmatpush2.xpose.msra.mxu0 0.0
        %1636 = vmatprep.subr.mxu0 0.0
        %1637 = vmatpush2.xpose.msra.mxu0 0.0
        %1638 = vmatprep.subr.mxu0 0.0
        %1639 = vmatpush2.xpose.msra.mxu0 0.0
        %1640 = vmatprep.subr.mxu0 0.0
        %1641 = vmatpush2.xpose.msra.mxu0 0.0
        %1642 = vmatprep.subr.mxu0 0.0
        %1643 = vmatpush2.xpose.msra.mxu0 0.0
        %1644 = vmatprep.subr.mxu0 0.0
        %1645 = vmatpush2.xpose.msra.mxu0 0.0
        %1646 = vmatprep.mubr.f32.mxu0 0.0
        %1647 = vmatmul.mubr.f32.gmra.mxu0 %v1578
        %v1648 = vpop.f32.mrf.mxu0
        %v1649 = vadd.f32 0.0, %v1648
        %v1650 = vpop.f32.mrf.mxu0
        %1651 = vdwg.mxu0
        %1652 = vrot.lane.b32.xlu0 %v1423, 96
        %v1653 = vpop.permute.xlu0 %1652
        %v1654 = vsel %vm345, %v1423, 0
        %v1656 = vsel %vm345, %v1653, 0
        %1658 = vmatprep.subr.mxu0 0.0
        %1659 = vmatpush1.xpose.msra.mxu0 0.0
        %1660 = vmatprep.subr.mxu0 0.0
        %1661 = vmatpush1.xpose.msra.mxu0 0.0
        %1662 = vmatprep.subr.mxu0 0.0
        %1663 = vmatpush1.xpose.msra.mxu0 0.0
        %1664 = vmatprep.subr.mxu0 0.0
        %1665 = vmatpush1.xpose.msra.mxu0 0.0
        %1666 = vmatprep.subr.mxu0 0.0
        %1667 = vmatpush1.xpose.msra.mxu0 0.0
        %1668 = vmatprep.subr.mxu0 0.0
        %1669 = vmatpush1.xpose.msra.mxu0 0.0
        %1670 = vmatprep.subr.mxu0 0.0
        %1671 = vmatpush1.xpose.msra.mxu0 0.0
        %1672 = vmatprep.subr.mxu0 0.0
        %1673 = vmatpush1.xpose.msra.mxu0 0.0
        %1674 = vmatprep.subr.mxu0 0.0
        %1675 = vmatpush1.xpose.msra.mxu0 0.0
        %1676 = vmatprep.subr.mxu0 0.0
        %1677 = vmatpush1.xpose.msra.mxu0 0.0
        %1678 = vmatprep.subr.mxu0 0.0
        %1679 = vmatpush1.xpose.msra.mxu0 0.0
        %1680 = vmatprep.subr.mxu0 0.0
        %1681 = vmatpush1.xpose.msra.mxu0 0.0
        %1682 = vmatprep.subr.mxu0 0.0
        %1683 = vmatpush1.xpose.msra.mxu0 0.0
        %1684 = vmatprep.subr.mxu0 0.0
        %1685 = vmatpush1.xpose.msra.mxu0 0.0
        %1686 = vmatprep.subr.mxu0 0.0
        %1687 = vmatpush1.xpose.msra.mxu0 0.0
        %1688 = vmatprep.subr.mxu0 0.0
        %1689 = vmatpush1.xpose.msra.mxu0 %v1656
        %1690 = vmatprep.subr.mxu0 0.0
        %1691 = vmatpush2.xpose.msra.mxu0 0.0
        %1692 = vmatprep.subr.mxu0 0.0
        %1693 = vmatpush2.xpose.msra.mxu0 0.0
        %1694 = vmatprep.subr.mxu0 0.0
        %1695 = vmatpush2.xpose.msra.mxu0 0.0
        %1696 = vmatprep.subr.mxu0 0.0
        %1697 = vmatpush2.xpose.msra.mxu0 0.0
        %1698 = vmatprep.subr.mxu0 0.0
        %1699 = vmatpush2.xpose.msra.mxu0 0.0
        %1700 = vmatprep.subr.mxu0 0.0
        %1701 = vmatpush2.xpose.msra.mxu0 0.0
        %1702 = vmatprep.subr.mxu0 0.0
        %1703 = vmatpush2.xpose.msra.mxu0 0.0
        %1704 = vmatprep.subr.mxu0 0.0
        %1705 = vmatpush2.xpose.msra.mxu0 0.0
        %1706 = vmatprep.subr.mxu0 0.0
        %1707 = vmatpush2.xpose.msra.mxu0 0.0
        %1708 = vmatprep.subr.mxu0 0.0
        %1709 = vmatpush2.xpose.msra.mxu0 0.0
        %1710 = vmatprep.subr.mxu0 0.0
        %1711 = vmatpush2.xpose.msra.mxu0 0.0
        %1712 = vmatprep.subr.mxu0 0.0
        %1713 = vmatpush2.xpose.msra.mxu0 0.0
        %1714 = vmatprep.subr.mxu0 0.0
        %1715 = vmatpush2.xpose.msra.mxu0 0.0
        %1716 = vmatprep.subr.mxu0 0.0
        %1717 = vmatpush2.xpose.msra.mxu0 0.0
        %1718 = vmatprep.subr.mxu0 0.0
        %1719 = vmatpush2.xpose.msra.mxu0 0.0
        %1720 = vmatprep.subr.mxu0 0.0
        %1721 = vmatpush2.xpose.msra.mxu0 0.0
        %1722 = vmatprep.mubr.f32.mxu0 0.0
        %1723 = vmatmul.mubr.f32.gmra.mxu0 %v1654
        %v1724 = vpop.f32.mrf.mxu0
        %v1725 = vadd.f32 0.0, %v1724
        %v1726 = vpop.f32.mrf.mxu0
        %1727 = vdwg.mxu0
        %v1728 = vmul.f32 %v1497, 0.35355338
        %v1729 = vmul.f32 %v1573, 0.35355338
        %v1730 = vmul.f32 %v1649, 0.35355338
        %v1731 = vmul.f32 %v1725, 0.35355338
        %v1732 = vadd.f32 %v1728, %v653
        %v1733 = vadd.f32 %v1729, %v653
        %v1734 = vadd.f32 %v1730, %v653
        %v1735 = vadd.f32 %v1731, %v653
        %v1736 = vsel %vm345, %v1732, -inf
        %1737 = vmax.xlane.f32.xlu0 %v1736
        %v1738 = vpop.xlane.xlu0 %1737
        %v1739 = vsel %vm345, %v1733, -inf
        %1740 = vmax.xlane.f32.xlu0 %v1739
        %v1741 = vpop.xlane.xlu0 %1740
        %v1742 = vsel %vm345, %v1734, -inf
        %1743 = vmax.xlane.f32.xlu0 %v1742
        %v1744 = vpop.xlane.xlu0 %1743
        %v1745 = vsel %vm345, %v1735, -inf
        %1746 = vmax.xlane.f32.xlu0 %v1745
        %v1747 = vpop.xlane.xlu0 %1746
        %v1748 = vsub.f32 %v1732, %v1738
        %v1749 = vsub.f32 %v1733, %v1741
        %v1750 = vsub.f32 %v1734, %v1744
        %v1751 = vsub.f32 %v1735, %v1747
        %v1752 = vmul.f32 %v1748, 1.442695
        %v1753 = vpow.pop %v1752
        %v1754 = vmul.f32 %v1749, 1.442695
        %v1755 = vpow.pop %v1754
        %v1756 = vmul.f32 %v1750, 1.442695
        %v1757 = vpow.pop %v1756
        %v1758 = vmul.f32 %v1751, 1.442695
        %v1759 = vpow.pop %v1758
        %v1760 = vsel %vm345, %v1753, 0.0
        %1761 = vadd.xlane.f32.xlu0 %v1760
        %v1762 = vpop.xlane.xlu0 %1761
        %v1763 = vsel %vm345, %v1755, 0.0
        %1764 = vadd.xlane.f32.xlu0 %v1763
        %v1765 = vpop.xlane.xlu0 %1764
        %v1766 = vsel %vm345, %v1757, 0.0
        %1767 = vadd.xlane.f32.xlu0 %v1766
        %v1768 = vpop.xlane.xlu0 %1767
        %v1769 = vsel %vm345, %v1759, 0.0
        %1770 = vadd.xlane.f32.xlu0 %v1769
        %v1771 = vpop.xlane.xlu0 %1770
        %v1772 = vrcp.pop %v1762
        %v1773 = vrcp.pop %v1765
        %v1774 = vrcp.pop %v1768
        %v1775 = vrcp.pop %v1771
        %v1776 = vmul.f32 %v1753, %v1772
        %v1777 = vmul.f32 %v1755, %v1773
        %v1778 = vmul.f32 %v1757, %v1774
        %v1779 = vmul.f32 %v1759, %v1775
        %v1780 = vsel %vm345, %v1776, 0.0
        %v1781 = vsel %vm345, %v1777, 0.0
        %v1782 = vsel %vm345, %v1778, 0.0
        %v1783 = vsel %vm345, %v1779, 0.0
        %s1784 = scalar_lea.vmem %s197, 32 [#allocation3]
        %1785 = vst [vmem:[%s1784] sm:$0xff] %v1780
        %1786 = vst [vmem:[%s1784 + $0x8] sm:$0xff] %v1781
        %1787 = vst [vmem:[%s1784 + $0x10] sm:$0xff] %v1782
        %1788 = vst [vmem:[%s1784 + $0x18] sm:$0xff] %v1783
        %1789 = vrot.lane.b32.xlu0 %v1414, 64
        %v1790 = vpop.permute.xlu0 %1789
        %v1793 = vsel %vm345, %v1776, 0
        %1795 = vmatprep.subr.mxu0 0.0
        %1796 = vmatpush1.msra.mxu0 0.0
        %1797 = vmatprep.subr.mxu0 0.0
        %1798 = vmatpush1.msra.mxu0 0.0
        %1799 = vmatprep.subr.mxu0 0.0
        %1800 = vmatpush1.msra.mxu0 0.0
        %1801 = vmatprep.subr.mxu0 0.0
        %1802 = vmatpush1.msra.mxu0 0.0
        %1803 = vmatprep.subr.mxu0 0.0
        %1804 = vmatpush1.msra.mxu0 0.0
        %1805 = vmatprep.subr.mxu0 0.0
        %1806 = vmatpush1.msra.mxu0 0.0
        %1807 = vmatprep.subr.mxu0 0.0
        %1808 = vmatpush1.msra.mxu0 0.0
        %1809 = vmatprep.subr.mxu0 0.0
        %1810 = vmatpush1.msra.mxu0 0.0
        %1811 = vmatprep.subr.mxu0 0.0
        %1812 = vmatpush1.msra.mxu0 0.0
        %1813 = vmatprep.subr.mxu0 0.0
        %1814 = vmatpush1.msra.mxu0 0.0
        %1815 = vmatprep.subr.mxu0 0.0
        %1816 = vmatpush1.msra.mxu0 0.0
        %1817 = vmatprep.subr.mxu0 0.0
        %1818 = vmatpush1.msra.mxu0 0.0
        %1819 = vmatprep.subr.mxu0 0.0
        %1820 = vmatpush1.msra.mxu0 0.0
        %1821 = vmatprep.subr.mxu0 0.0
        %1822 = vmatpush1.msra.mxu0 0.0
        %1823 = vmatprep.subr.mxu0 0.0
        %1824 = vmatpush1.msra.mxu0 0.0
        %1825 = vmatprep.subr.mxu0 0.0
        %1826 = vmatpush1.msra.mxu0 %v1790
        %1827 = vmatprep.subr.mxu0 0.0
        %1828 = vmatpush2.msra.mxu0 0.0
        %1829 = vmatprep.subr.mxu0 0.0
        %1830 = vmatpush2.msra.mxu0 0.0
        %1831 = vmatprep.subr.mxu0 0.0
        %1832 = vmatpush2.msra.mxu0 0.0
        %1833 = vmatprep.subr.mxu0 0.0
        %1834 = vmatpush2.msra.mxu0 0.0
        %1835 = vmatprep.subr.mxu0 0.0
        %1836 = vmatpush2.msra.mxu0 0.0
        %1837 = vmatprep.subr.mxu0 0.0
        %1838 = vmatpush2.msra.mxu0 0.0
        %1839 = vmatprep.subr.mxu0 0.0
        %1840 = vmatpush2.msra.mxu0 0.0
        %1841 = vmatprep.subr.mxu0 0.0
        %1842 = vmatpush2.msra.mxu0 0.0
        %1843 = vmatprep.subr.mxu0 0.0
        %1844 = vmatpush2.msra.mxu0 0.0
        %1845 = vmatprep.subr.mxu0 0.0
        %1846 = vmatpush2.msra.mxu0 0.0
        %1847 = vmatprep.subr.mxu0 0.0
        %1848 = vmatpush2.msra.mxu0 0.0
        %1849 = vmatprep.subr.mxu0 0.0
        %1850 = vmatpush2.msra.mxu0 0.0
        %1851 = vmatprep.subr.mxu0 0.0
        %1852 = vmatpush2.msra.mxu0 0.0
        %1853 = vmatprep.subr.mxu0 0.0
        %1854 = vmatpush2.msra.mxu0 0.0
        %1855 = vmatprep.subr.mxu0 0.0
        %1856 = vmatpush2.msra.mxu0 0.0
        %1857 = vmatprep.subr.mxu0 0.0
        %1858 = vmatpush2.msra.mxu0 0.0
        %1859 = vmatprep.mubr.f32.mxu0 0.0
        %1860 = vmatmul.mubr.f32.gmra.mxu0 %v1793
        %v1861 = vpop.f32.mrf.mxu0
        %v1862 = vadd.f32 0.0, %v1861
        %v1863 = vpop.f32.mrf.mxu0
        %1864 = vdwg.mxu0
        %1865 = vrot.lane.b32.xlu0 %v1419, 64
        %v1866 = vpop.permute.xlu0 %1865
        %v1869 = vsel %vm345, %v1777, 0
        %1871 = vmatprep.subr.mxu0 0.0
        %1872 = vmatpush1.msra.mxu0 0.0
        %1873 = vmatprep.subr.mxu0 0.0
        %1874 = vmatpush1.msra.mxu0 0.0
        %1875 = vmatprep.subr.mxu0 0.0
        %1876 = vmatpush1.msra.mxu0 0.0
        %1877 = vmatprep.subr.mxu0 0.0
        %1878 = vmatpush1.msra.mxu0 0.0
        %1879 = vmatprep.subr.mxu0 0.0
        %1880 = vmatpush1.msra.mxu0 0.0
        %1881 = vmatprep.subr.mxu0 0.0
        %1882 = vmatpush1.msra.mxu0 0.0
        %1883 = vmatprep.subr.mxu0 0.0
        %1884 = vmatpush1.msra.mxu0 0.0
        %1885 = vmatprep.subr.mxu0 0.0
        %1886 = vmatpush1.msra.mxu0 0.0
        %1887 = vmatprep.subr.mxu0 0.0
        %1888 = vmatpush1.msra.mxu0 0.0
        %1889 = vmatprep.subr.mxu0 0.0
        %1890 = vmatpush1.msra.mxu0 0.0
        %1891 = vmatprep.subr.mxu0 0.0
        %1892 = vmatpush1.msra.mxu0 0.0
        %1893 = vmatprep.subr.mxu0 0.0
        %1894 = vmatpush1.msra.mxu0 0.0
        %1895 = vmatprep.subr.mxu0 0.0
        %1896 = vmatpush1.msra.mxu0 0.0
        %1897 = vmatprep.subr.mxu0 0.0
        %1898 = vmatpush1.msra.mxu0 0.0
        %1899 = vmatprep.subr.mxu0 0.0
        %1900 = vmatpush1.msra.mxu0 0.0
        %1901 = vmatprep.subr.mxu0 0.0
        %1902 = vmatpush1.msra.mxu0 %v1866
        %1903 = vmatprep.subr.mxu0 0.0
        %1904 = vmatpush2.msra.mxu0 0.0
        %1905 = vmatprep.subr.mxu0 0.0
        %1906 = vmatpush2.msra.mxu0 0.0
        %1907 = vmatprep.subr.mxu0 0.0
        %1908 = vmatpush2.msra.mxu0 0.0
        %1909 = vmatprep.subr.mxu0 0.0
        %1910 = vmatpush2.msra.mxu0 0.0
        %1911 = vmatprep.subr.mxu0 0.0
        %1912 = vmatpush2.msra.mxu0 0.0
        %1913 = vmatprep.subr.mxu0 0.0
        %1914 = vmatpush2.msra.mxu0 0.0
        %1915 = vmatprep.subr.mxu0 0.0
        %1916 = vmatpush2.msra.mxu0 0.0
        %1917 = vmatprep.subr.mxu0 0.0
        %1918 = vmatpush2.msra.mxu0 0.0
        %1919 = vmatprep.subr.mxu0 0.0
        %1920 = vmatpush2.msra.mxu0 0.0
        %1921 = vmatprep.subr.mxu0 0.0
        %1922 = vmatpush2.msra.mxu0 0.0
        %1923 = vmatprep.subr.mxu0 0.0
        %1924 = vmatpush2.msra.mxu0 0.0
        %1925 = vmatprep.subr.mxu0 0.0
        %1926 = vmatpush2.msra.mxu0 0.0
        %1927 = vmatprep.subr.mxu0 0.0
        %1928 = vmatpush2.msra.mxu0 0.0
        %1929 = vmatprep.subr.mxu0 0.0
        %1930 = vmatpush2.msra.mxu0 0.0
        %1931 = vmatprep.subr.mxu0 0.0
        %1932 = vmatpush2.msra.mxu0 0.0
        %1933 = vmatprep.subr.mxu0 0.0
        %1934 = vmatpush2.msra.mxu0 0.0
        %1935 = vmatprep.mubr.f32.mxu0 0.0
        %1936 = vmatmul.mubr.f32.gmra.mxu0 %v1869
        %v1937 = vpop.f32.mrf.mxu0
        %v1938 = vadd.f32 0.0, %v1937
        %v1939 = vpop.f32.mrf.mxu0
        %1940 = vdwg.mxu0
        %1941 = vrot.lane.b32.xlu0 %v1421, 64
        %v1942 = vpop.permute.xlu0 %1941
        %v1945 = vsel %vm345, %v1778, 0
        %1947 = vmatprep.subr.mxu0 0.0
        %1948 = vmatpush1.msra.mxu0 0.0
        %1949 = vmatprep.subr.mxu0 0.0
        %1950 = vmatpush1.msra.mxu0 0.0
        %1951 = vmatprep.subr.mxu0 0.0
        %1952 = vmatpush1.msra.mxu0 0.0
        %1953 = vmatprep.subr.mxu0 0.0
        %1954 = vmatpush1.msra.mxu0 0.0
        %1955 = vmatprep.subr.mxu0 0.0
        %1956 = vmatpush1.msra.mxu0 0.0
        %1957 = vmatprep.subr.mxu0 0.0
        %1958 = vmatpush1.msra.mxu0 0.0
        %1959 = vmatprep.subr.mxu0 0.0
        %1960 = vmatpush1.msra.mxu0 0.0
        %1961 = vmatprep.subr.mxu0 0.0
        %1962 = vmatpush1.msra.mxu0 0.0
        %1963 = vmatprep.subr.mxu0 0.0
        %1964 = vmatpush1.msra.mxu0 0.0
        %1965 = vmatprep.subr.mxu0 0.0
        %1966 = vmatpush1.msra.mxu0 0.0
        %1967 = vmatprep.subr.mxu0 0.0
        %1968 = vmatpush1.msra.mxu0 0.0
        %1969 = vmatprep.subr.mxu0 0.0
        %1970 = vmatpush1.msra.mxu0 0.0
        %1971 = vmatprep.subr.mxu0 0.0
        %1972 = vmatpush1.msra.mxu0 0.0
        %1973 = vmatprep.subr.mxu0 0.0
        %1974 = vmatpush1.msra.mxu0 0.0
        %1975 = vmatprep.subr.mxu0 0.0
        %1976 = vmatpush1.msra.mxu0 0.0
        %1977 = vmatprep.subr.mxu0 0.0
        %1978 = vmatpush1.msra.mxu0 %v1942
        %1979 = vmatprep.subr.mxu0 0.0
        %1980 = vmatpush2.msra.mxu0 0.0
        %1981 = vmatprep.subr.mxu0 0.0
        %1982 = vmatpush2.msra.mxu0 0.0
        %1983 = vmatprep.subr.mxu0 0.0
        %1984 = vmatpush2.msra.mxu0 0.0
        %1985 = vmatprep.subr.mxu0 0.0
        %1986 = vmatpush2.msra.mxu0 0.0
        %1987 = vmatprep.subr.mxu0 0.0
        %1988 = vmatpush2.msra.mxu0 0.0
        %1989 = vmatprep.subr.mxu0 0.0
        %1990 = vmatpush2.msra.mxu0 0.0
        %1991 = vmatprep.subr.mxu0 0.0
        %1992 = vmatpush2.msra.mxu0 0.0
        %1993 = vmatprep.subr.mxu0 0.0
        %1994 = vmatpush2.msra.mxu0 0.0
        %1995 = vmatprep.subr.mxu0 0.0
        %1996 = vmatpush2.msra.mxu0 0.0
        %1997 = vmatprep.subr.mxu0 0.0
        %1998 = vmatpush2.msra.mxu0 0.0
        %1999 = vmatprep.subr.mxu0 0.0
        %2000 = vmatpush2.msra.mxu0 0.0
        %2001 = vmatprep.subr.mxu0 0.0
        %2002 = vmatpush2.msra.mxu0 0.0
        %2003 = vmatprep.subr.mxu0 0.0
        %2004 = vmatpush2.msra.mxu0 0.0
        %2005 = vmatprep.subr.mxu0 0.0
        %2006 = vmatpush2.msra.mxu0 0.0
        %2007 = vmatprep.subr.mxu0 0.0
        %2008 = vmatpush2.msra.mxu0 0.0
        %2009 = vmatprep.subr.mxu0 0.0
        %2010 = vmatpush2.msra.mxu0 0.0
        %2011 = vmatprep.mubr.f32.mxu0 0.0
        %2012 = vmatmul.mubr.f32.gmra.mxu0 %v1945
        %v2013 = vpop.f32.mrf.mxu0
        %v2014 = vadd.f32 0.0, %v2013
        %v2015 = vpop.f32.mrf.mxu0
        %2016 = vdwg.mxu0
        %2017 = vrot.lane.b32.xlu0 %v1423, 64
        %v2018 = vpop.permute.xlu0 %2017
        %v2021 = vsel %vm345, %v1779, 0
        %2023 = vmatprep.subr.mxu0 0.0
        %2024 = vmatpush1.msra.mxu0 0.0
        %2025 = vmatprep.subr.mxu0 0.0
        %2026 = vmatpush1.msra.mxu0 0.0
        %2027 = vmatprep.subr.mxu0 0.0
        %2028 = vmatpush1.msra.mxu0 0.0
        %2029 = vmatprep.subr.mxu0 0.0
        %2030 = vmatpush1.msra.mxu0 0.0
        %2031 = vmatprep.subr.mxu0 0.0
        %2032 = vmatpush1.msra.mxu0 0.0
        %2033 = vmatprep.subr.mxu0 0.0
        %2034 = vmatpush1.msra.mxu0 0.0
        %2035 = vmatprep.subr.mxu0 0.0
        %2036 = vmatpush1.msra.mxu0 0.0
        %2037 = vmatprep.subr.mxu0 0.0
        %2038 = vmatpush1.msra.mxu0 0.0
        %2039 = vmatprep.subr.mxu0 0.0
        %2040 = vmatpush1.msra.mxu0 0.0
        %2041 = vmatprep.subr.mxu0 0.0
        %2042 = vmatpush1.msra.mxu0 0.0
        %2043 = vmatprep.subr.mxu0 0.0
        %2044 = vmatpush1.msra.mxu0 0.0
        %2045 = vmatprep.subr.mxu0 0.0
        %2046 = vmatpush1.msra.mxu0 0.0
        %2047 = vmatprep.subr.mxu0 0.0
        %2048 = vmatpush1.msra.mxu0 0.0
        %2049 = vmatprep.subr.mxu0 0.0
        %2050 = vmatpush1.msra.mxu0 0.0
        %2051 = vmatprep.subr.mxu0 0.0
        %2052 = vmatpush1.msra.mxu0 0.0
        %2053 = vmatprep.subr.mxu0 0.0
        %2054 = vmatpush1.msra.mxu0 %v2018
        %2055 = vmatprep.subr.mxu0 0.0
        %2056 = vmatpush2.msra.mxu0 0.0
        %2057 = vmatprep.subr.mxu0 0.0
        %2058 = vmatpush2.msra.mxu0 0.0
        %2059 = vmatprep.subr.mxu0 0.0
        %2060 = vmatpush2.msra.mxu0 0.0
        %2061 = vmatprep.subr.mxu0 0.0
        %2062 = vmatpush2.msra.mxu0 0.0
        %2063 = vmatprep.subr.mxu0 0.0
        %2064 = vmatpush2.msra.mxu0 0.0
        %2065 = vmatprep.subr.mxu0 0.0
        %2066 = vmatpush2.msra.mxu0 0.0
        %2067 = vmatprep.subr.mxu0 0.0
        %2068 = vmatpush2.msra.mxu0 0.0
        %2069 = vmatprep.subr.mxu0 0.0
        %2070 = vmatpush2.msra.mxu0 0.0
        %2071 = vmatprep.subr.mxu0 0.0
        %2072 = vmatpush2.msra.mxu0 0.0
        %2073 = vmatprep.subr.mxu0 0.0
        %2074 = vmatpush2.msra.mxu0 0.0
        %2075 = vmatprep.subr.mxu0 0.0
        %2076 = vmatpush2.msra.mxu0 0.0
        %2077 = vmatprep.subr.mxu0 0.0
        %2078 = vmatpush2.msra.mxu0 0.0
        %2079 = vmatprep.subr.mxu0 0.0
        %2080 = vmatpush2.msra.mxu0 0.0
        %2081 = vmatprep.subr.mxu0 0.0
        %2082 = vmatpush2.msra.mxu0 0.0
        %2083 = vmatprep.subr.mxu0 0.0
        %2084 = vmatpush2.msra.mxu0 0.0
        %2085 = vmatprep.subr.mxu0 0.0
        %2086 = vmatpush2.msra.mxu0 0.0
        %2087 = vmatprep.mubr.f32.mxu0 0.0
        %2088 = vmatmul.mubr.f32.gmra.mxu0 %v2021
        %v2089 = vpop.f32.mrf.mxu0
        %v2090 = vadd.f32 0.0, %v2089
        %v2091 = vpop.f32.mrf.mxu0
        %2092 = vdwg.mxu0
        %2094 = vrot.lane.b32.xlu0 %v1938, 8
        %v2095 = vpop.permute.xlu0 %2094
        %2098 = vrot.lane.b32.xlu0 %v2014, 16
        %v2099 = vpop.permute.xlu0 %2098
        %2102 = vrot.lane.b32.xlu0 %v2090, 24
        %v2103 = vpop.permute.xlu0 %2102
        %v2105 = vsel %vm345, %v1862, %v2095
        %v2106 = vsel %vm1028, %v2105, %v2099
        %v2107 = vsel %vm1030, %v2106, %v2103
        %v2108 = vlaneseq
        %v2109 = vshrl.u32 %v2108, 7
        %v2110 = vsub.s32 1, %v2109
        %v2111 = vrot.slane %v1339, %v2110
        %v2113 = vsel %vm208, %v2107, 0
        %2115 = vmatprep.subr.mxu0 0.0
        %2116 = vmatpush1.msra.mxu0 0.0
        %2117 = vmatprep.subr.mxu0 0.0
        %2118 = vmatpush1.msra.mxu0 0.0
        %2119 = vmatprep.subr.mxu0 0.0
        %2120 = vmatpush1.msra.mxu0 0.0
        %2121 = vmatprep.subr.mxu0 0.0
        %2122 = vmatpush1.msra.mxu0 0.0
        %2123 = vmatprep.subr.mxu0 0.0
        %2124 = vmatpush1.msra.mxu0 0.0
        %2125 = vmatprep.subr.mxu0 0.0
        %2126 = vmatpush1.msra.mxu0 0.0
        %2127 = vmatprep.subr.mxu0 0.0
        %2128 = vmatpush1.msra.mxu0 0.0
        %2129 = vmatprep.subr.mxu0 0.0
        %2130 = vmatpush1.msra.mxu0 0.0
        %2131 = vmatprep.subr.mxu0 0.0
        %2132 = vmatpush1.msra.mxu0 0.0
        %2133 = vmatprep.subr.mxu0 0.0
        %2134 = vmatpush1.msra.mxu0 0.0
        %2135 = vmatprep.subr.mxu0 0.0
        %2136 = vmatpush1.msra.mxu0 0.0
        %2137 = vmatprep.subr.mxu0 0.0
        %2138 = vmatpush1.msra.mxu0 0.0
        %2139 = vmatprep.subr.mxu0 0.0
        %2140 = vmatpush1.msra.mxu0 %v1326
        %2141 = vmatprep.subr.mxu0 0.0
        %2142 = vmatpush1.msra.mxu0 %v1325
        %2143 = vmatprep.subr.mxu0 0.0
        %2144 = vmatpush1.msra.mxu0 %v1324
        %2145 = vmatprep.subr.mxu0 0.0
        %2146 = vmatpush1.msra.mxu0 %v1323
        %2147 = vmatprep.subr.mxu0 0.0
        %2148 = vmatpush2.msra.mxu0 0.0
        %2149 = vmatprep.subr.mxu0 0.0
        %2150 = vmatpush2.msra.mxu0 0.0
        %2151 = vmatprep.subr.mxu0 0.0
        %2152 = vmatpush2.msra.mxu0 0.0
        %2153 = vmatprep.subr.mxu0 0.0
        %2154 = vmatpush2.msra.mxu0 0.0
        %2155 = vmatprep.subr.mxu0 0.0
        %2156 = vmatpush2.msra.mxu0 0.0
        %2157 = vmatprep.subr.mxu0 0.0
        %2158 = vmatpush2.msra.mxu0 0.0
        %2159 = vmatprep.subr.mxu0 0.0
        %2160 = vmatpush2.msra.mxu0 0.0
        %2161 = vmatprep.subr.mxu0 0.0
        %2162 = vmatpush2.msra.mxu0 0.0
        %2163 = vmatprep.subr.mxu0 0.0
        %2164 = vmatpush2.msra.mxu0 0.0
        %2165 = vmatprep.subr.mxu0 0.0
        %2166 = vmatpush2.msra.mxu0 0.0
        %2167 = vmatprep.subr.mxu0 0.0
        %2168 = vmatpush2.msra.mxu0 0.0
        %2169 = vmatprep.subr.mxu0 0.0
        %2170 = vmatpush2.msra.mxu0 0.0
        %2171 = vmatprep.subr.mxu0 0.0
        %2172 = vmatpush2.msra.mxu0 0.0
        %2173 = vmatprep.subr.mxu0 0.0
        %2174 = vmatpush2.msra.mxu0 0.0
        %2175 = vmatprep.subr.mxu0 0.0
        %2176 = vmatpush2.msra.mxu0 0.0
        %2177 = vmatprep.subr.mxu0 0.0
        %2178 = vmatpush2.msra.mxu0 0.0
        %2179 = vmatprep.mubr.f32.mxu0 0.0
        %2180 = vmatmul.mubr.f32.gmra.mxu0 %v2113
        %v2181 = vpop.f32.mrf.mxu0
        %v2182 = vadd.f32 %v2111, %v2181
        %v2183 = vpop.f32.mrf.mxu0
        %2184 = vdwg.mxu0
        %v2185 = vadd.f32 %v2182, %v1316
        %v2186 = vsel %vm208, %v2185, 0.0
        %2187 = vadd.xlane.f32.xlu0 %v2186
        %v2188 = vpop.xlane.xlu0 %2187
        %v2189 = vmul.f32 %v2188, %v212
        %v2190 = vsub.f32 %v2185, %v2189
        %v2191 = vmul.f32 %v2190, %v2190
        %v2192 = vsel %vm208, %v2191, 0.0
        %2193 = vadd.xlane.f32.xlu0 %v2192
        %v2194 = vpop.xlane.xlu0 %2193
        %v2195 = vmul.f32 %v2194, %v212
        %v2196 = vadd.f32 %v2195, 1e-12
        %v2197 = vrsqrt.pop %v2196
        %v2198 = vmul.f32 %v2190, %v2197
        %v2199 = vlaneseq
        %v2200 = vshrl.u32 %v2199, 7
        %v2201 = vsub.s32 2, %v2200
        %v2202 = vrot.slane %v1339, %v2201
        %v2203 = vmul.f32 %v2198, %v2202
        %v2204 = vlaneseq
        %v2205 = vshrl.u32 %v2204, 7
        %v2206 = vsub.s32 3, %v2205
        %v2207 = vrot.slane %v1339, %v2206
        %v2208 = vadd.f32 %v2203, %v2207
        %v2209 = vlaneseq
        %v2210 = vshrl.u32 %v2209, 7
        %v2211 = vsub.s32 4, %v2210
        %v2212 = vrot.slane %v1339, %v2211
        %v2214 = vsel %vm208, %v2208, 0
        %2216 = vmatprep.subr.mxu0 0.0
        %2217 = vmatpush1.msra.mxu0 0.0
        %2218 = vmatprep.subr.mxu0 0.0
        %2219 = vmatpush1.msra.mxu0 0.0
        %2220 = vmatprep.subr.mxu0 0.0
        %2221 = vmatpush1.msra.mxu0 0.0
        %2222 = vmatprep.subr.mxu0 0.0
        %2223 = vmatpush1.msra.mxu0 0.0
        %2224 = vmatprep.subr.mxu0 0.0
        %2225 = vmatpush1.msra.mxu0 0.0
        %2226 = vmatprep.subr.mxu0 0.0
        %2227 = vmatpush1.msra.mxu0 0.0
        %2228 = vmatprep.subr.mxu0 0.0
        %2229 = vmatpush1.msra.mxu0 0.0
        %2230 = vmatprep.subr.mxu0 0.0
        %2231 = vmatpush1.msra.mxu0 0.0
        %2232 = vmatprep.subr.mxu0 0.0
        %2233 = vmatpush1.msra.mxu0 0.0
        %2234 = vmatprep.subr.mxu0 0.0
        %2235 = vmatpush1.msra.mxu0 0.0
        %2236 = vmatprep.subr.mxu0 0.0
        %2237 = vmatpush1.msra.mxu0 0.0
        %2238 = vmatprep.subr.mxu0 0.0
        %2239 = vmatpush1.msra.mxu0 0.0
        %2240 = vmatprep.subr.mxu0 0.0
        %2241 = vmatpush1.msra.mxu0 %v1330
        %2242 = vmatprep.subr.mxu0 0.0
        %2243 = vmatpush1.msra.mxu0 %v1329
        %2244 = vmatprep.subr.mxu0 0.0
        %2245 = vmatpush1.msra.mxu0 %v1328
        %2246 = vmatprep.subr.mxu0 0.0
        %2247 = vmatpush1.msra.mxu0 %v1327
        %2248 = vmatprep.subr.mxu0 0.0
        %2249 = vmatpush2.msra.mxu0 0.0
        %2250 = vmatprep.subr.mxu0 0.0
        %2251 = vmatpush2.msra.mxu0 0.0
        %2252 = vmatprep.subr.mxu0 0.0
        %2253 = vmatpush2.msra.mxu0 0.0
        %2254 = vmatprep.subr.mxu0 0.0
        %2255 = vmatpush2.msra.mxu0 0.0
        %2256 = vmatprep.subr.mxu0 0.0
        %2257 = vmatpush2.msra.mxu0 0.0
        %2258 = vmatprep.subr.mxu0 0.0
        %2259 = vmatpush2.msra.mxu0 0.0
        %2260 = vmatprep.subr.mxu0 0.0
        %2261 = vmatpush2.msra.mxu0 0.0
        %2262 = vmatprep.subr.mxu0 0.0
        %2263 = vmatpush2.msra.mxu0 0.0
        %2264 = vmatprep.subr.mxu0 0.0
        %2265 = vmatpush2.msra.mxu0 0.0
        %2266 = vmatprep.subr.mxu0 0.0
        %2267 = vmatpush2.msra.mxu0 0.0
        %2268 = vmatprep.subr.mxu0 0.0
        %2269 = vmatpush2.msra.mxu0 0.0
        %2270 = vmatprep.subr.mxu0 0.0
        %2271 = vmatpush2.msra.mxu0 0.0
        %2272 = vmatprep.subr.mxu0 0.0
        %2273 = vmatpush2.msra.mxu0 0.0
        %2274 = vmatprep.subr.mxu0 0.0
        %2275 = vmatpush2.msra.mxu0 0.0
        %2276 = vmatprep.subr.mxu0 0.0
        %2277 = vmatpush2.msra.mxu0 0.0
        %2278 = vmatprep.subr.mxu0 0.0
        %2279 = vmatpush2.msra.mxu0 0.0
        %2280 = vmatprep.mubr.f32.mxu0 0.0
        %2281 = vmatmul.mubr.f32.gmra.mxu0 %v2214
        %v2282 = vpop.f32.mrf.mxu0
        %v2283 = vadd.f32 %v2212, %v2282
        %v2284 = vpop.f32.mrf.mxu0
        %2285 = vdwg.mxu0
        %v2286 = vmul.f32 %v2283, 0.5
        %v2287 = vmul.f32 %v2283, 0.70710677
        %v2288 = verf.f32.pop %v2287
        %v2289 = vadd.f32 %v2288, 1.0
        %v2290 = vmul.f32 %v2286, %v2289
        %v2291 = vlaneseq
        %v2292 = vshrl.u32 %v2291, 7
        %v2293 = vsub.s32 5, %v2292
        %v2294 = vrot.slane %v1339, %v2293
        %v2296 = vsel %vm1219, %v2290, 0
        %2298 = vmatprep.subr.mxu0 0.0
        %2299 = vmatpush1.msra.mxu0 0.0
        %2300 = vmatprep.subr.mxu0 0.0
        %2301 = vmatpush1.msra.mxu0 0.0
        %2302 = vmatprep.subr.mxu0 0.0
        %2303 = vmatpush1.msra.mxu0 0.0
        %2304 = vmatprep.subr.mxu0 0.0
        %2305 = vmatpush1.msra.mxu0 0.0
        %2306 = vmatprep.subr.mxu0 0.0
        %2307 = vmatpush1.msra.mxu0 0.0
        %2308 = vmatprep.subr.mxu0 0.0
        %2309 = vmatpush1.msra.mxu0 0.0
        %2310 = vmatprep.subr.mxu0 0.0
        %2311 = vmatpush1.msra.mxu0 0.0
        %2312 = vmatprep.subr.mxu0 0.0
        %2313 = vmatpush1.msra.mxu0 0.0
        %2314 = vmatprep.subr.mxu0 0.0
        %2315 = vmatpush1.msra.mxu0 %v1338
        %2316 = vmatprep.subr.mxu0 0.0
        %2317 = vmatpush1.msra.mxu0 %v1337
        %2318 = vmatprep.subr.mxu0 0.0
        %2319 = vmatpush1.msra.mxu0 %v1336
        %2320 = vmatprep.subr.mxu0 0.0
        %2321 = vmatpush1.msra.mxu0 %v1335
        %2322 = vmatprep.subr.mxu0 0.0
        %2323 = vmatpush1.msra.mxu0 %v1334
        %2324 = vmatprep.subr.mxu0 0.0
        %2325 = vmatpush1.msra.mxu0 %v1333
        %2326 = vmatprep.subr.mxu0 0.0
        %2327 = vmatpush1.msra.mxu0 %v1332
        %2328 = vmatprep.subr.mxu0 0.0
        %2329 = vmatpush1.msra.mxu0 %v1331
        %2330 = vmatprep.subr.mxu0 0.0
        %2331 = vmatpush2.msra.mxu0 0.0
        %2332 = vmatprep.subr.mxu0 0.0
        %2333 = vmatpush2.msra.mxu0 0.0
        %2334 = vmatprep.subr.mxu0 0.0
        %2335 = vmatpush2.msra.mxu0 0.0
        %2336 = vmatprep.subr.mxu0 0.0
        %2337 = vmatpush2.msra.mxu0 0.0
        %2338 = vmatprep.subr.mxu0 0.0
        %2339 = vmatpush2.msra.mxu0 0.0
        %2340 = vmatprep.subr.mxu0 0.0
        %2341 = vmatpush2.msra.mxu0 0.0
        %2342 = vmatprep.subr.mxu0 0.0
        %2343 = vmatpush2.msra.mxu0 0.0
        %2344 = vmatprep.subr.mxu0 0.0
        %2345 = vmatpush2.msra.mxu0 0.0
        %2346 = vmatprep.subr.mxu0 0.0
        %2347 = vmatpush2.msra.mxu0 0.0
        %2348 = vmatprep.subr.mxu0 0.0
        %2349 = vmatpush2.msra.mxu0 0.0
        %2350 = vmatprep.subr.mxu0 0.0
        %2351 = vmatpush2.msra.mxu0 0.0
        %2352 = vmatprep.subr.mxu0 0.0
        %2353 = vmatpush2.msra.mxu0 0.0
        %2354 = vmatprep.subr.mxu0 0.0
        %2355 = vmatpush2.msra.mxu0 0.0
        %2356 = vmatprep.subr.mxu0 0.0
        %2357 = vmatpush2.msra.mxu0 0.0
        %2358 = vmatprep.subr.mxu0 0.0
        %2359 = vmatpush2.msra.mxu0 0.0
        %2360 = vmatprep.subr.mxu0 0.0
        %2361 = vmatpush2.msra.mxu0 0.0
        %2362 = vmatprep.mubr.f32.mxu0 0.0
        %2363 = vmatmul.mubr.f32.gmra.mxu0 %v2296
        %v2364 = vpop.f32.mrf.mxu0
        %v2365 = vadd.f32 %v2294, %v2364
        %v2366 = vpop.f32.mrf.mxu0
        %2367 = vdwg.mxu0
        %v2368 = vadd.f32 %v2365, %v2208
        %v2369 = vsel %vm208, %v2368, 0.0
        %2370 = vadd.xlane.f32.xlu0 %v2369
        %v2371 = vpop.xlane.xlu0 %2370
        %v2372 = vmul.f32 %v2371, %v212
        %v2373 = vsub.f32 %v2368, %v2372
        %v2374 = vmul.f32 %v2373, %v2373
        %v2375 = vsel %vm208, %v2374, 0.0
        %2376 = vadd.xlane.f32.xlu0 %v2375
        %v2377 = vpop.xlane.xlu0 %2376
        %v2378 = vmul.f32 %v2377, %v212
        %v2379 = vadd.f32 %v2378, 1e-12
        %v2380 = vrsqrt.pop %v2379
        %v2381 = vmul.f32 %v2373, %v2380
        %v2382 = vlaneseq
        %v2383 = vshrl.u32 %v2382, 7
        %v2384 = vsub.s32 6, %v2383
        %v2385 = vrot.slane %v1339, %v2384
        %v2386 = vmul.f32 %v2381, %v2385
        %v2387 = vlaneseq
        %v2388 = vshrl.u32 %v2387, 7
        %v2389 = vsub.s32 7, %v2388
        %v2390 = vrot.slane %v1339, %v2389
        %v2391 = vadd.f32 %v2386, %v2390
        %v2392 = vsel %vm208, %v2391, 0.0
        %s2393 = scalar_lea.vmem %s191, 8 [#allocation2]
        %2394 = vst [vmem:[%s2393] sm:$0xff] %v2392
        %v2395 = vld [vmem:[%s1 + $0x150] sm:$0xff]
        %v2396 = vld [vmem:[%s1 + $0x158] sm:$0xff]
        %v2397 = vld [vmem:[%s1 + $0x160] sm:$0xff]
        %v2398 = vld [vmem:[%s1 + $0x168] sm:$0xff]
        %v2400 = vrot.slane %v207, 2
        %v2403 = vsel %vm208, %v2391, 0
        %2405 = vmatprep.subr.mxu0 0.0
        %2406 = vmatpush1.msra.mxu0 0.0
        %2407 = vmatprep.subr.mxu0 0.0
        %2408 = vmatpush1.msra.mxu0 0.0
        %2409 = vmatprep.subr.mxu0 0.0
        %2410 = vmatpush1.msra.mxu0 0.0
        %2411 = vmatprep.subr.mxu0 0.0
        %2412 = vmatpush1.msra.mxu0 0.0
        %2413 = vmatprep.subr.mxu0 0.0
        %2414 = vmatpush1.msra.mxu0 0.0
        %2415 = vmatprep.subr.mxu0 0.0
        %2416 = vmatpush1.msra.mxu0 0.0
        %2417 = vmatprep.subr.mxu0 0.0
        %2418 = vmatpush1.msra.mxu0 0.0
        %2419 = vmatprep.subr.mxu0 0.0
        %2420 = vmatpush1.msra.mxu0 0.0
        %2421 = vmatprep.subr.mxu0 0.0
        %2422 = vmatpush1.msra.mxu0 0.0
        %2423 = vmatprep.subr.mxu0 0.0
        %2424 = vmatpush1.msra.mxu0 0.0
        %2425 = vmatprep.subr.mxu0 0.0
        %2426 = vmatpush1.msra.mxu0 0.0
        %2427 = vmatprep.subr.mxu0 0.0
        %2428 = vmatpush1.msra.mxu0 0.0
        %2429 = vmatprep.subr.mxu0 0.0
        %2430 = vmatpush1.msra.mxu0 %v2398
        %2431 = vmatprep.subr.mxu0 0.0
        %2432 = vmatpush1.msra.mxu0 %v2397
        %2433 = vmatprep.subr.mxu0 0.0
        %2434 = vmatpush1.msra.mxu0 %v2396
        %2435 = vmatprep.subr.mxu0 0.0
        %2436 = vmatpush1.msra.mxu0 %v2395
        %2437 = vmatprep.subr.mxu0 0.0
        %2438 = vmatpush2.msra.mxu0 0.0
        %2439 = vmatprep.subr.mxu0 0.0
        %2440 = vmatpush2.msra.mxu0 0.0
        %2441 = vmatprep.subr.mxu0 0.0
        %2442 = vmatpush2.msra.mxu0 0.0
        %2443 = vmatprep.subr.mxu0 0.0
        %2444 = vmatpush2.msra.mxu0 0.0
        %2445 = vmatprep.subr.mxu0 0.0
        %2446 = vmatpush2.msra.mxu0 0.0
        %2447 = vmatprep.subr.mxu0 0.0
        %2448 = vmatpush2.msra.mxu0 0.0
        %2449 = vmatprep.subr.mxu0 0.0
        %2450 = vmatpush2.msra.mxu0 0.0
        %2451 = vmatprep.subr.mxu0 0.0
        %2452 = vmatpush2.msra.mxu0 0.0
        %2453 = vmatprep.subr.mxu0 0.0
        %2454 = vmatpush2.msra.mxu0 0.0
        %2455 = vmatprep.subr.mxu0 0.0
        %2456 = vmatpush2.msra.mxu0 0.0
        %2457 = vmatprep.subr.mxu0 0.0
        %2458 = vmatpush2.msra.mxu0 0.0
        %2459 = vmatprep.subr.mxu0 0.0
        %2460 = vmatpush2.msra.mxu0 0.0
        %2461 = vmatprep.subr.mxu0 0.0
        %2462 = vmatpush2.msra.mxu0 0.0
        %2463 = vmatprep.subr.mxu0 0.0
        %2464 = vmatpush2.msra.mxu0 0.0
        %2465 = vmatprep.subr.mxu0 0.0
        %2466 = vmatpush2.msra.mxu0 0.0
        %2467 = vmatprep.subr.mxu0 0.0
        %2468 = vmatpush2.msra.mxu0 0.0
        %2469 = vmatprep.mubr.f32.mxu0 0.0
        %2470 = vmatmul.mubr.f32.gmra.mxu0 %v2403
        %v2471 = vpop.f32.mrf.mxu0
        %v2472 = vadd.f32 %v2400, %v2471
        %v2473 = vpop.f32.mrf.mxu0
        %2474 = vdwg.mxu0
        %v2475 = vtanh.pop %v2472
        %vm2476 = vcmask 1040384
        %v2477 = vsel %vm2476, %v2475, 0.0
        %v2478 = vsel %vm208, %v2477, 0.0
        %2479 = vst [vmem:[%s205] sm:$0xff] %v2478
        %p2480 = scmp.lt.s32.totalorder %s16, 1
        %s2481 = scalar_select %p2480, %s16, 1
        %s2482 = smul.addr %s2481, 8
        %s2483 = scalar_lea.vmem %s2, %s2482
        %s2484 = sand.u32 %s97, 1
        %s2485 = sand.u32 %s97, 1
        %s2486 = smul.addr %s2485, 16
        %s2487 = scalar_lea.vmem [#allocation2], %s2486
        %s2488 = sand.u32 %s123, 1
        %s2489 = sand.u32 %s123, 1
        %s2490 = smul.addr %s2489, 64
        %s2491 = scalar_lea.vmem [#allocation3], %s2490
        // Predicated region
        $region29: #{bert_forward.1} parent=27 // pred_check
          %p2492 = pneg %p81
        $region30: #{bert_forward.1} parent=27 // pred_check_branch
          %2494 = sbr.rel (%p2492) target = $region32
        $region31: #{bert_forward.1} parent=27 // pred_region
          _
        $region32: #{bert_forward.1} parent=27 // pred_fallthru
          _
        // Predicated region
        $region33: #{bert_forward.1} parent=27 // pred_check
          %p2495 = pneg %p107
        $region34: #{bert_forward.1} parent=27 // pred_check_branch
          %2497 = sbr.rel (%p2495) target = $region36
        $region35: #{bert_forward.1} parent=27 // pred_region
          %s2498 = smul.addr %s16, 8
          %s2499 = scalar_lea.vmem %s3, %s2498
          // Predicated region
          $region37: #{bert_forward.1} parent=35 // pred_check
            _
          $region38: #{bert_forward.1} parent=35 // pred_check_branch
            %2501 = sbr.rel (0) target = $region40
          $region39: #{bert_forward.1} parent=35 // pred_region
            // Predicated region
            $region41: #{bert_forward.1} parent=39 // pred_check
              _
            $region42: #{bert_forward.1} parent=39 // pred_check_branch
              %2503 = sbr.rel (0) target = $region44
            $region43: #{bert_forward.1} parent=39 // pred_region
              // Predicated region
              $region56: #{bert_forward.1} parent=43 // pred_check
                _
              $region57: #{bert_forward.1} parent=43 // pred_check_branch
                %2521 = sbr.rel (0) target = $region59
              $region58: #{bert_forward.1} parent=43 // pred_region
                loop: start=0, step=1, limit=1
                $region60: #{bert_forward.1} parent=58 // loop_pre_header
                  _
                $region61: #{bert_forward.1} parent=58 // loop_header
                  %s2523 = sphi 0, %s2527
                  %p2524 = scmp.ge.s32.totalorder %s2523, 1
                  %s2528 = sphi %s2487, %s2487
                  %s2529 = sphi %s2499, %s2499
                $region62: #{bert_forward.1} parent=58 // loop_header_branch
                  %2526 = sbr.rel (%p2524) target = $region66
                $region63: #{bert_forward.1} parent=58 // loop_body
                  %v2530 = vld [vmem:[%s2528] sm:$0xff]
                  %2531 = vst [vmem:[%s2529] sm:$0xff] %v2530
                  %v2532 = vld [vmem:[%s2528 + $0x8] sm:$0xff]
                  %2533 = vst [vmem:[%s2529 + $0x10] sm:$0xff] %v2532
                $region64: #{bert_forward.1} parent=58 // loop_footer
                  %s2527 = sadd.s32 1, %s2523
                $region65: #{bert_forward.1} parent=58 // loop_footer_branch
                  %2522 = sbr.rel target = $region61
                $region66: #{bert_forward.1} parent=58 // loop_exit
                  _
              $region59: #{bert_forward.1} parent=43 // pred_fallthru
                _
              // Predicated region
              $region67: #{bert_forward.1} parent=43 // pred_check
                _
              $region68: #{bert_forward.1} parent=43 // pred_check_branch
                %2535 = sbr.rel target = $region70
              $region69: #{bert_forward.1} parent=43 // pred_region
                _
              $region70: #{bert_forward.1} parent=43 // pred_fallthru
                _
            $region44: #{bert_forward.1} parent=39 // pred_fallthru
              _
            // Predicated region
            $region45: #{bert_forward.1} parent=39 // pred_check
              _
            $region46: #{bert_forward.1} parent=39 // pred_check_branch
              %2505 = sbr.rel target = $region48
            $region47: #{bert_forward.1} parent=39 // pred_region
              %s2507 = ssub.s32 256, 1
              loop: start=0, step=1, limit=1
              $region49: #{bert_forward.1} parent=47 // loop_pre_header
                _
              $region50: #{bert_forward.1} parent=47 // loop_header
                %s2509 = sphi 0, %s2513
                %p2510 = scmp.ge.s32.totalorder %s2509, 1
                %s2514 = sphi %s2487, %s2487
                %s2515 = sphi %s2499, %s2499
              $region51: #{bert_forward.1} parent=47 // loop_header_branch
                %2512 = sbr.rel (%p2510) target = $region55
              $region52: #{bert_forward.1} parent=47 // loop_body
                %v2516 = vld [vmem:[%s2514] sm:%s2507]
                %2517 = vst [vmem:[%s2515] sm:%s2507] %v2516
                %v2518 = vld [vmem:[%s2514 + $0x8] sm:%s2507]
                %2519 = vst [vmem:[%s2515 + $0x10] sm:%s2507] %v2518
              $region53: #{bert_forward.1} parent=47 // loop_footer
                %s2513 = sadd.s32 1, %s2509
              $region54: #{bert_forward.1} parent=47 // loop_footer_branch
                %2508 = sbr.rel target = $region50
              $region55: #{bert_forward.1} parent=47 // loop_exit
                _
            $region48: #{bert_forward.1} parent=39 // pred_fallthru
              _
          $region40: #{bert_forward.1} parent=35 // pred_fallthru
            _
          %2536 = vnop
        $region36: #{bert_forward.1} parent=27 // pred_fallthru
          _
        // Predicated region
        $region71: #{bert_forward.1} parent=27 // pred_check
          %p2537 = pneg %p133
        $region72: #{bert_forward.1} parent=27 // pred_check_branch
          %2539 = sbr.rel (%p2537) target = $region74
        $region73: #{bert_forward.1} parent=27 // pred_region
          %s2540 = smul.addr %s16, 4
          %s2541 = smul.addr %s2540, 8
          %s2542 = scalar_lea.vmem %s4, %s2541
          // Predicated region
          $region75: #{bert_forward.1} parent=73 // pred_check
            _
          $region76: #{bert_forward.1} parent=73 // pred_check_branch
            %2544 = sbr.rel (0) target = $region78
          $region77: #{bert_forward.1} parent=73 // pred_region
            // Predicated region
            $region79: #{bert_forward.1} parent=77 // pred_check
              _
            $region80: #{bert_forward.1} parent=77 // pred_check_branch
              %2546 = sbr.rel (0) target = $region82
            $region81: #{bert_forward.1} parent=77 // pred_region
              // Predicated region
              $region94: #{bert_forward.1} parent=81 // pred_check
                _
              $region95: #{bert_forward.1} parent=81 // pred_check_branch
                %2576 = sbr.rel (0) target = $region97
              $region96: #{bert_forward.1} parent=81 // pred_region
                loop: start=0, step=1, limit=1
                $region98: #{bert_forward.1} parent=96 // loop_pre_header
                  _
                $region99: #{bert_forward.1} parent=96 // loop_header
                  %s2578 = sphi 0, %s2582
                  %p2579 = scmp.ge.s32.totalorder %s2578, 1
                  %s2583 = sphi %s2491, %s2491
                  %s2584 = sphi %s2542, %s2542
                $region100: #{bert_forward.1} parent=96 // loop_header_branch
                  %2581 = sbr.rel (%p2579) target = $region104
                $region101: #{bert_forward.1} parent=96 // loop_body
                  %v2585 = vld [vmem:[%s2583] sm:$0xff]
                  %2586 = vst [vmem:[%s2584] sm:$0xff] %v2585
                  %v2587 = vld [vmem:[%s2583 + $0x8] sm:$0xff]
                  %2588 = vst [vmem:[%s2584 + $0x8] sm:$0xff] %v2587
                  %v2589 = vld [vmem:[%s2583 + $0x10] sm:$0xff]
                  %2590 = vst [vmem:[%s2584 + $0x10] sm:$0xff] %v2589
                  %v2591 = vld [vmem:[%s2583 + $0x18] sm:$0xff]
                  %2592 = vst [vmem:[%s2584 + $0x18] sm:$0xff] %v2591
                  %v2593 = vld [vmem:[%s2583 + $0x20] sm:$0xff]
                  %2594 = vst [vmem:[%s2584 + $0x40] sm:$0xff] %v2593
                  %v2595 = vld [vmem:[%s2583 + $0x28] sm:$0xff]
                  %2596 = vst [vmem:[%s2584 + $0x48] sm:$0xff] %v2595
                  %v2597 = vld [vmem:[%s2583 + $0x30] sm:$0xff]
                  %2598 = vst [vmem:[%s2584 + $0x50] sm:$0xff] %v2597
                  %v2599 = vld [vmem:[%s2583 + $0x38] sm:$0xff]
                  %2600 = vst [vmem:[%s2584 + $0x58] sm:$0xff] %v2599
                $region102: #{bert_forward.1} parent=96 // loop_footer
                  %s2582 = sadd.s32 1, %s2578
                $region103: #{bert_forward.1} parent=96 // loop_footer_branch
                  %2577 = sbr.rel target = $region99
                $region104: #{bert_forward.1} parent=96 // loop_exit
                  _
              $region97: #{bert_forward.1} parent=81 // pred_fallthru
                _
              // Predicated region
              $region105: #{bert_forward.1} parent=81 // pred_check
                _
              $region106: #{bert_forward.1} parent=81 // pred_check_branch
                %2602 = sbr.rel target = $region108
              $region107: #{bert_forward.1} parent=81 // pred_region
                _
              $region108: #{bert_forward.1} parent=81 // pred_fallthru
                _
            $region82: #{bert_forward.1} parent=77 // pred_fallthru
              _
            // Predicated region
            $region83: #{bert_forward.1} parent=77 // pred_check
              _
            $region84: #{bert_forward.1} parent=77 // pred_check_branch
              %2548 = sbr.rel target = $region86
            $region85: #{bert_forward.1} parent=77 // pred_region
              %s2550 = ssub.s32 256, 1
              loop: start=0, step=1, limit=1
              $region87: #{bert_forward.1} parent=85 // loop_pre_header
                _
              $region88: #{bert_forward.1} parent=85 // loop_header
                %s2552 = sphi 0, %s2556
                %p2553 = scmp.ge.s32.totalorder %s2552, 1
                %s2557 = sphi %s2491, %s2491
                %s2558 = sphi %s2542, %s2542
              $region89: #{bert_forward.1} parent=85 // loop_header_branch
                %2555 = sbr.rel (%p2553) target = $region93
              $region90: #{bert_forward.1} parent=85 // loop_body
                %v2559 = vld [vmem:[%s2557] sm:%s2550]
                %2560 = vst [vmem:[%s2558] sm:%s2550] %v2559
                %v2561 = vld [vmem:[%s2557 + $0x8] sm:%s2550]
                %2562 = vst [vmem:[%s2558 + $0x8] sm:%s2550] %v2561
                %v2563 = vld [vmem:[%s2557 + $0x10] sm:%s2550]
                %2564 = vst [vmem:[%s2558 + $0x10] sm:%s2550] %v2563
                %v2565 = vld [vmem:[%s2557 + $0x18] sm:%s2550]
                %2566 = vst [vmem:[%s2558 + $0x18] sm:%s2550] %v2565
                %v2567 = vld [vmem:[%s2557 + $0x20] sm:%s2550]
                %2568 = vst [vmem:[%s2558 + $0x40] sm:%s2550] %v2567
                %v2569 = vld [vmem:[%s2557 + $0x28] sm:%s2550]
                %2570 = vst [vmem:[%s2558 + $0x48] sm:%s2550] %v2569
                %v2571 = vld [vmem:[%s2557 + $0x30] sm:%s2550]
                %2572 = vst [vmem:[%s2558 + $0x50] sm:%s2550] %v2571
                %v2573 = vld [vmem:[%s2557 + $0x38] sm:%s2550]
                %2574 = vst [vmem:[%s2558 + $0x58] sm:%s2550] %v2573
              $region91: #{bert_forward.1} parent=85 // loop_footer
                %s2556 = sadd.s32 1, %s2552
              $region92: #{bert_forward.1} parent=85 // loop_footer_branch
                %2551 = sbr.rel target = $region88
              $region93: #{bert_forward.1} parent=85 // loop_exit
                _
            $region86: #{bert_forward.1} parent=77 // pred_fallthru
              _
          $region78: #{bert_forward.1} parent=73 // pred_fallthru
            _
          %2603 = vnop
        $region74: #{bert_forward.1} parent=27 // pred_fallthru
          _
      $region28: #{bert_forward.1} parent=5 // pred_fallthru
        _
      %p2604 = scmp.le.s32.totalorder 2, %s11
      // Predicated region
      $region109: #{bert_forward.1} parent=5 // pred_check
        %p2605 = pneg %p2604
      $region110: #{bert_forward.1} parent=5 // pred_check_branch
        %2607 = sbr.rel (%p2605) target = $region112
      $region111: #{bert_forward.1} parent=5 // pred_region
        %s2608 = ssub.s32 %s11, 2
        // Predicated region
        $region113: #{bert_forward.1} parent=111 // pred_check
          %p2609 = pneg %p87
        $region114: #{bert_forward.1} parent=111 // pred_check_branch
          %2611 = sbr.rel (%p2609) target = $region116
        $region115: #{bert_forward.1} parent=111 // pred_region
          %p2612 = scmp.lt.s32.totalorder %s17, 1
          %s2613 = scalar_select %p2612, %s17, 1
          %s2614 = smul.addr %s2613, 8
          %s2615 = scalar_lea.vmem %s2, %s2614
        $region116: #{bert_forward.1} parent=111 // pred_fallthru
          _
        // Predicated region
        $region117: #{bert_forward.1} parent=111 // pred_check
          %p2616 = pneg %p113
        $region118: #{bert_forward.1} parent=111 // pred_check_branch
          %2618 = sbr.rel (%p2616) target = $region120
        $region119: #{bert_forward.1} parent=111 // pred_region
          %s2619 = sand.u32 %s98, 1
          %s2620 = sand.u32 %s98, 1
          %s2621 = smul.addr %s2620, 16
          %s2622 = scalar_lea.vmem [#allocation2], %s2621
        $region120: #{bert_forward.1} parent=111 // pred_fallthru
          _
        // Predicated region
        $region121: #{bert_forward.1} parent=111 // pred_check
          %p2623 = pneg %p139
        $region122: #{bert_forward.1} parent=111 // pred_check_branch
          %2625 = sbr.rel (%p2623) target = $region124
        $region123: #{bert_forward.1} parent=111 // pred_region
          %s2626 = sand.u32 %s124, 1
          %s2627 = sand.u32 %s124, 1
          %s2628 = smul.addr %s2627, 64
          %s2629 = scalar_lea.vmem [#allocation3], %s2628
        $region124: #{bert_forward.1} parent=111 // pred_fallthru
          _
      $region112: #{bert_forward.1} parent=5 // pred_fallthru
        _
    $region6: #{bert_forward.1} parent=1 // loop_footer
      %s15 = sadd.s32 1, %s11
    $region7: #{bert_forward.1} parent=1 // loop_footer_branch
      %10 = sbr.rel target = $region3
    $region8: #{bert_forward.1} parent=1 // loop_exit
      _

</llo_original>
